<compile_context>
chip_gen: v7x
topology: tpu7x:2x2x1
jax: 0.10.0
libtpu: 0.0.40
codegen_flags: <defaults>
</compile_context>

<pallas_src>
import jax
import jax.numpy as jnp
from jax.experimental import pallas as pl
from jax.experimental.pallas import tpu as pltpu


# -----------------------------------------------------------------------------
# Pallas kernel: attention pooling (online softmax over seq chunks) + fused,
# lane-dense 6-way classification heads.
# -----------------------------------------------------------------------------
def _iqiy_head_kernel(hs_ref,      # (TB, TS, D)  bf16 hidden-state chunk
                      w1_ref,      # (D, 512)     bf16 attention Linear #1 weight
                      b1_ref,      # (1, 512)     f32  attention Linear #1 bias
                      w2_ref,      # (1, 512)     f32  attention Linear #2 weight (row)
                      b2_ref,      # (1,)         f32  attention Linear #2 bias (SMEM)
                      wh_ref,      # (D, P)       bf16 fused 6 heads, zero-padded
                      bh_ref,      # (1, P)       f32  fused head biases, zero-padded
                      out_ref,     # (TB, P)      f32  lane-dense output slab
                      m_sc,        # (TB, 1)      f32  running max
                      l_sc,        # (TB, 1)      f32  running softmax denom
                      acc_sc):     # (TB, D)      f32  running weighted sum of h
    TB, TS, D = hs_ref.shape
    s = pl.program_id(1)
    ns = pl.num_programs(1)

    @pl.when(s == 0)
    def _():
        m_sc[...] = jnp.full_like(m_sc[...], -jnp.inf)
        l_sc[...] = jnp.zeros_like(l_sc[...])
        acc_sc[...] = jnp.zeros_like(acc_sc[...])

    # ---- attention MLP on this chunk: bf16 operands on the MXU, f32 accum ----
    h = hs_ref[...]                                            # (TB, TS, D) bf16
    a1 = jnp.tanh(
        jnp.dot(h.reshape(TB * TS, D), w1_ref[...],
                preferred_element_type=jnp.float32)
        + b1_ref[...]
    )                                                          # (TB*TS, 512) f32

    # Score: VPU multiply + lane reduction (no N=1 MXU pass); keep it
    # (TB, TS, 1) sublane-major so the seq reduce is a sublane reduce and the
    # broadcast against (TB, TS, D) hidden states is a free lane broadcast.
    score = jnp.sum(a1 * w2_ref[...], axis=-1, keepdims=True) + b2_ref[0]
    score = score.reshape(TB, TS, 1)

    # ---- online softmax update (flash-style) ---------------------------------
    m_prev = m_sc[...].reshape(TB, 1, 1)
    l_prev = l_sc[...].reshape(TB, 1, 1)
    m_new = jnp.maximum(m_prev, jnp.max(score, axis=1, keepdims=True))
    alpha = jnp.exp(m_prev - m_new)                            # (TB, 1, 1)
    p = jnp.exp(score - m_new)                                 # (TB, TS, 1)
    l_new = alpha * l_prev + jnp.sum(p, axis=1, keepdims=True)

    # Weighted context accumulation: bf16 h promotes to f32 in the multiply.
    ctx_chunk = jnp.sum(p * h, axis=1)                         # (TB, D) f32
    acc_sc[...] = alpha.reshape(TB, 1) * acc_sc[...] + ctx_chunk
    m_sc[...] = m_new.reshape(TB, 1)
    l_sc[...] = l_new.reshape(TB, 1)

    # ---- finalize: normalize, run 6 fused heads (bf16 operands), store ------
    @pl.when(s == ns - 1)
    def _():
        ctx = acc_sc[...] / l_sc[...]                          # (TB, D) f32
        out = (
            jnp.dot(ctx.astype(jnp.bfloat16), wh_ref[...],
                    preferred_element_type=jnp.float32)
            + bh_ref[...]
        )                                                      # (TB, P) f32
        out_ref[...] = out.astype(out_ref.dtype)


def _pick_seq_tile(S):
    """Largest seq chunk <=256 that divides S (keeps VMEM bounded at prod S);
    falls back to the full sequence (no chunking) for odd small S."""
    for ts in (256, 128, 64, 32, 16):
        if S % ts == 0:
            return ts
    return S


def iqiy_head_forward(hidden_states, params, n_classes):
    """Runs the Pallas head kernel and splits the fused output into the
    per-emotion dict exactly like the PyTorch forward."""
    B, S, D = hidden_states.shape
    n_out = 6 * n_classes
    n_out_pad = params["heads_w"].shape[1]

    # Halve the dominant HBM stream: hand the kernel bf16 hidden states.
    hs = hidden_states.astype(jnp.bfloat16)

    # Batch tiling: 8 sublane-aligned rows per step; guarantee >= 2 batch grid
    # steps (when B >= 2) so the "parallel" axis can split across v7x's 2 TCs.
    if B == 1:
        TB, B_pad = 1, 1
    else:
        TB = 8
        B_pad = max(2 * TB, ((B + TB - 1) // TB) * TB)
    if B_pad != B:
        hs = jnp.pad(hs, ((0, B_pad - B), (0, 0), (0, 0)))   # zero rows: finite softmax

    TS = _pick_seq_tile(S)
    grid = (B_pad // TB, S // TS)

    out = pl.pallas_call(
        _iqiy_head_kernel,
        out_shape=jax.ShapeDtypeStruct((B_pad, n_out_pad), jnp.float32),
        grid=grid,
        in_specs=[
            pl.BlockSpec((TB, TS, D), lambda b, s: (b, s, 0)),        # hs chunk (bf16)
            pl.BlockSpec((D, 512), lambda b, s: (0, 0)),              # W1 (bf16, resident)
            pl.BlockSpec((1, 512), lambda b, s: (0, 0)),              # b1
            pl.BlockSpec((1, 512), lambda b, s: (0, 0)),              # W2 row
            pl.BlockSpec(memory_space=pltpu.MemorySpace.SMEM),        # b2 scalar
            pl.BlockSpec((D, n_out_pad), lambda b, s: (0, 0)),        # fused heads W (bf16)
            pl.BlockSpec((1, n_out_pad), lambda b, s: (0, 0)),        # fused heads b
        ],
        out_specs=pl.BlockSpec((TB, n_out_pad), lambda b, s: (b, 0)),
        scratch_shapes=[
            pltpu.VMEM((TB, 1), jnp.float32),     # running max  m
            pltpu.VMEM((TB, 1), jnp.float32),     # running denom l
            pltpu.VMEM((TB, D), jnp.float32),     # running weighted sum of h
        ],
        compiler_params=pltpu.CompilerParams(
            dimension_semantics=("parallel", "arbitrary"),
            vmem_limit_bytes=32 * 1024 * 1024),
    )(
        hs,
        params["attn_w1"], params["attn_b1"],
        params["attn_w2"], params["attn_b2"],
        params["heads_w"], params["heads_b"],
    )

    out = out[:B, :n_out]
    names = ["love", "joy", "fright", "anger", "fear", "sorrow"]
    return {
        name: out[:, i * n_classes:(i + 1) * n_classes]
        for i, name in enumerate(names)
    }


# -----------------------------------------------------------------------------
# Deterministic parameter init (mirrors init_params: xavier_uniform on weight
# matrices, PyTorch-Linear uniform init on biases with the correct fan_in).
# -----------------------------------------------------------------------------
def _xavier_uniform(key, fan_in, fan_out, shape):
    a = (6.0 / (fan_in + fan_out)) ** 0.5
    return jax.random.uniform(key, shape, jnp.float32, -a, a)


def _bias_init(key, fan_in, shape):
    bound = 1.0 / (fan_in ** 0.5)
    return jax.random.uniform(key, shape, jnp.float32, -bound, bound)


def make_params(key, dim, n_classes):
    n_out = 6 * n_classes
    n_out_pad = max(128, ((n_out + 127) // 128) * 128)   # lane-dense output width
    ks = jax.random.split(key, 4 + 2 * 6)

    attn_w1 = _xavier_uniform(ks[0], dim, 512, (dim, 512)).astype(jnp.bfloat16)
    attn_b1 = _bias_init(ks[1], dim, (1, 512))
    attn_w2 = _xavier_uniform(ks[2], 512, 1, (1, 512))   # stored as a row (f32)
    attn_b2 = _bias_init(ks[3], 512, (1,))               # fan_in = 512 (Linear(512,1))

    # 6 emotion heads Linear(dim, n_classes), xavier per-head, fused + padded.
    head_ws, head_bs = [], []
    for i in range(6):
        head_ws.append(_xavier_uniform(ks[4 + i], dim, n_classes, (dim, n_classes)))
        head_bs.append(_bias_init(ks[10 + i], dim, (1, n_classes)))
    heads_w = jnp.concatenate(head_ws, axis=1)           # (dim, 6*C)
    heads_b = jnp.concatenate(head_bs, axis=1)           # (1, 6*C)
    heads_w = jnp.pad(heads_w, ((0, 0), (0, n_out_pad - n_out)))
    heads_b = jnp.pad(heads_b, ((0, 0), (0, n_out_pad - n_out)))

    return {
        "attn_w1": attn_w1, "attn_b1": attn_b1,
        "attn_w2": attn_w2, "attn_b2": attn_b2,
        "heads_w": heads_w.astype(jnp.bfloat16),   # bf16 heads (f32 MXU accum)
        "heads_b": heads_b,
    }


# -----------------------------------------------------------------------------
# Pure-JAX reference mirroring the kernel's precision choices (bf16 hidden
# states / bf16 matmul operands, f32 accumulation and elementwise math).
# -----------------------------------------------------------------------------
def reference_forward(hidden_states, params, n_classes):
    h_bf = hidden_states.astype(jnp.bfloat16)            # (B, S, D)
    a1 = jnp.tanh(
        jnp.einsum("bsd,df->bsf", h_bf, params["attn_w1"],
                   preferred_element_type=jnp.float32)
        + params["attn_b1"]
    )                                                    # (B, S, 512) f32
    score = jnp.sum(a1 * params["attn_w2"], axis=-1, keepdims=True) \
        + params["attn_b2"][0]                           # (B, S, 1)
    w = jax.nn.softmax(score, axis=1)
    ctx = jnp.sum(w * h_bf.astype(jnp.float32), axis=1)  # (B, D) f32
    n_out = 6 * n_classes
    out = jnp.dot(ctx.astype(jnp.bfloat16), params["heads_w"][:, :n_out],
                  preferred_element_type=jnp.float32) + params["heads_b"][:, :n_out]
    names = ["love", "joy", "fright", "anger", "fear", "sorrow"]
    return {
        name: out[:, i * n_classes:(i + 1) * n_classes]
        for i, name in enumerate(names)
    }


if __name__ == "__main__":
    B, S, DIM, N_CLASSES = 2, 8, 768, 4   # 'base' model -> dim = 768

    key = jax.random.PRNGKey(0)
    k_params, k_hidden = jax.random.split(key)

    params = make_params(k_params, DIM, N_CLASSES)

    # Synthetic last-layer hidden states (stand-in for BertModel output).
    hidden_states = jax.random.normal(k_hidden, (B, S, DIM), jnp.float32)

    out = iqiy_head_forward(hidden_states, params, N_CLASSES)
    out = jax.tree_util.tree_map(jax.block_until_ready, out)

    ref = reference_forward(hidden_states, params, N_CLASSES)
    for name in out:
        assert out[name].shape == (B, N_CLASSES), (name, out[name].shape)
        err = float(jnp.max(jnp.abs(out[name] - ref[name])))
        # Remaining differences are only accumulation order (chunked online
        # softmax / MXU tiles) and one bf16 rounding of ctx; well under 1e-2.
        assert err < 1e-2, (name, err)

    print("KERNEL_OK")
</pallas_src>

<mosaic_0001>
module attributes {stable_mosaic.version = 11 : i64} {
  func.func @_iqiy_head_kernel(%arg0: i32, %arg1: i32, %arg2: memref<8x8x768xbf16, #tpu.memory_space<vmem>>, %arg3: memref<768x512xbf16, #tpu.memory_space<vmem>>, %arg4: memref<1x512xf32, #tpu.memory_space<vmem>>, %arg5: memref<1x512xf32, #tpu.memory_space<vmem>>, %arg6: memref<1xf32, #tpu.memory_space<smem>>, %arg7: memref<768x128xbf16, #tpu.memory_space<vmem>>, %arg8: memref<1x128xf32, #tpu.memory_space<vmem>>, %arg9: memref<8x128xf32, #tpu.memory_space<vmem>>, %arg10: memref<8x1xf32, #tpu.memory_space<vmem>>, %arg11: memref<8x1xf32, #tpu.memory_space<vmem>>, %arg12: memref<8x768xf32, #tpu.memory_space<vmem>>) attributes {dimension_semantics = [#tpu.dimension_semantics<parallel>, #tpu.dimension_semantics<arbitrary>], iteration_bounds = array<i64: 2, 1>, scalar_prefetch = 0 : i64, scratch_operands = 3 : i64, tpu.core_type = #tpu.core_type<tc>, window_params = [{transform_indices = @transform_0, window_bounds = array<i64: 8, 8, 768>}, {pipeline_mode = #tpu.pipeline_mode<synchronous>, transform_indices = @transform_1, window_bounds = array<i64: 768, 512>}, {pipeline_mode = #tpu.pipeline_mode<synchronous>, transform_indices = @transform_2, window_bounds = array<i64: 1, 512>}, {pipeline_mode = #tpu.pipeline_mode<synchronous>, transform_indices = @transform_3, window_bounds = array<i64: 1, 512>}, {transform_indices = @transform_4, window_bounds = array<i64: 1>}, {pipeline_mode = #tpu.pipeline_mode<synchronous>, transform_indices = @transform_5, window_bounds = array<i64: 768, 128>}, {pipeline_mode = #tpu.pipeline_mode<synchronous>, transform_indices = @transform_6, window_bounds = array<i64: 1, 128>}, {transform_indices = @transform_7, window_bounds = array<i64: 8, 128>}]} {
    %c0_i32 = arith.constant 0 : i32
    %0 = arith.cmpi eq, %arg1, %c0_i32 : i32
    %1 = arith.extui %0 : i1 to i32
    %c0_i32_0 = arith.constant 0 : i32
    %2 = arith.cmpi ne, %1, %c0_i32_0 : i32
    scf.if %2 {
      %cst_28 = arith.constant 0xFF800000 : f32
      %53 = vector.broadcast %cst_28 : f32 to vector<8x1xf32>
      %c0_29 = arith.constant 0 : index
      %c0_30 = arith.constant 0 : index
      %54 = vector.load %arg10[%c0_29, %c0_30] : memref<8x1xf32, #tpu.memory_space<vmem>>, vector<8x1xf32>
      tpu.vector_store %arg10[%c0_29, %c0_30], %53 {strides = array<i32>} : memref<8x1xf32, #tpu.memory_space<vmem>>, vector<8x1xf32>,
      %cst_31 = arith.constant 0.000000e+00 : f32
      %55 = vector.broadcast %cst_31 : f32 to vector<8x1xf32>
      %c0_32 = arith.constant 0 : index
      %c0_33 = arith.constant 0 : index
      %56 = vector.load %arg11[%c0_32, %c0_33] : memref<8x1xf32, #tpu.memory_space<vmem>>, vector<8x1xf32>
      tpu.vector_store %arg11[%c0_32, %c0_33], %55 {strides = array<i32>} : memref<8x1xf32, #tpu.memory_space<vmem>>, vector<8x1xf32>,
      %cst_34 = arith.constant 0.000000e+00 : f32
      %57 = vector.broadcast %cst_34 : f32 to vector<8x768xf32>
      %c0_35 = arith.constant 0 : index
      %c0_36 = arith.constant 0 : index
      %58 = vector.load %arg12[%c0_35, %c0_36] : memref<8x768xf32, #tpu.memory_space<vmem>>, vector<8x768xf32>
      tpu.vector_store %arg12[%c0_35, %c0_36], %57 {strides = array<i32>} : memref<8x768xf32, #tpu.memory_space<vmem>>, vector<8x768xf32>,
    } else {
    }
    %c0 = arith.constant 0 : index
    %c0_1 = arith.constant 0 : index
    %c0_2 = arith.constant 0 : index
    %3 = vector.load %arg2[%c0, %c0_1, %c0_2] : memref<8x8x768xbf16, #tpu.memory_space<vmem>>, vector<8x8x768xbf16>
    %4 = vector.shape_cast %3 : vector<8x8x768xbf16> to vector<64x768xbf16>
    %c0_3 = arith.constant 0 : index
    %c0_4 = arith.constant 0 : index
    %5 = vector.load %arg3[%c0_3, %c0_4] : memref<768x512xbf16, #tpu.memory_space<vmem>>, vector<768x512xbf16>
    %cst = arith.constant dense<0.000000e+00> : vector<64x512xf32>
    %6 = tpu.matmul %4, %5, %cst {dimension_numbers = #tpu.dot_dimension_numbers<[1], [0], [0], [1], [0, 0, 1, 1], [], []>} : vector<64x768xbf16>, vector<768x512xbf16>, vector<64x512xf32> -> vector<64x512xf32>
    %c0_5 = arith.constant 0 : index
    %c0_6 = arith.constant 0 : index
    %7 = vector.load %arg4[%c0_5, %c0_6] : memref<1x512xf32, #tpu.memory_space<vmem>>, vector<1x512xf32>
    %8 = vector.broadcast %7 : vector<1x512xf32> to vector<64x512xf32>
    %9 = arith.addf %6, %8 : vector<64x512xf32>
    %10 = math.tanh %9 : vector<64x512xf32>
    %c0_7 = arith.constant 0 : index
    %c0_8 = arith.constant 0 : index
    %11 = vector.load %arg5[%c0_7, %c0_8] : memref<1x512xf32, #tpu.memory_space<vmem>>, vector<1x512xf32>
    %12 = vector.broadcast %11 : vector<1x512xf32> to vector<64x512xf32>
    %13 = arith.mulf %10, %12 : vector<64x512xf32>
    %cst_9 = arith.constant dense<0.000000e+00> : vector<64xf32>
    %14 = vector.multi_reduction <add>, %13, %cst_9 [1] : vector<64x512xf32> to vector<64xf32>
    %15 = vector.shape_cast %14 : vector<64xf32> to vector<64x1xf32>
    %c0_10 = arith.constant 0 : index
    %16 = memref.load %arg6[%c0_10] : memref<1xf32, #tpu.memory_space<smem>>
    %17 = vector.broadcast %16 : f32 to vector<64x1xf32>
    %18 = arith.addf %15, %17 : vector<64x1xf32>
    %19 = vector.shape_cast %18 : vector<64x1xf32> to vector<8x8x1xf32>
    %c0_11 = arith.constant 0 : index
    %c0_12 = arith.constant 0 : index
    %20 = vector.load %arg10[%c0_11, %c0_12] : memref<8x1xf32, #tpu.memory_space<vmem>>, vector<8x1xf32>
    %21 = vector.shape_cast %20 : vector<8x1xf32> to vector<8x1x1xf32>
    %c0_13 = arith.constant 0 : index
    %c0_14 = arith.constant 0 : index
    %22 = vector.load %arg11[%c0_13, %c0_14] : memref<8x1xf32, #tpu.memory_space<vmem>>, vector<8x1xf32>
    %23 = vector.shape_cast %22 : vector<8x1xf32> to vector<8x1x1xf32>
    %cst_15 = arith.constant dense<0xFF800000> : vector<8x1xf32>
    %24 = vector.multi_reduction <maximumf>, %19, %cst_15 [1] : vector<8x8x1xf32> to vector<8x1xf32>
    %25 = vector.shape_cast %24 : vector<8x1xf32> to vector<8x1x1xf32>
    %26 = arith.maximumf %21, %25 : vector<8x1x1xf32>
    %27 = arith.subf %21, %26 : vector<8x1x1xf32>
    %28 = math.exp %27 : vector<8x1x1xf32>
    %29 = vector.broadcast %26 : vector<8x1x1xf32> to vector<8x8x1xf32>
    %30 = arith.subf %19, %29 : vector<8x8x1xf32>
    %31 = math.exp %30 : vector<8x8x1xf32>
    %32 = arith.mulf %28, %23 : vector<8x1x1xf32>
    %cst_16 = arith.constant dense<0.000000e+00> : vector<8x1xf32>
    %33 = vector.multi_reduction <add>, %31, %cst_16 [1] : vector<8x8x1xf32> to vector<8x1xf32>
    %34 = vector.shape_cast %33 : vector<8x1xf32> to vector<8x1x1xf32>
    %35 = arith.addf %32, %34 : vector<8x1x1xf32>
    %36 = arith.extf %3 : vector<8x8x768xbf16> to vector<8x8x768xf32>
    %37 = vector.broadcast %31 : vector<8x8x1xf32> to vector<8x8x768xf32>
    %38 = arith.mulf %37, %36 : vector<8x8x768xf32>
    %cst_17 = arith.constant dense<0.000000e+00> : vector<8x768xf32>
    %39 = vector.multi_reduction <add>, %38, %cst_17 [1] : vector<8x8x768xf32> to vector<8x768xf32>
    %40 = vector.shape_cast %28 : vector<8x1x1xf32> to vector<8x1xf32>
    %c0_18 = arith.constant 0 : index
    %c0_19 = arith.constant 0 : index
    %41 = vector.load %arg12[%c0_18, %c0_19] : memref<8x768xf32, #tpu.memory_space<vmem>>, vector<8x768xf32>
    %42 = vector.broadcast %40 : vector<8x1xf32> to vector<8x768xf32>
    %43 = arith.mulf %42, %41 : vector<8x768xf32>
    %44 = arith.addf %43, %39 : vector<8x768xf32>
    %c0_20 = arith.constant 0 : index
    %c0_21 = arith.constant 0 : index
    %45 = vector.load %arg12[%c0_20, %c0_21] : memref<8x768xf32, #tpu.memory_space<vmem>>, vector<8x768xf32>
    tpu.vector_store %arg12[%c0_20, %c0_21], %44 {strides = array<i32>} : memref<8x768xf32, #tpu.memory_space<vmem>>, vector<8x768xf32>,
    %46 = vector.shape_cast %26 : vector<8x1x1xf32> to vector<8x1xf32>
    %c0_22 = arith.constant 0 : index
    %c0_23 = arith.constant 0 : index
    %47 = vector.load %arg10[%c0_22, %c0_23] : memref<8x1xf32, #tpu.memory_space<vmem>>, vector<8x1xf32>
    tpu.vector_store %arg10[%c0_22, %c0_23], %46 {strides = array<i32>} : memref<8x1xf32, #tpu.memory_space<vmem>>, vector<8x1xf32>,
    %48 = vector.shape_cast %35 : vector<8x1x1xf32> to vector<8x1xf32>
    %c0_24 = arith.constant 0 : index
    %c0_25 = arith.constant 0 : index
    %49 = vector.load %arg11[%c0_24, %c0_25] : memref<8x1xf32, #tpu.memory_space<vmem>>, vector<8x1xf32>
    tpu.vector_store %arg11[%c0_24, %c0_25], %48 {strides = array<i32>} : memref<8x1xf32, #tpu.memory_space<vmem>>, vector<8x1xf32>,
    %c0_i32_26 = arith.constant 0 : i32
    %50 = arith.cmpi eq, %arg1, %c0_i32_26 : i32
    %51 = arith.extui %50 : i1 to i32
    %c0_i32_27 = arith.constant 0 : i32
    %52 = arith.cmpi ne, %51, %c0_i32_27 : i32
    scf.if %52 {
      %c0_28 = arith.constant 0 : index
      %c0_29 = arith.constant 0 : index
      %53 = vector.load %arg12[%c0_28, %c0_29] : memref<8x768xf32, #tpu.memory_space<vmem>>, vector<8x768xf32>
      %c0_30 = arith.constant 0 : index
      %c0_31 = arith.constant 0 : index
      %54 = vector.load %arg11[%c0_30, %c0_31] : memref<8x1xf32, #tpu.memory_space<vmem>>, vector<8x1xf32>
      %55 = vector.broadcast %54 : vector<8x1xf32> to vector<8x768xf32>
      %56 = arith.divf %53, %55 : vector<8x768xf32>
      %57 = arith.truncf %56 : vector<8x768xf32> to vector<8x768xbf16>
      %c0_32 = arith.constant 0 : index
      %c0_33 = arith.constant 0 : index
      %58 = vector.load %arg7[%c0_32, %c0_33] : memref<768x128xbf16, #tpu.memory_space<vmem>>, vector<768x128xbf16>
      %cst_34 = arith.constant dense<0.000000e+00> : vector<8x128xf32>
      %59 = tpu.matmul %57, %58, %cst_34 {dimension_numbers = #tpu.dot_dimension_numbers<[1], [0], [0], [1], [0, 0, 1, 1], [], []>} : vector<8x768xbf16>, vector<768x128xbf16>, vector<8x128xf32> -> vector<8x128xf32>
      %c0_35 = arith.constant 0 : index
      %c0_36 = arith.constant 0 : index
      %60 = vector.load %arg8[%c0_35, %c0_36] : memref<1x128xf32, #tpu.memory_space<vmem>>, vector<1x128xf32>
      %61 = vector.broadcast %60 : vector<1x128xf32> to vector<8x128xf32>
      %62 = arith.addf %59, %61 : vector<8x128xf32>
      %c0_37 = arith.constant 0 : index
      %c0_38 = arith.constant 0 : index
      %63 = vector.load %arg9[%c0_37, %c0_38] : memref<8x128xf32, #tpu.memory_space<vmem>>, vector<8x128xf32>
      tpu.vector_store %arg9[%c0_37, %c0_38], %62 {strides = array<i32>} : memref<8x128xf32, #tpu.memory_space<vmem>>, vector<8x128xf32>,
    } else {
    }
    return
  }
  func.func @transform_0(%arg0: i32, %arg1: i32) -> (i32, i32, i32) {
    %c0_i32 = arith.constant 0 : i32
    %c0_i32_0 = arith.constant 0 : i32
    return %arg0, %arg1, %c0_i32 : i32, i32, i32
  }
  func.func @transform_1(%arg0: i32, %arg1: i32) -> (i32, i32) {
    %c0_i32 = arith.constant 0 : i32
    %c0_i32_0 = arith.constant 0 : i32
    %c0_i32_1 = arith.constant 0 : i32
    return %c0_i32, %c0_i32_0 : i32, i32
  }
  func.func @transform_2(%arg0: i32, %arg1: i32) -> (i32, i32) {
    %c0_i32 = arith.constant 0 : i32
    %c0_i32_0 = arith.constant 0 : i32
    %c0_i32_1 = arith.constant 0 : i32
    return %c0_i32, %c0_i32_0 : i32, i32
  }
  func.func @transform_3(%arg0: i32, %arg1: i32) -> (i32, i32) {
    %c0_i32 = arith.constant 0 : i32
    %c0_i32_0 = arith.constant 0 : i32
    %c0_i32_1 = arith.constant 0 : i32
    return %c0_i32, %c0_i32_0 : i32, i32
  }
  func.func @transform_4(%arg0: i32, %arg1: i32) -> i32 {
    %c0_i32 = arith.constant 0 : i32
    %c0_i32_0 = arith.constant 0 : i32
    return %c0_i32 : i32
  }
  func.func @transform_5(%arg0: i32, %arg1: i32) -> (i32, i32) {
    %c0_i32 = arith.constant 0 : i32
    %c0_i32_0 = arith.constant 0 : i32
    %c0_i32_1 = arith.constant 0 : i32
    return %c0_i32, %c0_i32_0 : i32, i32
  }
  func.func @transform_6(%arg0: i32, %arg1: i32) -> (i32, i32) {
    %c0_i32 = arith.constant 0 : i32
    %c0_i32_0 = arith.constant 0 : i32
    %c0_i32_1 = arith.constant 0 : i32
    return %c0_i32, %c0_i32_0 : i32, i32
  }
  func.func @transform_7(%arg0: i32, %arg1: i32) -> (i32, i32) {
    %c0_i32 = arith.constant 0 : i32
    %c0_i32_0 = arith.constant 0 : i32
    return %arg0, %c0_i32 : i32, i32
  }
}

</mosaic_0001>

<llo_original>
// kernel: tpu_custom_call.1
$region0: #{tpu_custom_call.1}
  #allocation0 [shape = 'u32[]', space=smem, size = 0x4, offset = 0x4, fixed_abs, tag = 'smem constant byte address 0x4 - core index']
  #allocation1 [shape = 'u32[144,128]{1,0:T(1,128)}', space=vmem, size = 0x12000, scoped, tag = 'internal scratch']
  #allocation2 [shape = 'f32[8,1]{1,0:T(8,128)}', space=vmem, size = 0x1000, scoped, tag = 'scratch operand']
  #allocation3 [shape = 'f32[8,1]{1,0:T(8,128)}', space=vmem, size = 0x1000, scoped, tag = 'scratch operand']
  #allocation4 [shape = 'f32[8,768]{1,0:T(8,128)}', space=vmem, size = 0x6000, scoped, tag = 'scratch operand']
  #allocation5 [shape = 'f32[1]{0:T(128)S(6)}', space=smem, size = 0x200, scoped, tag = 'scoped memory for tpu_custom_call.1']
  %s0 = inlined_call_operand.hbm [shape: bf16[16,8,768], index: 0, kind: input, shape index: {}]
  %s1 = inlined_call_operand.hbm [shape: bf16[768,512], index: 1, kind: input, shape index: {}]
  %s2 = inlined_call_operand.vmem [shape: f32[1,512], index: 2, kind: input, shape index: {}]
  %s3 = inlined_call_operand.vmem [shape: f32[1,512], index: 3, kind: input, shape index: {}]
  %s4 = inlined_call_operand.<no memory space> [shape: f32[1], index: 4, kind: input, shape index: {}]
  %s5 = inlined_call_operand.hbm [shape: bf16[768,128], index: 5, kind: input, shape index: {}]
  %s6 = inlined_call_operand.vmem [shape: f32[1,128], index: 6, kind: input, shape index: {}]
  %s7 = inlined_call_operand.hbm [shape: f32[16,128], index: 7, kind: output, shape index: {}]
  %s8 = sld [smem:[#allocation0]]
  $region81: #{tpu_custom_call.1} parent=0
    _
  %s10 = ssub.s32 1, %s8
  %s11 = scalar_select 0, %s10, %s8
  %12 = sst [smem:[#allocation5]] %s4
  $region1: #{tpu_custom_call.1} parent=0
    #allocation6 [shape = 'u8[196608]{0}', space=vmem, size = 0x30000, scoped, tag = 'input window, operand 0']
    #allocation7 [shape = 's32[2]{0}', space=sflag, size = 0x8, scoped, tag = 'scoped memory for tpu_custom_call.1']
    #allocation8 [shape = 's32[2]{0}', space=sflag, size = 0x8, scoped, tag = 'scoped memory for tpu_custom_call.1']
    #allocation9 [shape = 'u8[786432]{0}', space=vmem, size = 0xc0000, scoped, tag = 'input window, operand 1, single buffered']
    #allocation10 [shape = 's32[1]{0}', space=sflag, size = 0x4, scoped, tag = 'scoped memory for tpu_custom_call.1']
    #allocation11 [shape = 'u8[196608]{0}', space=vmem, size = 0x30000, scoped, tag = 'input window, operand 5, single buffered']
    #allocation12 [shape = 'u8[8192]{0}', space=vmem, size = 0x2000, scoped, tag = 'output window, operand 0']
    %13 = vsyncpa [#allocation7], 0
    %s14 = scalar_lea.sflag [#allocation7], 1
    %15 = vsyncpa %s14, 0
    %16 = vsyncpa [#allocation10], 0
    %17 = vsyncpa [#allocation8], 0
    %s18 = scalar_lea.sflag [#allocation8], 1
    %19 = vsyncpa %s18, 0
    loop: start=0, step=1, limit=4
    $region2: #{tpu_custom_call.1} parent=1 // loop_pre_header
      _
    $region3: #{tpu_custom_call.1} parent=1 // loop_header
      %s21 = sphi 0, %s25
      %p22 = scmp.ge.s32.totalorder %s21, 4
      %s28 = sphi 0, %s40
      %s29 = sphi 0, %s36
      %s30 = sphi 0, %s28
      %s31 = sphi 0, %s29
      %s32 = sphi 0, %s30
      %s33 = sphi 0, %s31
      %s45 = sphi 0, %s47
      %s48 = sphi 0, %s45
      %s49 = sphi 0, %s48
      %s65 = sphi 0, %s49
      %s69 = sphi 0, %s69
      %s71 = sphi 0, %s69
      %s72 = sphi 0, %s71
      %s86 = sphi 0, %s72
      %s90 = sphi 0, %s90
      %s92 = sphi 0, %s90
      %s93 = sphi 0, %s92
      %s107 = sphi 0, %s93
      %s111 = sphi 0, %s111
      %s113 = sphi 0, %s111
      %s114 = sphi 0, %s113
      %s128 = sphi 0, %s114
      %s132 = sphi 0, %s132
      %s134 = sphi 0, %s132
      %s135 = sphi 0, %s134
      %s149 = sphi 0, %s135
      %s153 = sphi 0, %s153
      %s155 = sphi 0, %s153
      %s156 = sphi 0, %s155
      %s170 = sphi 0, %s156
      %s174 = sphi 0, %s174
      %s176 = sphi 0, %s174
      %s177 = sphi 0, %s176
      %s191 = sphi 0, %s177
      %s197 = sphi 0, %s199
      %s200 = sphi 0, %s197
      %s201 = sphi 0, %s200
      %s217 = sphi 0, %s201
    $region4: #{tpu_custom_call.1} parent=1 // loop_header_branch
      %24 = sbr.rel (%p22) target = $region8
    $region5: #{tpu_custom_call.1} parent=1 // loop_body
      %s26 = ssub.s32 %s21, 1
      %s27 = ssub.s32 %s21, 2
      %s34 = sadd.s32 1, %s29
      %p35 = scmp.ge.s32.totalorder %s34, 1
      %s36 = scalar_select %p35, 0, %s34
      %s37 = sadd.s32 1, %s28
      %s38 = scalar_select %p35, %s37, %s28
      %p39 = scmp.ge.s32.totalorder %s38, 2
      %s40 = scalar_select %p39, 0, %s38
      %s41 = ssub.s32 %s28, %s40
      %s42 = ssub.s32 %s29, %s36
      %s43 = sor.u32 %s41, %s42
      %p44 = scmp.eq.s32.totalorder %s43, 0
      %s46 = sadd.s32 %s45, 1
      %s47 = scalar_select %p44, %s45, %s46
      %p50 = pneg %p44
      %p51 = scmp.eq.s32.totalorder %s21, 1
      %p52 = por %p50, %p51
      %p53 = scmp.ne.s32.totalorder %s45, %s48
      %p54 = scmp.eq.s32.totalorder %s21, 0
      %p55 = por %p53, %p54
      %p56 = scmp.ne.s32.totalorder %s45, %s48
      %p57 = scmp.eq.s32.totalorder %s26, 1
      %p58 = por %p56, %p57
      %p59 = scmp.ne.s32.totalorder %s48, %s49
      %p60 = scmp.eq.s32.totalorder %s26, 0
      %p61 = por %p59, %p60
      %p62 = scmp.ne.s32.totalorder %s48, %s49
      %p63 = scmp.eq.s32.totalorder %s27, 1
      %p64 = por %p62, %p63
      %p66 = scmp.ne.s32.totalorder %s49, %s65
      %p67 = scmp.eq.s32.totalorder %s27, 0
      %p68 = por %p66, %p67
      %s70 = sadd.s32 %s69, 1
      %p73 = scmp.eq.s32.totalorder %s21, 1
      %p74 = scmp.ne.s32.totalorder %s69, %s71
      %p75 = scmp.eq.s32.totalorder %s21, 0
      %p76 = por %p74, %p75
      %p77 = scmp.ne.s32.totalorder %s69, %s71
      %p78 = scmp.eq.s32.totalorder %s26, 1
      %p79 = por %p77, %p78
      %p80 = scmp.ne.s32.totalorder %s71, %s72
      %p81 = scmp.eq.s32.totalorder %s26, 0
      %p82 = por %p80, %p81
      %p83 = scmp.ne.s32.totalorder %s71, %s72
      %p84 = scmp.eq.s32.totalorder %s27, 1
      %p85 = por %p83, %p84
      %p87 = scmp.ne.s32.totalorder %s72, %s86
      %p88 = scmp.eq.s32.totalorder %s27, 0
      %p89 = por %p87, %p88
      %s91 = sadd.s32 %s90, 1
      %p94 = scmp.eq.s32.totalorder %s21, 1
      %p95 = scmp.ne.s32.totalorder %s90, %s92
      %p96 = scmp.eq.s32.totalorder %s21, 0
      %p97 = por %p95, %p96
      %p98 = scmp.ne.s32.totalorder %s90, %s92
      %p99 = scmp.eq.s32.totalorder %s26, 1
      %p100 = por %p98, %p99
      %p101 = scmp.ne.s32.totalorder %s92, %s93
      %p102 = scmp.eq.s32.totalorder %s26, 0
      %p103 = por %p101, %p102
      %p104 = scmp.ne.s32.totalorder %s92, %s93
      %p105 = scmp.eq.s32.totalorder %s27, 1
      %p106 = por %p104, %p105
      %p108 = scmp.ne.s32.totalorder %s93, %s107
      %p109 = scmp.eq.s32.totalorder %s27, 0
      %p110 = por %p108, %p109
      %s112 = sadd.s32 %s111, 1
      %p115 = scmp.eq.s32.totalorder %s21, 1
      %p116 = scmp.ne.s32.totalorder %s111, %s113
      %p117 = scmp.eq.s32.totalorder %s21, 0
      %p118 = por %p116, %p117
      %p119 = scmp.ne.s32.totalorder %s111, %s113
      %p120 = scmp.eq.s32.totalorder %s26, 1
      %p121 = por %p119, %p120
      %p122 = scmp.ne.s32.totalorder %s113, %s114
      %p123 = scmp.eq.s32.totalorder %s26, 0
      %p124 = por %p122, %p123
      %p125 = scmp.ne.s32.totalorder %s113, %s114
      %p126 = scmp.eq.s32.totalorder %s27, 1
      %p127 = por %p125, %p126
      %p129 = scmp.ne.s32.totalorder %s114, %s128
      %p130 = scmp.eq.s32.totalorder %s27, 0
      %p131 = por %p129, %p130
      %s133 = sadd.s32 %s132, 1
      %p136 = scmp.eq.s32.totalorder %s21, 1
      %p137 = scmp.ne.s32.totalorder %s132, %s134
      %p138 = scmp.eq.s32.totalorder %s21, 0
      %p139 = por %p137, %p138
      %p140 = scmp.ne.s32.totalorder %s132, %s134
      %p141 = scmp.eq.s32.totalorder %s26, 1
      %p142 = por %p140, %p141
      %p143 = scmp.ne.s32.totalorder %s134, %s135
      %p144 = scmp.eq.s32.totalorder %s26, 0
      %p145 = por %p143, %p144
      %p146 = scmp.ne.s32.totalorder %s134, %s135
      %p147 = scmp.eq.s32.totalorder %s27, 1
      %p148 = por %p146, %p147
      %p150 = scmp.ne.s32.totalorder %s135, %s149
      %p151 = scmp.eq.s32.totalorder %s27, 0
      %p152 = por %p150, %p151
      %s154 = sadd.s32 %s153, 1
      %p157 = scmp.eq.s32.totalorder %s21, 1
      %p158 = scmp.ne.s32.totalorder %s153, %s155
      %p159 = scmp.eq.s32.totalorder %s21, 0
      %p160 = por %p158, %p159
      %p161 = scmp.ne.s32.totalorder %s153, %s155
      %p162 = scmp.eq.s32.totalorder %s26, 1
      %p163 = por %p161, %p162
      %p164 = scmp.ne.s32.totalorder %s155, %s156
      %p165 = scmp.eq.s32.totalorder %s26, 0
      %p166 = por %p164, %p165
      %p167 = scmp.ne.s32.totalorder %s155, %s156
      %p168 = scmp.eq.s32.totalorder %s27, 1
      %p169 = por %p167, %p168
      %p171 = scmp.ne.s32.totalorder %s156, %s170
      %p172 = scmp.eq.s32.totalorder %s27, 0
      %p173 = por %p171, %p172
      %s175 = sadd.s32 %s174, 1
      %p178 = scmp.eq.s32.totalorder %s21, 1
      %p179 = scmp.ne.s32.totalorder %s174, %s176
      %p180 = scmp.eq.s32.totalorder %s21, 0
      %p181 = por %p179, %p180
      %p182 = scmp.ne.s32.totalorder %s174, %s176
      %p183 = scmp.eq.s32.totalorder %s26, 1
      %p184 = por %p182, %p183
      %p185 = scmp.ne.s32.totalorder %s176, %s177
      %p186 = scmp.eq.s32.totalorder %s26, 0
      %p187 = por %p185, %p186
      %p188 = scmp.ne.s32.totalorder %s176, %s177
      %p189 = scmp.eq.s32.totalorder %s27, 1
      %p190 = por %p188, %p189
      %p192 = scmp.ne.s32.totalorder %s177, %s191
      %p193 = scmp.eq.s32.totalorder %s27, 0
      %p194 = por %p192, %p193
      %s195 = ssub.s32 %s28, %s40
      %p196 = scmp.eq.s32.totalorder %s195, 0
      %s198 = sadd.s32 %s197, 1
      %s199 = scalar_select %p196, %s197, %s198
      %p202 = pneg %p196
      %p203 = scmp.eq.s32.totalorder %s21, 1
      %p204 = por %p202, %p203
      %p205 = scmp.ne.s32.totalorder %s197, %s200
      %p206 = scmp.eq.s32.totalorder %s21, 0
      %p207 = por %p205, %p206
      %p208 = scmp.ne.s32.totalorder %s197, %s200
      %p209 = scmp.eq.s32.totalorder %s26, 1
      %p210 = por %p208, %p209
      %p211 = scmp.ne.s32.totalorder %s200, %s201
      %p212 = scmp.eq.s32.totalorder %s26, 0
      %p213 = por %p211, %p212
      %p214 = scmp.ne.s32.totalorder %s200, %s201
      %p215 = scmp.eq.s32.totalorder %s27, 1
      %p216 = por %p214, %p215
      %p218 = scmp.ne.s32.totalorder %s201, %s217
      %p219 = scmp.eq.s32.totalorder %s27, 0
      %p220 = por %p218, %p219
      %p221 = scmp.le.s32.totalorder 1, %s21
      %p222 = scmp.lt.s32.totalorder %s21, 3
      %p223 = pnand %p221, %p222
      %p224 = pneg %p223
      // Predicated region
      $region9: #{tpu_custom_call.1} parent=5 // pred_check
        _
      $region10: #{tpu_custom_call.1} parent=5 // pred_check_branch
        %226 = sbr.rel (%p223) target = $region12
      $region11: #{tpu_custom_call.1} parent=5 // pred_region
        %s227 = ssub.s32 %s21, 1
        // Predicated region
        $region13: #{tpu_custom_call.1} parent=11 // pred_check
          %p228 = pneg %p82
        $region14: #{tpu_custom_call.1} parent=11 // pred_check_branch
          %230 = sbr.rel (%p228) target = $region16
        $region15: #{tpu_custom_call.1} parent=11 // pred_region
          %s232 = ssub.s32 24576, 24576
          %233 = vsyncadd [#allocation10], %s232
          %s234 = sshll.u32 [#allocation9], 4
          %s235 = int_to_ptr.vmem [resolvable:$true] %s234
          %240 = dma.hbm_to_vmem [thread:$0]  %s1, 24576, %s235, [#allocation10], 256, 256, 16
        $region16: #{tpu_custom_call.1} parent=11 // pred_fallthru
          _
        // Predicated region
        $region17: #{tpu_custom_call.1} parent=11 // pred_check
          %p241 = pneg %p103
        $region18: #{tpu_custom_call.1} parent=11 // pred_check_branch
          %243 = sbr.rel (%p241) target = $region20
        $region19: #{tpu_custom_call.1} parent=11 // pred_region
          _
        $region20: #{tpu_custom_call.1} parent=11 // pred_fallthru
          _
        // Predicated region
        $region21: #{tpu_custom_call.1} parent=11 // pred_check
          %p244 = pneg %p124
        $region22: #{tpu_custom_call.1} parent=11 // pred_check_branch
          %246 = sbr.rel (%p244) target = $region24
        $region23: #{tpu_custom_call.1} parent=11 // pred_region
          _
        $region24: #{tpu_custom_call.1} parent=11 // pred_fallthru
          _
        // Predicated region
        $region25: #{tpu_custom_call.1} parent=11 // pred_check
          %p247 = pneg %p145
        $region26: #{tpu_custom_call.1} parent=11 // pred_check_branch
          %249 = sbr.rel (%p247) target = $region28
        $region27: #{tpu_custom_call.1} parent=11 // pred_region
          _
        $region28: #{tpu_custom_call.1} parent=11 // pred_fallthru
          _
        // Predicated region
        $region29: #{tpu_custom_call.1} parent=11 // pred_check
          %p250 = pneg %p166
        $region30: #{tpu_custom_call.1} parent=11 // pred_check_branch
          %252 = sbr.rel (%p250) target = $region32
        $region31: #{tpu_custom_call.1} parent=11 // pred_region
          %s254 = ssub.s32 6144, 6144
          %255 = vsyncadd [#allocation10], %s254
          %s256 = sshll.u32 [#allocation11], 4
          %s257 = int_to_ptr.vmem [resolvable:$true] %s256
          %262 = dma.hbm_to_vmem [thread:$0]  %s5, 6144, %s257, [#allocation10], 64, 64, 4
        $region32: #{tpu_custom_call.1} parent=11 // pred_fallthru
          _
        // Predicated region
        $region33: #{tpu_custom_call.1} parent=11 // pred_check
          %p263 = pneg %p187
        $region34: #{tpu_custom_call.1} parent=11 // pred_check_branch
          %265 = sbr.rel (%p263) target = $region36
        $region35: #{tpu_custom_call.1} parent=11 // pred_region
          _
        $region36: #{tpu_custom_call.1} parent=11 // pred_fallthru
          _
      $region12: #{tpu_custom_call.1} parent=5 // pred_fallthru
        _
      %p266 = scmp.lt.s32.totalorder %s21, 2
      // Predicated region
      $region37: #{tpu_custom_call.1} parent=5 // pred_check
        %p267 = pneg %p266
      $region38: #{tpu_custom_call.1} parent=5 // pred_check_branch
        %269 = sbr.rel (%p267) target = $region40
      $region39: #{tpu_custom_call.1} parent=5 // pred_region
        // Predicated region
        $region41: #{tpu_custom_call.1} parent=39 // pred_check
          %p270 = pneg %p55
        $region42: #{tpu_custom_call.1} parent=39 // pred_check_branch
          %272 = sbr.rel (%p270) target = $region44
        $region43: #{tpu_custom_call.1} parent=39 // pred_region
          %s273 = sand.u32 %s45, 1
          %s274 = scalar_lea.sflag [#allocation7], %s273
          %s275 = sand.u32 %s45, 1
          %s276 = smul.addr %s275, 192
          %s277 = scalar_lea.vmem [#allocation6], %s276
          %s278 = smul.u32 8, %s28
          %s280 = ssub.s32 3072, 3072
          %281 = vsyncadd %s274, %s280
          %s282 = smul.addr %s29, 6
          %s283 = smul.addr %s278, 6
          %s284 = sadd.s32 %s282, %s283
          %s285 = smul.addr %s284, 64
          %s286 = scalar_lea.hbm %s0, %s285
          %s287 = sshll.u32 %s277, 4
          %s288 = int_to_ptr.vmem [resolvable:$true] %s287
          %293 = dma.hbm_to_vmem [thread:$0]  %s286, 3072, %s288, %s274, 384, 384, 24
        $region44: #{tpu_custom_call.1} parent=39 // pred_fallthru
          _
      $region40: #{tpu_custom_call.1} parent=5 // pred_fallthru
        _
      %p294 = scmp.le.s32.totalorder 1, %s21
      %p295 = scmp.lt.s32.totalorder %s21, 3
      %p296 = pnand %p294, %p295
      %p297 = pneg %p296
      // Predicated region
      $region45: #{tpu_custom_call.1} parent=5 // pred_check
        _
      $region46: #{tpu_custom_call.1} parent=5 // pred_check_branch
        %299 = sbr.rel (%p296) target = $region48
      $region47: #{tpu_custom_call.1} parent=5 // pred_region
        %s300 = ssub.s32 %s21, 1
        %s301 = sand.u32 %s48, 1
        %s302 = scalar_lea.sflag [#allocation7], %s301
        %s303 = sand.u32 %s48, 1
        %s304 = smul.addr %s303, 192
        %s305 = scalar_lea.vmem [#allocation6], %s304
        // Predicated region
        $region49: #{tpu_custom_call.1} parent=47 // pred_check
          %p306 = pneg %p61
        $region50: #{tpu_custom_call.1} parent=47 // pred_check_branch
          %308 = sbr.rel (%p306) target = $region52
        $region51: #{tpu_custom_call.1} parent=47 // pred_region
          %309 = dma.done %s302, 3072
        $region52: #{tpu_custom_call.1} parent=47 // pred_fallthru
          _
        // Predicated region
        $region53: #{tpu_custom_call.1} parent=47 // pred_check
          %p310 = pneg %p82
        $region54: #{tpu_custom_call.1} parent=47 // pred_check_branch
          %312 = sbr.rel (%p310) target = $region56
        $region55: #{tpu_custom_call.1} parent=47 // pred_region
          %313 = dma.done [#allocation10], 24576
        $region56: #{tpu_custom_call.1} parent=47 // pred_fallthru
          _
        // Predicated region
        $region57: #{tpu_custom_call.1} parent=47 // pred_check
          %p314 = pneg %p166
        $region58: #{tpu_custom_call.1} parent=47 // pred_check_branch
          %316 = sbr.rel (%p314) target = $region60
        $region59: #{tpu_custom_call.1} parent=47 // pred_region
          %317 = dma.done [#allocation10], 6144
        $region60: #{tpu_custom_call.1} parent=47 // pred_fallthru
          _
        %s318 = sand.u32 %s48, 1
        %s319 = scalar_lea.sflag [#allocation7], %s318
        %s320 = sand.u32 %s48, 1
        %s321 = smul.addr %s320, 192
        %s322 = scalar_lea.vmem [#allocation6], %s321
        %p323 = pneg %p61
        %p324 = pneg %p58
        %p325 = pneg %p82
        %p326 = pneg %p79
        %p327 = pneg %p103
        %p328 = pneg %p100
        %p329 = pneg %p124
        %p330 = pneg %p121
        %p331 = pneg %p145
        %p332 = pneg %p142
        %p333 = pneg %p166
        %p334 = pneg %p163
        %p335 = pneg %p187
        %p336 = pneg %p184
        %p337 = pneg %p213
        %p338 = pneg %p210
        %s339 = sand.u32 %s200, 1
        %s340 = scalar_lea.sflag [#allocation8], %s339
        %s341 = sand.u32 %s200, 1
        %s342 = smul.addr %s341, 8
        %s343 = scalar_lea.vmem [#allocation12], %s342
        %s344 = smul.u32 8, %s30
        %p346 = scmp.eq.s32.totalorder %s31, 0
        // Predicated region
        $region61: #{tpu_custom_call.1} parent=47 // pred_check
          %p347 = pneg %p346
        $region62: #{tpu_custom_call.1} parent=47 // pred_check_branch
          %349 = sbr.rel (%p347) target = $region64
        $region63: #{tpu_custom_call.1} parent=47 // pred_region
          %vm350 = vcmask 7168
          %351 = vst.msk [vmem:[#allocation2] sm:$0xff] %vm350, -inf
          %352 = vst.msk [vmem:[#allocation3] sm:$0xff] %vm350, 0.0
          %353 = vst [vmem:[#allocation4] sm:$0xff] 0.0
          %354 = vst [vmem:[#allocation4 + $0x8] sm:$0xff] 0.0
          %355 = vst [vmem:[#allocation4 + $0x10] sm:$0xff] 0.0
          %356 = vst [vmem:[#allocation4 + $0x18] sm:$0xff] 0.0
          %357 = vst [vmem:[#allocation4 + $0x20] sm:$0xff] 0.0
          %358 = vst [vmem:[#allocation4 + $0x28] sm:$0xff] 0.0
        $region64: #{tpu_custom_call.1} parent=47 // pred_fallthru
          _
        %v359 = vld [vmem:[%s305] sm:$0xff]
        %v360 = vld [vmem:[%s305 + $0x8] sm:$0xff]
        %v361 = vld [vmem:[%s305 + $0x10] sm:$0xff]
        %v362 = vld [vmem:[%s305 + $0x18] sm:$0xff]
        %v363 = vld [vmem:[%s305 + $0x20] sm:$0xff]
        %v364 = vld [vmem:[%s305 + $0x28] sm:$0xff]
        %v365 = vld [vmem:[%s305 + $0x30] sm:$0xff]
        %v366 = vld [vmem:[%s305 + $0x38] sm:$0xff]
        %v367 = vld [vmem:[%s305 + $0x40] sm:$0xff]
        %v368 = vld [vmem:[%s305 + $0x48] sm:$0xff]
        %v369 = vld [vmem:[%s305 + $0x50] sm:$0xff]
        %v370 = vld [vmem:[%s305 + $0x58] sm:$0xff]
        %v371 = vld [vmem:[%s305 + $0x60] sm:$0xff]
        %v372 = vld [vmem:[%s305 + $0x68] sm:$0xff]
        %v373 = vld [vmem:[%s305 + $0x70] sm:$0xff]
        %v374 = vld [vmem:[%s305 + $0x78] sm:$0xff]
        %v375 = vld [vmem:[%s305 + $0x80] sm:$0xff]
        %v376 = vld [vmem:[%s305 + $0x88] sm:$0xff]
        %v377 = vld [vmem:[%s305 + $0x90] sm:$0xff]
        %v378 = vld [vmem:[%s305 + $0x98] sm:$0xff]
        %v379 = vld [vmem:[%s305 + $0xa0] sm:$0xff]
        %v380 = vld [vmem:[%s305 + $0xa8] sm:$0xff]
        %v381 = vld [vmem:[%s305 + $0xb0] sm:$0xff]
        %v382 = vld [vmem:[%s305 + $0xb8] sm:$0xff]
        %v383 = vld [vmem:[#allocation9] sm:$0xff]
        %v384 = vld [vmem:[#allocation9 + $0x8] sm:$0xff]
        %v385 = vld [vmem:[#allocation9 + $0x10] sm:$0xff]
        %v386 = vld [vmem:[#allocation9 + $0x18] sm:$0xff]
        %v387 = vld [vmem:[#allocation9 + $0x20] sm:$0xff]
        %v388 = vld [vmem:[#allocation9 + $0x28] sm:$0xff]
        %v389 = vld [vmem:[#allocation9 + $0x30] sm:$0xff]
        %v390 = vld [vmem:[#allocation9 + $0x38] sm:$0xff]
        %v391 = vld [vmem:[#allocation9 + $0x40] sm:$0xff]
        %v392 = vld [vmem:[#allocation9 + $0x48] sm:$0xff]
        %v393 = vld [vmem:[#allocation9 + $0x50] sm:$0xff]
        %v394 = vld [vmem:[#allocation9 + $0x58] sm:$0xff]
        %v395 = vld [vmem:[#allocation9 + $0x60] sm:$0xff]
        %v396 = vld [vmem:[#allocation9 + $0x68] sm:$0xff]
        %v397 = vld [vmem:[#allocation9 + $0x70] sm:$0xff]
        %v398 = vld [vmem:[#allocation9 + $0x78] sm:$0xff]
        %v399 = vld [vmem:[#allocation9 + $0x80] sm:$0xff]
        %v400 = vld [vmem:[#allocation9 + $0x88] sm:$0xff]
        %v401 = vld [vmem:[#allocation9 + $0x90] sm:$0xff]
        %v402 = vld [vmem:[#allocation9 + $0x98] sm:$0xff]
        %v403 = vld [vmem:[#allocation9 + $0xa0] sm:$0xff]
        %v404 = vld [vmem:[#allocation9 + $0xa8] sm:$0xff]
        %v405 = vld [vmem:[#allocation9 + $0xb0] sm:$0xff]
        %v406 = vld [vmem:[#allocation9 + $0xb8] sm:$0xff]
        %v407 = vld [vmem:[#allocation9 + $0xc0] sm:$0xff]
        %v408 = vld [vmem:[#allocation9 + $0xc8] sm:$0xff]
        %v409 = vld [vmem:[#allocation9 + $0xd0] sm:$0xff]
        %v410 = vld [vmem:[#allocation9 + $0xd8] sm:$0xff]
        %v411 = vld [vmem:[#allocation9 + $0xe0] sm:$0xff]
        %v412 = vld [vmem:[#allocation9 + $0xe8] sm:$0xff]
        %v413 = vld [vmem:[#allocation9 + $0xf0] sm:$0xff]
        %v414 = vld [vmem:[#allocation9 + $0xf8] sm:$0xff]
        %v415 = vld [vmem:[#allocation9 + $0x100] sm:$0xff]
        %v416 = vld [vmem:[#allocation9 + $0x108] sm:$0xff]
        %v417 = vld [vmem:[#allocation9 + $0x110] sm:$0xff]
        %v418 = vld [vmem:[#allocation9 + $0x118] sm:$0xff]
        %v419 = vld [vmem:[#allocation9 + $0x120] sm:$0xff]
        %v420 = vld [vmem:[#allocation9 + $0x128] sm:$0xff]
        %v421 = vld [vmem:[#allocation9 + $0x130] sm:$0xff]
        %v422 = vld [vmem:[#allocation9 + $0x138] sm:$0xff]
        %v423 = vld [vmem:[#allocation9 + $0x140] sm:$0xff]
        %v424 = vld [vmem:[#allocation9 + $0x148] sm:$0xff]
        %v425 = vld [vmem:[#allocation9 + $0x150] sm:$0xff]
        %v426 = vld [vmem:[#allocation9 + $0x158] sm:$0xff]
        %v427 = vld [vmem:[#allocation9 + $0x160] sm:$0xff]
        %v428 = vld [vmem:[#allocation9 + $0x168] sm:$0xff]
        %v429 = vld [vmem:[#allocation9 + $0x170] sm:$0xff]
        %v430 = vld [vmem:[#allocation9 + $0x178] sm:$0xff]
        %v431 = vld [vmem:[#allocation9 + $0x180] sm:$0xff]
        %v432 = vld [vmem:[#allocation9 + $0x188] sm:$0xff]
        %v433 = vld [vmem:[#allocation9 + $0x190] sm:$0xff]
        %v434 = vld [vmem:[#allocation9 + $0x198] sm:$0xff]
        %v435 = vld [vmem:[#allocation9 + $0x1a0] sm:$0xff]
        %v436 = vld [vmem:[#allocation9 + $0x1a8] sm:$0xff]
        %v437 = vld [vmem:[#allocation9 + $0x1b0] sm:$0xff]
        %v438 = vld [vmem:[#allocation9 + $0x1b8] sm:$0xff]
        %v439 = vld [vmem:[#allocation9 + $0x1c0] sm:$0xff]
        %v440 = vld [vmem:[#allocation9 + $0x1c8] sm:$0xff]
        %v441 = vld [vmem:[#allocation9 + $0x1d0] sm:$0xff]
        %v442 = vld [vmem:[#allocation9 + $0x1d8] sm:$0xff]
        %v443 = vld [vmem:[#allocation9 + $0x1e0] sm:$0xff]
        %v444 = vld [vmem:[#allocation9 + $0x1e8] sm:$0xff]
        %v445 = vld [vmem:[#allocation9 + $0x1f0] sm:$0xff]
        %v446 = vld [vmem:[#allocation9 + $0x1f8] sm:$0xff]
        %v447 = vld [vmem:[#allocation9 + $0x200] sm:$0xff]
        %v448 = vld [vmem:[#allocation9 + $0x208] sm:$0xff]
        %v449 = vld [vmem:[#allocation9 + $0x210] sm:$0xff]
        %v450 = vld [vmem:[#allocation9 + $0x218] sm:$0xff]
        %v451 = vld [vmem:[#allocation9 + $0x220] sm:$0xff]
        %v452 = vld [vmem:[#allocation9 + $0x228] sm:$0xff]
        %v453 = vld [vmem:[#allocation9 + $0x230] sm:$0xff]
        %v454 = vld [vmem:[#allocation9 + $0x238] sm:$0xff]
        %v455 = vld [vmem:[#allocation9 + $0x240] sm:$0xff]
        %v456 = vld [vmem:[#allocation9 + $0x248] sm:$0xff]
        %v457 = vld [vmem:[#allocation9 + $0x250] sm:$0xff]
        %v458 = vld [vmem:[#allocation9 + $0x258] sm:$0xff]
        %v459 = vld [vmem:[#allocation9 + $0x260] sm:$0xff]
        %v460 = vld [vmem:[#allocation9 + $0x268] sm:$0xff]
        %v461 = vld [vmem:[#allocation9 + $0x270] sm:$0xff]
        %v462 = vld [vmem:[#allocation9 + $0x278] sm:$0xff]
        %v463 = vld [vmem:[#allocation9 + $0x280] sm:$0xff]
        %v464 = vld [vmem:[#allocation9 + $0x288] sm:$0xff]
        %v465 = vld [vmem:[#allocation9 + $0x290] sm:$0xff]
        %v466 = vld [vmem:[#allocation9 + $0x298] sm:$0xff]
        %v467 = vld [vmem:[#allocation9 + $0x2a0] sm:$0xff]
        %v468 = vld [vmem:[#allocation9 + $0x2a8] sm:$0xff]
        %v469 = vld [vmem:[#allocation9 + $0x2b0] sm:$0xff]
        %v470 = vld [vmem:[#allocation9 + $0x2b8] sm:$0xff]
        %v471 = vld [vmem:[#allocation9 + $0x2c0] sm:$0xff]
        %v472 = vld [vmem:[#allocation9 + $0x2c8] sm:$0xff]
        %v473 = vld [vmem:[#allocation9 + $0x2d0] sm:$0xff]
        %v474 = vld [vmem:[#allocation9 + $0x2d8] sm:$0xff]
        %v475 = vld [vmem:[#allocation9 + $0x2e0] sm:$0xff]
        %v476 = vld [vmem:[#allocation9 + $0x2e8] sm:$0xff]
        %v477 = vld [vmem:[#allocation9 + $0x2f0] sm:$0xff]
        %v478 = vld [vmem:[#allocation9 + $0x2f8] sm:$0xff]
        %v479 = vld [vmem:[#allocation9 + $0x300] sm:$0xff]
        %v480 = vld [vmem:[#allocation9 + $0x308] sm:$0xff]
        %v481 = vld [vmem:[#allocation9 + $0x310] sm:$0xff]
        %v482 = vld [vmem:[#allocation9 + $0x318] sm:$0xff]
        %v483 = vld [vmem:[#allocation9 + $0x320] sm:$0xff]
        %v484 = vld [vmem:[#allocation9 + $0x328] sm:$0xff]
        %v485 = vld [vmem:[#allocation9 + $0x330] sm:$0xff]
        %v486 = vld [vmem:[#allocation9 + $0x338] sm:$0xff]
        %v487 = vld [vmem:[#allocation9 + $0x340] sm:$0xff]
        %v488 = vld [vmem:[#allocation9 + $0x348] sm:$0xff]
        %v489 = vld [vmem:[#allocation9 + $0x350] sm:$0xff]
        %v490 = vld [vmem:[#allocation9 + $0x358] sm:$0xff]
        %v491 = vld [vmem:[#allocation9 + $0x360] sm:$0xff]
        %v492 = vld [vmem:[#allocation9 + $0x368] sm:$0xff]
        %v493 = vld [vmem:[#allocation9 + $0x370] sm:$0xff]
        %v494 = vld [vmem:[#allocation9 + $0x378] sm:$0xff]
        %v495 = vld [vmem:[#allocation9 + $0x380] sm:$0xff]
        %v496 = vld [vmem:[#allocation9 + $0x388] sm:$0xff]
        %v497 = vld [vmem:[#allocation9 + $0x390] sm:$0xff]
        %v498 = vld [vmem:[#allocation9 + $0x398] sm:$0xff]
        %v499 = vld [vmem:[#allocation9 + $0x3a0] sm:$0xff]
        %v500 = vld [vmem:[#allocation9 + $0x3a8] sm:$0xff]
        %v501 = vld [vmem:[#allocation9 + $0x3b0] sm:$0xff]
        %v502 = vld [vmem:[#allocation9 + $0x3b8] sm:$0xff]
        %v503 = vld [vmem:[#allocation9 + $0x3c0] sm:$0xff]
        %v504 = vld [vmem:[#allocation9 + $0x3c8] sm:$0xff]
        %v505 = vld [vmem:[#allocation9 + $0x3d0] sm:$0xff]
        %v506 = vld [vmem:[#allocation9 + $0x3d8] sm:$0xff]
        %v507 = vld [vmem:[#allocation9 + $0x3e0] sm:$0xff]
        %v508 = vld [vmem:[#allocation9 + $0x3e8] sm:$0xff]
        %v509 = vld [vmem:[#allocation9 + $0x3f0] sm:$0xff]
        %v510 = vld [vmem:[#allocation9 + $0x3f8] sm:$0xff]
        %v511 = vld [vmem:[#allocation9 + $0x400] sm:$0xff]
        %v512 = vld [vmem:[#allocation9 + $0x408] sm:$0xff]
        %v513 = vld [vmem:[#allocation9 + $0x410] sm:$0xff]
        %v514 = vld [vmem:[#allocation9 + $0x418] sm:$0xff]
        %v515 = vld [vmem:[#allocation9 + $0x420] sm:$0xff]
        %v516 = vld [vmem:[#allocation9 + $0x428] sm:$0xff]
        %v517 = vld [vmem:[#allocation9 + $0x430] sm:$0xff]
        %v518 = vld [vmem:[#allocation9 + $0x438] sm:$0xff]
        %v519 = vld [vmem:[#allocation9 + $0x440] sm:$0xff]
        %v520 = vld [vmem:[#allocation9 + $0x448] sm:$0xff]
        %v521 = vld [vmem:[#allocation9 + $0x450] sm:$0xff]
        %v522 = vld [vmem:[#allocation9 + $0x458] sm:$0xff]
        %v523 = vld [vmem:[#allocation9 + $0x460] sm:$0xff]
        %v524 = vld [vmem:[#allocation9 + $0x468] sm:$0xff]
        %v525 = vld [vmem:[#allocation9 + $0x470] sm:$0xff]
        %v526 = vld [vmem:[#allocation9 + $0x478] sm:$0xff]
        %v527 = vld [vmem:[#allocation9 + $0x480] sm:$0xff]
        %v528 = vld [vmem:[#allocation9 + $0x488] sm:$0xff]
        %v529 = vld [vmem:[#allocation9 + $0x490] sm:$0xff]
        %v530 = vld [vmem:[#allocation9 + $0x498] sm:$0xff]
        %v531 = vld [vmem:[#allocation9 + $0x4a0] sm:$0xff]
        %v532 = vld [vmem:[#allocation9 + $0x4a8] sm:$0xff]
        %v533 = vld [vmem:[#allocation9 + $0x4b0] sm:$0xff]
        %v534 = vld [vmem:[#allocation9 + $0x4b8] sm:$0xff]
        %v535 = vld [vmem:[#allocation9 + $0x4c0] sm:$0xff]
        %v536 = vld [vmem:[#allocation9 + $0x4c8] sm:$0xff]
        %v537 = vld [vmem:[#allocation9 + $0x4d0] sm:$0xff]
        %v538 = vld [vmem:[#allocation9 + $0x4d8] sm:$0xff]
        %v539 = vld [vmem:[#allocation9 + $0x4e0] sm:$0xff]
        %v540 = vld [vmem:[#allocation9 + $0x4e8] sm:$0xff]
        %v541 = vld [vmem:[#allocation9 + $0x4f0] sm:$0xff]
        %v542 = vld [vmem:[#allocation9 + $0x4f8] sm:$0xff]
        %v543 = vld [vmem:[#allocation9 + $0x500] sm:$0xff]
        %v544 = vld [vmem:[#allocation9 + $0x508] sm:$0xff]
        %v545 = vld [vmem:[#allocation9 + $0x510] sm:$0xff]
        %v546 = vld [vmem:[#allocation9 + $0x518] sm:$0xff]
        %v547 = vld [vmem:[#allocation9 + $0x520] sm:$0xff]
        %v548 = vld [vmem:[#allocation9 + $0x528] sm:$0xff]
        %v549 = vld [vmem:[#allocation9 + $0x530] sm:$0xff]
        %v550 = vld [vmem:[#allocation9 + $0x538] sm:$0xff]
        %v551 = vld [vmem:[#allocation9 + $0x540] sm:$0xff]
        %v552 = vld [vmem:[#allocation9 + $0x548] sm:$0xff]
        %v553 = vld [vmem:[#allocation9 + $0x550] sm:$0xff]
        %v554 = vld [vmem:[#allocation9 + $0x558] sm:$0xff]
        %v555 = vld [vmem:[#allocation9 + $0x560] sm:$0xff]
        %v556 = vld [vmem:[#allocation9 + $0x568] sm:$0xff]
        %v557 = vld [vmem:[#allocation9 + $0x570] sm:$0xff]
        %v558 = vld [vmem:[#allocation9 + $0x578] sm:$0xff]
        %v559 = vld [vmem:[#allocation9 + $0x580] sm:$0xff]
        %v560 = vld [vmem:[#allocation9 + $0x588] sm:$0xff]
        %v561 = vld [vmem:[#allocation9 + $0x590] sm:$0xff]
        %v562 = vld [vmem:[#allocation9 + $0x598] sm:$0xff]
        %v563 = vld [vmem:[#allocation9 + $0x5a0] sm:$0xff]
        %v564 = vld [vmem:[#allocation9 + $0x5a8] sm:$0xff]
        %v565 = vld [vmem:[#allocation9 + $0x5b0] sm:$0xff]
        %v566 = vld [vmem:[#allocation9 + $0x5b8] sm:$0xff]
        %v567 = vld [vmem:[#allocation9 + $0x5c0] sm:$0xff]
        %v568 = vld [vmem:[#allocation9 + $0x5c8] sm:$0xff]
        %v569 = vld [vmem:[#allocation9 + $0x5d0] sm:$0xff]
        %v570 = vld [vmem:[#allocation9 + $0x5d8] sm:$0xff]
        %v571 = vld [vmem:[#allocation9 + $0x5e0] sm:$0xff]
        %v572 = vld [vmem:[#allocation9 + $0x5e8] sm:$0xff]
        %v573 = vld [vmem:[#allocation9 + $0x5f0] sm:$0xff]
        %v574 = vld [vmem:[#allocation9 + $0x5f8] sm:$0xff]
        %v575 = vld [vmem:[%s2] sm:$0xf]
        %v577 = vlaneseq
        %v578 = vshrl.u32 %v577, 7
        %v579 = vsub.s32 0, %v578
        %v580 = vrot.slane %v575, %v579
        %v581 = vlaneseq
        %v582 = vshrl.u32 %v581, 7
        %v583 = vsub.s32 1, %v582
        %v584 = vrot.slane %v575, %v583
        %v585 = vlaneseq
        %v586 = vshrl.u32 %v585, 7
        %v587 = vsub.s32 2, %v586
        %v588 = vrot.slane %v575, %v587
        %v589 = vlaneseq
        %v590 = vshrl.u32 %v589, 7
        %v591 = vsub.s32 3, %v590
        %v592 = vrot.slane %v575, %v591
        %v621 = vunpack.c.l.b16 %v359
        %v622 = vunpack.c.h.b16 %v359
        %v623 = vunpack.c.l.b16 %v360
        %v624 = vunpack.c.h.b16 %v360
        %v625 = vunpack.c.l.b16 %v361
        %v626 = vunpack.c.h.b16 %v361
        %v627 = vunpack.c.l.b16 %v362
        %v628 = vunpack.c.h.b16 %v362
        %v629 = vunpack.c.l.b16 %v363
        %v630 = vunpack.c.h.b16 %v363
        %v631 = vunpack.c.l.b16 %v364
        %v632 = vunpack.c.h.b16 %v364
        %v633 = vunpack.c.l.b16 %v365
        %v634 = vunpack.c.h.b16 %v365
        %v635 = vunpack.c.l.b16 %v366
        %v636 = vunpack.c.h.b16 %v366
        %v637 = vunpack.c.l.b16 %v367
        %v638 = vunpack.c.h.b16 %v367
        %v639 = vunpack.c.l.b16 %v368
        %v640 = vunpack.c.h.b16 %v368
        %v641 = vunpack.c.l.b16 %v369
        %v642 = vunpack.c.h.b16 %v369
        %v643 = vunpack.c.l.b16 %v370
        %v644 = vunpack.c.h.b16 %v370
        %v645 = vunpack.c.l.b16 %v371
        %v646 = vunpack.c.h.b16 %v371
        %v647 = vunpack.c.l.b16 %v372
        %v648 = vunpack.c.h.b16 %v372
        %v649 = vunpack.c.l.b16 %v373
        %v650 = vunpack.c.h.b16 %v373
        %v651 = vunpack.c.l.b16 %v374
        %v652 = vunpack.c.h.b16 %v374
        %v653 = vunpack.c.l.b16 %v375
        %v654 = vunpack.c.h.b16 %v375
        %v655 = vunpack.c.l.b16 %v376
        %v656 = vunpack.c.h.b16 %v376
        %v657 = vunpack.c.l.b16 %v377
        %v658 = vunpack.c.h.b16 %v377
        %v659 = vunpack.c.l.b16 %v378
        %v660 = vunpack.c.h.b16 %v378
        %v661 = vunpack.c.l.b16 %v379
        %v662 = vunpack.c.h.b16 %v379
        %v663 = vunpack.c.l.b16 %v380
        %v664 = vunpack.c.h.b16 %v380
        %v665 = vunpack.c.l.b16 %v381
        %v666 = vunpack.c.h.b16 %v381
        %v667 = vunpack.c.l.b16 %v382
        %v668 = vunpack.c.h.b16 %v382
        %v669 = vpack.c.b16 %v627, %v621
        %v670 = vpack.c.b16 %v628, %v622
        %v671 = vpack.c.b16 %v629, %v623
        %v672 = vpack.c.b16 %v630, %v624
        %v673 = vpack.c.b16 %v631, %v625
        %v674 = vpack.c.b16 %v632, %v626
        %v675 = vpack.c.b16 %v639, %v633
        %v676 = vpack.c.b16 %v640, %v634
        %v677 = vpack.c.b16 %v641, %v635
        %v678 = vpack.c.b16 %v642, %v636
        %v679 = vpack.c.b16 %v643, %v637
        %v680 = vpack.c.b16 %v644, %v638
        %v681 = vpack.c.b16 %v651, %v645
        %v682 = vpack.c.b16 %v652, %v646
        %v683 = vpack.c.b16 %v653, %v647
        %v684 = vpack.c.b16 %v654, %v648
        %v685 = vpack.c.b16 %v655, %v649
        %v686 = vpack.c.b16 %v656, %v650
        %v687 = vpack.c.b16 %v663, %v657
        %v688 = vpack.c.b16 %v664, %v658
        %v689 = vpack.c.b16 %v665, %v659
        %v690 = vpack.c.b16 %v666, %v660
        %v691 = vpack.c.b16 %v667, %v661
        %v692 = vpack.c.b16 %v668, %v662
        %v909 = vunpack.c.l.b16 %v383
        %v910 = vunpack.c.h.b16 %v383
        %v911 = vunpack.c.l.b16 %v384
        %v912 = vunpack.c.h.b16 %v384
        %v913 = vunpack.c.l.b16 %v385
        %v914 = vunpack.c.h.b16 %v385
        %v915 = vunpack.c.l.b16 %v386
        %v916 = vunpack.c.h.b16 %v386
        %v917 = vunpack.c.l.b16 %v387
        %v918 = vunpack.c.h.b16 %v387
        %v919 = vunpack.c.l.b16 %v388
        %v920 = vunpack.c.h.b16 %v388
        %v921 = vunpack.c.l.b16 %v389
        %v922 = vunpack.c.h.b16 %v389
        %v923 = vunpack.c.l.b16 %v390
        %v924 = vunpack.c.h.b16 %v390
        %v925 = vunpack.c.l.b16 %v391
        %v926 = vunpack.c.h.b16 %v391
        %v927 = vunpack.c.l.b16 %v392
        %v928 = vunpack.c.h.b16 %v392
        %v929 = vunpack.c.l.b16 %v393
        %v930 = vunpack.c.h.b16 %v393
        %v931 = vunpack.c.l.b16 %v394
        %v932 = vunpack.c.h.b16 %v394
        %v933 = vunpack.c.l.b16 %v395
        %v934 = vunpack.c.h.b16 %v395
        %v935 = vunpack.c.l.b16 %v396
        %v936 = vunpack.c.h.b16 %v396
        %v937 = vunpack.c.l.b16 %v397
        %v938 = vunpack.c.h.b16 %v397
        %v939 = vunpack.c.l.b16 %v398
        %v940 = vunpack.c.h.b16 %v398
        %v941 = vunpack.c.l.b16 %v399
        %v942 = vunpack.c.h.b16 %v399
        %v943 = vunpack.c.l.b16 %v400
        %v944 = vunpack.c.h.b16 %v400
        %v945 = vunpack.c.l.b16 %v401
        %v946 = vunpack.c.h.b16 %v401
        %v947 = vunpack.c.l.b16 %v402
        %v948 = vunpack.c.h.b16 %v402
        %v949 = vunpack.c.l.b16 %v403
        %v950 = vunpack.c.h.b16 %v403
        %v951 = vunpack.c.l.b16 %v404
        %v952 = vunpack.c.h.b16 %v404
        %v953 = vunpack.c.l.b16 %v405
        %v954 = vunpack.c.h.b16 %v405
        %v955 = vunpack.c.l.b16 %v406
        %v956 = vunpack.c.h.b16 %v406
        %v957 = vunpack.c.l.b16 %v407
        %v958 = vunpack.c.h.b16 %v407
        %v959 = vunpack.c.l.b16 %v408
        %v960 = vunpack.c.h.b16 %v408
        %v961 = vunpack.c.l.b16 %v409
        %v962 = vunpack.c.h.b16 %v409
        %v963 = vunpack.c.l.b16 %v410
        %v964 = vunpack.c.h.b16 %v410
        %v965 = vunpack.c.l.b16 %v411
        %v966 = vunpack.c.h.b16 %v411
        %v967 = vunpack.c.l.b16 %v412
        %v968 = vunpack.c.h.b16 %v412
        %v969 = vunpack.c.l.b16 %v413
        %v970 = vunpack.c.h.b16 %v413
        %v971 = vunpack.c.l.b16 %v414
        %v972 = vunpack.c.h.b16 %v414
        %v973 = vunpack.c.l.b16 %v415
        %v974 = vunpack.c.h.b16 %v415
        %v975 = vunpack.c.l.b16 %v416
        %v976 = vunpack.c.h.b16 %v416
        %v977 = vunpack.c.l.b16 %v417
        %v978 = vunpack.c.h.b16 %v417
        %v979 = vunpack.c.l.b16 %v418
        %v980 = vunpack.c.h.b16 %v418
        %v981 = vunpack.c.l.b16 %v419
        %v982 = vunpack.c.h.b16 %v419
        %v983 = vunpack.c.l.b16 %v420
        %v984 = vunpack.c.h.b16 %v420
        %v985 = vunpack.c.l.b16 %v421
        %v986 = vunpack.c.h.b16 %v421
        %v987 = vunpack.c.l.b16 %v422
        %v988 = vunpack.c.h.b16 %v422
        %v989 = vunpack.c.l.b16 %v423
        %v990 = vunpack.c.h.b16 %v423
        %v991 = vunpack.c.l.b16 %v424
        %v992 = vunpack.c.h.b16 %v424
        %v993 = vunpack.c.l.b16 %v425
        %v994 = vunpack.c.h.b16 %v425
        %v995 = vunpack.c.l.b16 %v426
        %v996 = vunpack.c.h.b16 %v426
        %v997 = vunpack.c.l.b16 %v427
        %v998 = vunpack.c.h.b16 %v427
        %v999 = vunpack.c.l.b16 %v428
        %v1000 = vunpack.c.h.b16 %v428
        %v1001 = vunpack.c.l.b16 %v429
        %v1002 = vunpack.c.h.b16 %v429
        %v1003 = vunpack.c.l.b16 %v430
        %v1004 = vunpack.c.h.b16 %v430
        %v1005 = vunpack.c.l.b16 %v431
        %v1006 = vunpack.c.h.b16 %v431
        %v1007 = vunpack.c.l.b16 %v432
        %v1008 = vunpack.c.h.b16 %v432
        %v1009 = vunpack.c.l.b16 %v433
        %v1010 = vunpack.c.h.b16 %v433
        %v1011 = vunpack.c.l.b16 %v434
        %v1012 = vunpack.c.h.b16 %v434
        %v1013 = vunpack.c.l.b16 %v435
        %v1014 = vunpack.c.h.b16 %v435
        %v1015 = vunpack.c.l.b16 %v436
        %v1016 = vunpack.c.h.b16 %v436
        %v1017 = vunpack.c.l.b16 %v437
        %v1018 = vunpack.c.h.b16 %v437
        %v1019 = vunpack.c.l.b16 %v438
        %v1020 = vunpack.c.h.b16 %v438
        %v1021 = vunpack.c.l.b16 %v439
        %v1022 = vunpack.c.h.b16 %v439
        %v1023 = vunpack.c.l.b16 %v440
        %v1024 = vunpack.c.h.b16 %v440
        %v1025 = vunpack.c.l.b16 %v441
        %v1026 = vunpack.c.h.b16 %v441
        %v1027 = vunpack.c.l.b16 %v442
        %v1028 = vunpack.c.h.b16 %v442
        %v1029 = vunpack.c.l.b16 %v443
        %v1030 = vunpack.c.h.b16 %v443
        %v1031 = vunpack.c.l.b16 %v444
        %v1032 = vunpack.c.h.b16 %v444
        %v1033 = vunpack.c.l.b16 %v445
        %v1034 = vunpack.c.h.b16 %v445
        %v1035 = vunpack.c.l.b16 %v446
        %v1036 = vunpack.c.h.b16 %v446
        %v1037 = vunpack.c.l.b16 %v447
        %v1038 = vunpack.c.h.b16 %v447
        %v1039 = vunpack.c.l.b16 %v448
        %v1040 = vunpack.c.h.b16 %v448
        %v1041 = vunpack.c.l.b16 %v449
        %v1042 = vunpack.c.h.b16 %v449
        %v1043 = vunpack.c.l.b16 %v450
        %v1044 = vunpack.c.h.b16 %v450
        %v1045 = vunpack.c.l.b16 %v451
        %v1046 = vunpack.c.h.b16 %v451
        %v1047 = vunpack.c.l.b16 %v452
        %v1048 = vunpack.c.h.b16 %v452
        %v1049 = vunpack.c.l.b16 %v453
        %v1050 = vunpack.c.h.b16 %v453
        %v1051 = vunpack.c.l.b16 %v454
        %v1052 = vunpack.c.h.b16 %v454
        %v1053 = vunpack.c.l.b16 %v455
        %v1054 = vunpack.c.h.b16 %v455
        %v1055 = vunpack.c.l.b16 %v456
        %v1056 = vunpack.c.h.b16 %v456
        %v1057 = vunpack.c.l.b16 %v457
        %v1058 = vunpack.c.h.b16 %v457
        %v1059 = vunpack.c.l.b16 %v458
        %v1060 = vunpack.c.h.b16 %v458
        %v1061 = vunpack.c.l.b16 %v459
        %v1062 = vunpack.c.h.b16 %v459
        %v1063 = vunpack.c.l.b16 %v460
        %v1064 = vunpack.c.h.b16 %v460
        %v1065 = vunpack.c.l.b16 %v461
        %v1066 = vunpack.c.h.b16 %v461
        %v1067 = vunpack.c.l.b16 %v462
        %v1068 = vunpack.c.h.b16 %v462
        %v1069 = vunpack.c.l.b16 %v463
        %v1070 = vunpack.c.h.b16 %v463
        %v1071 = vunpack.c.l.b16 %v464
        %v1072 = vunpack.c.h.b16 %v464
        %v1073 = vunpack.c.l.b16 %v465
        %v1074 = vunpack.c.h.b16 %v465
        %v1075 = vunpack.c.l.b16 %v466
        %v1076 = vunpack.c.h.b16 %v466
        %v1077 = vunpack.c.l.b16 %v467
        %v1078 = vunpack.c.h.b16 %v467
        %v1079 = vunpack.c.l.b16 %v468
        %v1080 = vunpack.c.h.b16 %v468
        %v1081 = vunpack.c.l.b16 %v469
        %v1082 = vunpack.c.h.b16 %v469
        %v1083 = vunpack.c.l.b16 %v470
        %v1084 = vunpack.c.h.b16 %v470
        %v1085 = vunpack.c.l.b16 %v471
        %v1086 = vunpack.c.h.b16 %v471
        %v1087 = vunpack.c.l.b16 %v472
        %v1088 = vunpack.c.h.b16 %v472
        %v1089 = vunpack.c.l.b16 %v473
        %v1090 = vunpack.c.h.b16 %v473
        %v1091 = vunpack.c.l.b16 %v474
        %v1092 = vunpack.c.h.b16 %v474
        %v1093 = vunpack.c.l.b16 %v475
        %v1094 = vunpack.c.h.b16 %v475
        %v1095 = vunpack.c.l.b16 %v476
        %v1096 = vunpack.c.h.b16 %v476
        %v1097 = vunpack.c.l.b16 %v477
        %v1098 = vunpack.c.h.b16 %v477
        %v1099 = vunpack.c.l.b16 %v478
        %v1100 = vunpack.c.h.b16 %v478
        %v1101 = vunpack.c.l.b16 %v479
        %v1102 = vunpack.c.h.b16 %v479
        %v1103 = vunpack.c.l.b16 %v480
        %v1104 = vunpack.c.h.b16 %v480
        %v1105 = vunpack.c.l.b16 %v481
        %v1106 = vunpack.c.h.b16 %v481
        %v1107 = vunpack.c.l.b16 %v482
        %v1108 = vunpack.c.h.b16 %v482
        %v1109 = vunpack.c.l.b16 %v483
        %v1110 = vunpack.c.h.b16 %v483
        %v1111 = vunpack.c.l.b16 %v484
        %v1112 = vunpack.c.h.b16 %v484
        %v1113 = vunpack.c.l.b16 %v485
        %v1114 = vunpack.c.h.b16 %v485
        %v1115 = vunpack.c.l.b16 %v486
        %v1116 = vunpack.c.h.b16 %v486
        %v1117 = vunpack.c.l.b16 %v487
        %v1118 = vunpack.c.h.b16 %v487
        %v1119 = vunpack.c.l.b16 %v488
        %v1120 = vunpack.c.h.b16 %v488
        %v1121 = vunpack.c.l.b16 %v489
        %v1122 = vunpack.c.h.b16 %v489
        %v1123 = vunpack.c.l.b16 %v490
        %v1124 = vunpack.c.h.b16 %v490
        %v1125 = vunpack.c.l.b16 %v491
        %v1126 = vunpack.c.h.b16 %v491
        %v1127 = vunpack.c.l.b16 %v492
        %v1128 = vunpack.c.h.b16 %v492
        %v1129 = vunpack.c.l.b16 %v493
        %v1130 = vunpack.c.h.b16 %v493
        %v1131 = vunpack.c.l.b16 %v494
        %v1132 = vunpack.c.h.b16 %v494
        %v1133 = vunpack.c.l.b16 %v495
        %v1134 = vunpack.c.h.b16 %v495
        %v1135 = vunpack.c.l.b16 %v496
        %v1136 = vunpack.c.h.b16 %v496
        %v1137 = vunpack.c.l.b16 %v497
        %v1138 = vunpack.c.h.b16 %v497
        %v1139 = vunpack.c.l.b16 %v498
        %v1140 = vunpack.c.h.b16 %v498
        %v1141 = vunpack.c.l.b16 %v499
        %v1142 = vunpack.c.h.b16 %v499
        %v1143 = vunpack.c.l.b16 %v500
        %v1144 = vunpack.c.h.b16 %v500
        %v1145 = vunpack.c.l.b16 %v501
        %v1146 = vunpack.c.h.b16 %v501
        %v1147 = vunpack.c.l.b16 %v502
        %v1148 = vunpack.c.h.b16 %v502
        %v1149 = vunpack.c.l.b16 %v503
        %v1150 = vunpack.c.h.b16 %v503
        %v1151 = vunpack.c.l.b16 %v504
        %v1152 = vunpack.c.h.b16 %v504
        %v1153 = vunpack.c.l.b16 %v505
        %v1154 = vunpack.c.h.b16 %v505
        %v1155 = vunpack.c.l.b16 %v506
        %v1156 = vunpack.c.h.b16 %v506
        %v1157 = vunpack.c.l.b16 %v507
        %v1158 = vunpack.c.h.b16 %v507
        %v1159 = vunpack.c.l.b16 %v508
        %v1160 = vunpack.c.h.b16 %v508
        %v1161 = vunpack.c.l.b16 %v509
        %v1162 = vunpack.c.h.b16 %v509
        %v1163 = vunpack.c.l.b16 %v510
        %v1164 = vunpack.c.h.b16 %v510
        %v1165 = vunpack.c.l.b16 %v511
        %v1166 = vunpack.c.h.b16 %v511
        %v1167 = vunpack.c.l.b16 %v512
        %v1168 = vunpack.c.h.b16 %v512
        %v1169 = vunpack.c.l.b16 %v513
        %v1170 = vunpack.c.h.b16 %v513
        %v1171 = vunpack.c.l.b16 %v514
        %v1172 = vunpack.c.h.b16 %v514
        %v1173 = vunpack.c.l.b16 %v515
        %v1174 = vunpack.c.h.b16 %v515
        %v1175 = vunpack.c.l.b16 %v516
        %v1176 = vunpack.c.h.b16 %v516
        %v1177 = vunpack.c.l.b16 %v517
        %v1178 = vunpack.c.h.b16 %v517
        %v1179 = vunpack.c.l.b16 %v518
        %v1180 = vunpack.c.h.b16 %v518
        %v1181 = vunpack.c.l.b16 %v519
        %v1182 = vunpack.c.h.b16 %v519
        %v1183 = vunpack.c.l.b16 %v520
        %v1184 = vunpack.c.h.b16 %v520
        %v1185 = vunpack.c.l.b16 %v521
        %v1186 = vunpack.c.h.b16 %v521
        %v1187 = vunpack.c.l.b16 %v522
        %v1188 = vunpack.c.h.b16 %v522
        %v1189 = vunpack.c.l.b16 %v523
        %v1190 = vunpack.c.h.b16 %v523
        %v1191 = vunpack.c.l.b16 %v524
        %v1192 = vunpack.c.h.b16 %v524
        %v1193 = vunpack.c.l.b16 %v525
        %v1194 = vunpack.c.h.b16 %v525
        %v1195 = vunpack.c.l.b16 %v526
        %v1196 = vunpack.c.h.b16 %v526
        %v1197 = vunpack.c.l.b16 %v527
        %v1198 = vunpack.c.h.b16 %v527
        %v1199 = vunpack.c.l.b16 %v528
        %v1200 = vunpack.c.h.b16 %v528
        %v1201 = vunpack.c.l.b16 %v529
        %v1202 = vunpack.c.h.b16 %v529
        %v1203 = vunpack.c.l.b16 %v530
        %v1204 = vunpack.c.h.b16 %v530
        %v1205 = vunpack.c.l.b16 %v531
        %v1206 = vunpack.c.h.b16 %v531
        %v1207 = vunpack.c.l.b16 %v532
        %v1208 = vunpack.c.h.b16 %v532
        %v1209 = vunpack.c.l.b16 %v533
        %v1210 = vunpack.c.h.b16 %v533
        %v1211 = vunpack.c.l.b16 %v534
        %v1212 = vunpack.c.h.b16 %v534
        %v1213 = vunpack.c.l.b16 %v535
        %v1214 = vunpack.c.h.b16 %v535
        %v1215 = vunpack.c.l.b16 %v536
        %v1216 = vunpack.c.h.b16 %v536
        %v1217 = vunpack.c.l.b16 %v537
        %v1218 = vunpack.c.h.b16 %v537
        %v1219 = vunpack.c.l.b16 %v538
        %v1220 = vunpack.c.h.b16 %v538
        %v1221 = vunpack.c.l.b16 %v539
        %v1222 = vunpack.c.h.b16 %v539
        %v1223 = vunpack.c.l.b16 %v540
        %v1224 = vunpack.c.h.b16 %v540
        %v1225 = vunpack.c.l.b16 %v541
        %v1226 = vunpack.c.h.b16 %v541
        %v1227 = vunpack.c.l.b16 %v542
        %v1228 = vunpack.c.h.b16 %v542
        %v1229 = vunpack.c.l.b16 %v543
        %v1230 = vunpack.c.h.b16 %v543
        %v1231 = vunpack.c.l.b16 %v544
        %v1232 = vunpack.c.h.b16 %v544
        %v1233 = vunpack.c.l.b16 %v545
        %v1234 = vunpack.c.h.b16 %v545
        %v1235 = vunpack.c.l.b16 %v546
        %v1236 = vunpack.c.h.b16 %v546
        %v1237 = vunpack.c.l.b16 %v547
        %v1238 = vunpack.c.h.b16 %v547
        %v1239 = vunpack.c.l.b16 %v548
        %v1240 = vunpack.c.h.b16 %v548
        %v1241 = vunpack.c.l.b16 %v549
        %v1242 = vunpack.c.h.b16 %v549
        %v1243 = vunpack.c.l.b16 %v550
        %v1244 = vunpack.c.h.b16 %v550
        %v1245 = vunpack.c.l.b16 %v551
        %v1246 = vunpack.c.h.b16 %v551
        %v1247 = vunpack.c.l.b16 %v552
        %v1248 = vunpack.c.h.b16 %v552
        %v1249 = vunpack.c.l.b16 %v553
        %v1250 = vunpack.c.h.b16 %v553
        %v1251 = vunpack.c.l.b16 %v554
        %v1252 = vunpack.c.h.b16 %v554
        %v1253 = vunpack.c.l.b16 %v555
        %v1254 = vunpack.c.h.b16 %v555
        %v1255 = vunpack.c.l.b16 %v556
        %v1256 = vunpack.c.h.b16 %v556
        %v1257 = vunpack.c.l.b16 %v557
        %v1258 = vunpack.c.h.b16 %v557
        %v1259 = vunpack.c.l.b16 %v558
        %v1260 = vunpack.c.h.b16 %v558
        %v1261 = vunpack.c.l.b16 %v559
        %v1262 = vunpack.c.h.b16 %v559
        %v1263 = vunpack.c.l.b16 %v560
        %v1264 = vunpack.c.h.b16 %v560
        %v1265 = vunpack.c.l.b16 %v561
        %v1266 = vunpack.c.h.b16 %v561
        %v1267 = vunpack.c.l.b16 %v562
        %v1268 = vunpack.c.h.b16 %v562
        %v1269 = vunpack.c.l.b16 %v563
        %v1270 = vunpack.c.h.b16 %v563
        %v1271 = vunpack.c.l.b16 %v564
        %v1272 = vunpack.c.h.b16 %v564
        %v1273 = vunpack.c.l.b16 %v565
        %v1274 = vunpack.c.h.b16 %v565
        %v1275 = vunpack.c.l.b16 %v566
        %v1276 = vunpack.c.h.b16 %v566
        %v1277 = vunpack.c.l.b16 %v567
        %v1278 = vunpack.c.h.b16 %v567
        %v1279 = vunpack.c.l.b16 %v568
        %v1280 = vunpack.c.h.b16 %v568
        %v1281 = vunpack.c.l.b16 %v569
        %v1282 = vunpack.c.h.b16 %v569
        %v1283 = vunpack.c.l.b16 %v570
        %v1284 = vunpack.c.h.b16 %v570
        %v1285 = vunpack.c.l.b16 %v571
        %v1286 = vunpack.c.h.b16 %v571
        %v1287 = vunpack.c.l.b16 %v572
        %v1288 = vunpack.c.h.b16 %v572
        %v1289 = vunpack.c.l.b16 %v573
        %v1290 = vunpack.c.h.b16 %v573
        %v1291 = vunpack.c.l.b16 %v574
        %v1292 = vunpack.c.h.b16 %v574
        %v1293 = vpack.c.b16 %v913, %v909
        %v1294 = vpack.c.b16 %v914, %v910
        %v1295 = vpack.c.b16 %v915, %v911
        %v1296 = vpack.c.b16 %v916, %v912
        %v1297 = vpack.c.b16 %v921, %v917
        %v1298 = vpack.c.b16 %v922, %v918
        %v1299 = vpack.c.b16 %v923, %v919
        %v1300 = vpack.c.b16 %v924, %v920
        %v1301 = vpack.c.b16 %v929, %v925
        %v1302 = vpack.c.b16 %v930, %v926
        %v1303 = vpack.c.b16 %v931, %v927
        %v1304 = vpack.c.b16 %v932, %v928
        %v1305 = vpack.c.b16 %v937, %v933
        %v1306 = vpack.c.b16 %v938, %v934
        %v1307 = vpack.c.b16 %v939, %v935
        %v1308 = vpack.c.b16 %v940, %v936
        %v1309 = vpack.c.b16 %v945, %v941
        %v1310 = vpack.c.b16 %v946, %v942
        %v1311 = vpack.c.b16 %v947, %v943
        %v1312 = vpack.c.b16 %v948, %v944
        %v1313 = vpack.c.b16 %v953, %v949
        %v1314 = vpack.c.b16 %v954, %v950
        %v1315 = vpack.c.b16 %v955, %v951
        %v1316 = vpack.c.b16 %v956, %v952
        %v1317 = vpack.c.b16 %v961, %v957
        %v1318 = vpack.c.b16 %v962, %v958
        %v1319 = vpack.c.b16 %v963, %v959
        %v1320 = vpack.c.b16 %v964, %v960
        %v1321 = vpack.c.b16 %v969, %v965
        %v1322 = vpack.c.b16 %v970, %v966
        %v1323 = vpack.c.b16 %v971, %v967
        %v1324 = vpack.c.b16 %v972, %v968
        %v1325 = vpack.c.b16 %v977, %v973
        %v1326 = vpack.c.b16 %v978, %v974
        %v1327 = vpack.c.b16 %v979, %v975
        %v1328 = vpack.c.b16 %v980, %v976
        %v1329 = vpack.c.b16 %v985, %v981
        %v1330 = vpack.c.b16 %v986, %v982
        %v1331 = vpack.c.b16 %v987, %v983
        %v1332 = vpack.c.b16 %v988, %v984
        %v1333 = vpack.c.b16 %v993, %v989
        %v1334 = vpack.c.b16 %v994, %v990
        %v1335 = vpack.c.b16 %v995, %v991
        %v1336 = vpack.c.b16 %v996, %v992
        %v1337 = vpack.c.b16 %v1001, %v997
        %v1338 = vpack.c.b16 %v1002, %v998
        %v1339 = vpack.c.b16 %v1003, %v999
        %v1340 = vpack.c.b16 %v1004, %v1000
        %v1341 = vpack.c.b16 %v1009, %v1005
        %v1342 = vpack.c.b16 %v1010, %v1006
        %v1343 = vpack.c.b16 %v1011, %v1007
        %v1344 = vpack.c.b16 %v1012, %v1008
        %v1345 = vpack.c.b16 %v1017, %v1013
        %v1346 = vpack.c.b16 %v1018, %v1014
        %v1347 = vpack.c.b16 %v1019, %v1015
        %v1348 = vpack.c.b16 %v1020, %v1016
        %v1349 = vpack.c.b16 %v1025, %v1021
        %v1350 = vpack.c.b16 %v1026, %v1022
        %v1351 = vpack.c.b16 %v1027, %v1023
        %v1352 = vpack.c.b16 %v1028, %v1024
        %v1353 = vpack.c.b16 %v1033, %v1029
        %v1354 = vpack.c.b16 %v1034, %v1030
        %v1355 = vpack.c.b16 %v1035, %v1031
        %v1356 = vpack.c.b16 %v1036, %v1032
        %v1357 = vpack.c.b16 %v1041, %v1037
        %v1358 = vpack.c.b16 %v1042, %v1038
        %v1359 = vpack.c.b16 %v1043, %v1039
        %v1360 = vpack.c.b16 %v1044, %v1040
        %v1361 = vpack.c.b16 %v1049, %v1045
        %v1362 = vpack.c.b16 %v1050, %v1046
        %v1363 = vpack.c.b16 %v1051, %v1047
        %v1364 = vpack.c.b16 %v1052, %v1048
        %v1365 = vpack.c.b16 %v1057, %v1053
        %v1366 = vpack.c.b16 %v1058, %v1054
        %v1367 = vpack.c.b16 %v1059, %v1055
        %v1368 = vpack.c.b16 %v1060, %v1056
        %v1369 = vpack.c.b16 %v1065, %v1061
        %v1370 = vpack.c.b16 %v1066, %v1062
        %v1371 = vpack.c.b16 %v1067, %v1063
        %v1372 = vpack.c.b16 %v1068, %v1064
        %v1373 = vpack.c.b16 %v1073, %v1069
        %v1374 = vpack.c.b16 %v1074, %v1070
        %v1375 = vpack.c.b16 %v1075, %v1071
        %v1376 = vpack.c.b16 %v1076, %v1072
        %v1377 = vpack.c.b16 %v1081, %v1077
        %v1378 = vpack.c.b16 %v1082, %v1078
        %v1379 = vpack.c.b16 %v1083, %v1079
        %v1380 = vpack.c.b16 %v1084, %v1080
        %v1381 = vpack.c.b16 %v1089, %v1085
        %v1382 = vpack.c.b16 %v1090, %v1086
        %v1383 = vpack.c.b16 %v1091, %v1087
        %v1384 = vpack.c.b16 %v1092, %v1088
        %v1385 = vpack.c.b16 %v1097, %v1093
        %v1386 = vpack.c.b16 %v1098, %v1094
        %v1387 = vpack.c.b16 %v1099, %v1095
        %v1388 = vpack.c.b16 %v1100, %v1096
        %v1389 = vpack.c.b16 %v1105, %v1101
        %v1390 = vpack.c.b16 %v1106, %v1102
        %v1391 = vpack.c.b16 %v1107, %v1103
        %v1392 = vpack.c.b16 %v1108, %v1104
        %v1393 = vpack.c.b16 %v1113, %v1109
        %v1394 = vpack.c.b16 %v1114, %v1110
        %v1395 = vpack.c.b16 %v1115, %v1111
        %v1396 = vpack.c.b16 %v1116, %v1112
        %v1397 = vpack.c.b16 %v1121, %v1117
        %v1398 = vpack.c.b16 %v1122, %v1118
        %v1399 = vpack.c.b16 %v1123, %v1119
        %v1400 = vpack.c.b16 %v1124, %v1120
        %v1401 = vpack.c.b16 %v1129, %v1125
        %v1402 = vpack.c.b16 %v1130, %v1126
        %v1403 = vpack.c.b16 %v1131, %v1127
        %v1404 = vpack.c.b16 %v1132, %v1128
        %v1405 = vpack.c.b16 %v1137, %v1133
        %v1406 = vpack.c.b16 %v1138, %v1134
        %v1407 = vpack.c.b16 %v1139, %v1135
        %v1408 = vpack.c.b16 %v1140, %v1136
        %v1409 = vpack.c.b16 %v1145, %v1141
        %v1410 = vpack.c.b16 %v1146, %v1142
        %v1411 = vpack.c.b16 %v1147, %v1143
        %v1412 = vpack.c.b16 %v1148, %v1144
        %v1413 = vpack.c.b16 %v1153, %v1149
        %v1414 = vpack.c.b16 %v1154, %v1150
        %v1415 = vpack.c.b16 %v1155, %v1151
        %v1416 = vpack.c.b16 %v1156, %v1152
        %v1417 = vpack.c.b16 %v1161, %v1157
        %v1418 = vpack.c.b16 %v1162, %v1158
        %v1419 = vpack.c.b16 %v1163, %v1159
        %v1420 = vpack.c.b16 %v1164, %v1160
        %v1421 = vpack.c.b16 %v1169, %v1165
        %v1422 = vpack.c.b16 %v1170, %v1166
        %v1423 = vpack.c.b16 %v1171, %v1167
        %v1424 = vpack.c.b16 %v1172, %v1168
        %v1425 = vpack.c.b16 %v1177, %v1173
        %v1426 = vpack.c.b16 %v1178, %v1174
        %v1427 = vpack.c.b16 %v1179, %v1175
        %v1428 = vpack.c.b16 %v1180, %v1176
        %v1429 = vpack.c.b16 %v1185, %v1181
        %v1430 = vpack.c.b16 %v1186, %v1182
        %v1431 = vpack.c.b16 %v1187, %v1183
        %v1432 = vpack.c.b16 %v1188, %v1184
        %v1433 = vpack.c.b16 %v1193, %v1189
        %v1434 = vpack.c.b16 %v1194, %v1190
        %v1435 = vpack.c.b16 %v1195, %v1191
        %v1436 = vpack.c.b16 %v1196, %v1192
        %v1437 = vpack.c.b16 %v1201, %v1197
        %v1438 = vpack.c.b16 %v1202, %v1198
        %v1439 = vpack.c.b16 %v1203, %v1199
        %v1440 = vpack.c.b16 %v1204, %v1200
        %v1441 = vpack.c.b16 %v1209, %v1205
        %v1442 = vpack.c.b16 %v1210, %v1206
        %v1443 = vpack.c.b16 %v1211, %v1207
        %v1444 = vpack.c.b16 %v1212, %v1208
        %v1445 = vpack.c.b16 %v1217, %v1213
        %v1446 = vpack.c.b16 %v1218, %v1214
        %v1447 = vpack.c.b16 %v1219, %v1215
        %v1448 = vpack.c.b16 %v1220, %v1216
        %v1449 = vpack.c.b16 %v1225, %v1221
        %v1450 = vpack.c.b16 %v1226, %v1222
        %v1451 = vpack.c.b16 %v1227, %v1223
        %v1452 = vpack.c.b16 %v1228, %v1224
        %v1453 = vpack.c.b16 %v1233, %v1229
        %v1454 = vpack.c.b16 %v1234, %v1230
        %v1455 = vpack.c.b16 %v1235, %v1231
        %v1456 = vpack.c.b16 %v1236, %v1232
        %v1457 = vpack.c.b16 %v1241, %v1237
        %v1458 = vpack.c.b16 %v1242, %v1238
        %v1459 = vpack.c.b16 %v1243, %v1239
        %v1460 = vpack.c.b16 %v1244, %v1240
        %v1461 = vpack.c.b16 %v1249, %v1245
        %v1462 = vpack.c.b16 %v1250, %v1246
        %v1463 = vpack.c.b16 %v1251, %v1247
        %v1464 = vpack.c.b16 %v1252, %v1248
        %v1465 = vpack.c.b16 %v1257, %v1253
        %v1466 = vpack.c.b16 %v1258, %v1254
        %v1467 = vpack.c.b16 %v1259, %v1255
        %v1468 = vpack.c.b16 %v1260, %v1256
        %v1469 = vpack.c.b16 %v1265, %v1261
        %v1470 = vpack.c.b16 %v1266, %v1262
        %v1471 = vpack.c.b16 %v1267, %v1263
        %v1472 = vpack.c.b16 %v1268, %v1264
        %v1473 = vpack.c.b16 %v1273, %v1269
        %v1474 = vpack.c.b16 %v1274, %v1270
        %v1475 = vpack.c.b16 %v1275, %v1271
        %v1476 = vpack.c.b16 %v1276, %v1272
        %v1477 = vpack.c.b16 %v1281, %v1277
        %v1478 = vpack.c.b16 %v1282, %v1278
        %v1479 = vpack.c.b16 %v1283, %v1279
        %v1480 = vpack.c.b16 %v1284, %v1280
        %v1481 = vpack.c.b16 %v1289, %v1285
        %v1482 = vpack.c.b16 %v1290, %v1286
        %v1483 = vpack.c.b16 %v1291, %v1287
        %v1484 = vpack.c.b16 %v1292, %v1288
        %1677 = vmatprep.subr.bf16.mxu0 %v1294
        %1678 = vmatpush1.bf16.msra.mxu0 %v1293
        %1679 = vmatprep.subr.bf16.mxu0 %v1298
        %1680 = vmatpush1.bf16.msra.mxu0 %v1297
        %1681 = vmatprep.subr.bf16.mxu0 %v1302
        %1682 = vmatpush1.bf16.msra.mxu0 %v1301
        %1683 = vmatprep.subr.bf16.mxu0 %v1306
        %1684 = vmatpush1.bf16.msra.mxu0 %v1305
        %1685 = vmatprep.subr.bf16.mxu0 %v1310
        %1686 = vmatpush1.bf16.msra.mxu0 %v1309
        %1687 = vmatprep.subr.bf16.mxu0 %v1314
        %1688 = vmatpush1.bf16.msra.mxu0 %v1313
        %1689 = vmatprep.subr.bf16.mxu0 %v1318
        %1690 = vmatpush1.bf16.msra.mxu0 %v1317
        %1691 = vmatprep.subr.bf16.mxu0 %v1322
        %1692 = vmatpush1.bf16.msra.mxu0 %v1321
        %1693 = vmatprep.subr.bf16.mxu0 %v1326
        %1694 = vmatpush1.bf16.msra.mxu0 %v1325
        %1695 = vmatprep.subr.bf16.mxu0 %v1330
        %1696 = vmatpush1.bf16.msra.mxu0 %v1329
        %1697 = vmatprep.subr.bf16.mxu0 %v1334
        %1698 = vmatpush1.bf16.msra.mxu0 %v1333
        %1699 = vmatprep.subr.bf16.mxu0 %v1338
        %1700 = vmatpush1.bf16.msra.mxu0 %v1337
        %1701 = vmatprep.subr.bf16.mxu0 %v1342
        %1702 = vmatpush1.bf16.msra.mxu0 %v1341
        %1703 = vmatprep.subr.bf16.mxu0 %v1346
        %1704 = vmatpush1.bf16.msra.mxu0 %v1345
        %1705 = vmatprep.subr.bf16.mxu0 %v1350
        %1706 = vmatpush1.bf16.msra.mxu0 %v1349
        %1707 = vmatprep.subr.bf16.mxu0 %v1354
        %1708 = vmatpush1.bf16.msra.mxu0 %v1353
        %1709 = vmatprep.mubr.bf16.mxu0 %v670
        %1710 = vmatmul.mubr.bf16.gmra.mrb[0].mxu0 %v669
        %v1711 = vpop.f32.mrb[0].mxu0
        %v1712 = vadd.f32 %v580, %v1711
        %v1713 = vpop.f32.mrb[0].mxu0
        %v1714 = vadd.f32 %v584, %v1713
        %v1715 = vpop.f32.mrb[0].mxu0
        %v1716 = vadd.f32 %v580, %v1715
        %v1717 = vpop.f32.mrb[0].mxu0
        %v1718 = vadd.f32 %v584, %v1717
        %1719 = vmatprep.mubr.bf16.mxu0 %v676
        %1720 = vmatmul.mubr.bf16.gmra.mrb[0].mxu0 %v675
        %v1721 = vpop.f32.mrb[0].mxu0
        %v1722 = vadd.f32 %v580, %v1721
        %v1723 = vpop.f32.mrb[0].mxu0
        %v1724 = vadd.f32 %v584, %v1723
        %v1725 = vpop.f32.mrb[0].mxu0
        %v1726 = vadd.f32 %v580, %v1725
        %v1727 = vpop.f32.mrb[0].mxu0
        %v1728 = vadd.f32 %v584, %v1727
        %1729 = vmatprep.mubr.bf16.mxu0 %v682
        %1730 = vmatmul.mubr.bf16.gmra.mrb[0].mxu0 %v681
        %v1731 = vpop.f32.mrb[0].mxu0
        %v1732 = vadd.f32 %v580, %v1731
        %v1733 = vpop.f32.mrb[0].mxu0
        %v1734 = vadd.f32 %v584, %v1733
        %v1735 = vpop.f32.mrb[0].mxu0
        %v1736 = vadd.f32 %v580, %v1735
        %v1737 = vpop.f32.mrb[0].mxu0
        %v1738 = vadd.f32 %v584, %v1737
        %1739 = vmatprep.mubr.bf16.mxu0 %v688
        %1740 = vmatmul.mubr.bf16.gmra.mrb[0].mxu0 %v687
        %v1741 = vpop.f32.mrb[0].mxu0
        %v1742 = vadd.f32 %v580, %v1741
        %v1743 = vpop.f32.mrb[0].mxu0
        %v1744 = vadd.f32 %v584, %v1743
        %v1745 = vpop.f32.mrb[0].mxu0
        %v1746 = vadd.f32 %v580, %v1745
        %v1747 = vpop.f32.mrb[0].mxu0
        %v1748 = vadd.f32 %v584, %v1747
        %1749 = vdwg.mxu0
        %1750 = vmatprep.subr.bf16.mxu0 %v1358
        %1751 = vmatpush1.bf16.msra.mxu0 %v1357
        %1752 = vmatprep.subr.bf16.mxu0 %v1362
        %1753 = vmatpush1.bf16.msra.mxu0 %v1361
        %1754 = vmatprep.subr.bf16.mxu0 %v1366
        %1755 = vmatpush1.bf16.msra.mxu0 %v1365
        %1756 = vmatprep.subr.bf16.mxu0 %v1370
        %1757 = vmatpush1.bf16.msra.mxu0 %v1369
        %1758 = vmatprep.subr.bf16.mxu0 %v1374
        %1759 = vmatpush1.bf16.msra.mxu0 %v1373
        %1760 = vmatprep.subr.bf16.mxu0 %v1378
        %1761 = vmatpush1.bf16.msra.mxu0 %v1377
        %1762 = vmatprep.subr.bf16.mxu0 %v1382
        %1763 = vmatpush1.bf16.msra.mxu0 %v1381
        %1764 = vmatprep.subr.bf16.mxu0 %v1386
        %1765 = vmatpush1.bf16.msra.mxu0 %v1385
        %1766 = vmatprep.subr.bf16.mxu0 %v1390
        %1767 = vmatpush1.bf16.msra.mxu0 %v1389
        %1768 = vmatprep.subr.bf16.mxu0 %v1394
        %1769 = vmatpush1.bf16.msra.mxu0 %v1393
        %1770 = vmatprep.subr.bf16.mxu0 %v1398
        %1771 = vmatpush1.bf16.msra.mxu0 %v1397
        %1772 = vmatprep.subr.bf16.mxu0 %v1402
        %1773 = vmatpush1.bf16.msra.mxu0 %v1401
        %1774 = vmatprep.subr.bf16.mxu0 %v1406
        %1775 = vmatpush1.bf16.msra.mxu0 %v1405
        %1776 = vmatprep.subr.bf16.mxu0 %v1410
        %1777 = vmatpush1.bf16.msra.mxu0 %v1409
        %1778 = vmatprep.subr.bf16.mxu0 %v1414
        %1779 = vmatpush1.bf16.msra.mxu0 %v1413
        %1780 = vmatprep.subr.bf16.mxu0 %v1418
        %1781 = vmatpush1.bf16.msra.mxu0 %v1417
        %1782 = vmatprep.mubr.bf16.mxu0 %v672
        %1783 = vmatmul.mubr.bf16.gmra.mrb[0].mxu0 %v671
        %v1784 = vpop.f32.mrb[0].mxu0
        %v1785 = vadd.f32 %v1712, %v1784
        %v1786 = vpop.f32.mrb[0].mxu0
        %v1787 = vadd.f32 %v1714, %v1786
        %v1788 = vpop.f32.mrb[0].mxu0
        %v1789 = vadd.f32 %v1716, %v1788
        %v1790 = vpop.f32.mrb[0].mxu0
        %v1791 = vadd.f32 %v1718, %v1790
        %1792 = vmatprep.mubr.bf16.mxu0 %v678
        %1793 = vmatmul.mubr.bf16.gmra.mrb[0].mxu0 %v677
        %v1794 = vpop.f32.mrb[0].mxu0
        %v1795 = vadd.f32 %v1722, %v1794
        %v1796 = vpop.f32.mrb[0].mxu0
        %v1797 = vadd.f32 %v1724, %v1796
        %v1798 = vpop.f32.mrb[0].mxu0
        %v1799 = vadd.f32 %v1726, %v1798
        %v1800 = vpop.f32.mrb[0].mxu0
        %v1801 = vadd.f32 %v1728, %v1800
        %1802 = vmatprep.mubr.bf16.mxu0 %v684
        %1803 = vmatmul.mubr.bf16.gmra.mrb[0].mxu0 %v683
        %v1804 = vpop.f32.mrb[0].mxu0
        %v1805 = vadd.f32 %v1732, %v1804
        %v1806 = vpop.f32.mrb[0].mxu0
        %v1807 = vadd.f32 %v1734, %v1806
        %v1808 = vpop.f32.mrb[0].mxu0
        %v1809 = vadd.f32 %v1736, %v1808
        %v1810 = vpop.f32.mrb[0].mxu0
        %v1811 = vadd.f32 %v1738, %v1810
        %1812 = vmatprep.mubr.bf16.mxu0 %v690
        %1813 = vmatmul.mubr.bf16.gmra.mrb[0].mxu0 %v689
        %v1814 = vpop.f32.mrb[0].mxu0
        %v1815 = vadd.f32 %v1742, %v1814
        %v1816 = vpop.f32.mrb[0].mxu0
        %v1817 = vadd.f32 %v1744, %v1816
        %v1818 = vpop.f32.mrb[0].mxu0
        %v1819 = vadd.f32 %v1746, %v1818
        %v1820 = vpop.f32.mrb[0].mxu0
        %v1821 = vadd.f32 %v1748, %v1820
        %1822 = vdwg.mxu0
        %1823 = vmatprep.subr.bf16.mxu0 %v1422
        %1824 = vmatpush1.bf16.msra.mxu0 %v1421
        %1825 = vmatprep.subr.bf16.mxu0 %v1426
        %1826 = vmatpush1.bf16.msra.mxu0 %v1425
        %1827 = vmatprep.subr.bf16.mxu0 %v1430
        %1828 = vmatpush1.bf16.msra.mxu0 %v1429
        %1829 = vmatprep.subr.bf16.mxu0 %v1434
        %1830 = vmatpush1.bf16.msra.mxu0 %v1433
        %1831 = vmatprep.subr.bf16.mxu0 %v1438
        %1832 = vmatpush1.bf16.msra.mxu0 %v1437
        %1833 = vmatprep.subr.bf16.mxu0 %v1442
        %1834 = vmatpush1.bf16.msra.mxu0 %v1441
        %1835 = vmatprep.subr.bf16.mxu0 %v1446
        %1836 = vmatpush1.bf16.msra.mxu0 %v1445
        %1837 = vmatprep.subr.bf16.mxu0 %v1450
        %1838 = vmatpush1.bf16.msra.mxu0 %v1449
        %1839 = vmatprep.subr.bf16.mxu0 %v1454
        %1840 = vmatpush1.bf16.msra.mxu0 %v1453
        %1841 = vmatprep.subr.bf16.mxu0 %v1458
        %1842 = vmatpush1.bf16.msra.mxu0 %v1457
        %1843 = vmatprep.subr.bf16.mxu0 %v1462
        %1844 = vmatpush1.bf16.msra.mxu0 %v1461
        %1845 = vmatprep.subr.bf16.mxu0 %v1466
        %1846 = vmatpush1.bf16.msra.mxu0 %v1465
        %1847 = vmatprep.subr.bf16.mxu0 %v1470
        %1848 = vmatpush1.bf16.msra.mxu0 %v1469
        %1849 = vmatprep.subr.bf16.mxu0 %v1474
        %1850 = vmatpush1.bf16.msra.mxu0 %v1473
        %1851 = vmatprep.subr.bf16.mxu0 %v1478
        %1852 = vmatpush1.bf16.msra.mxu0 %v1477
        %1853 = vmatprep.subr.bf16.mxu0 %v1482
        %1854 = vmatpush1.bf16.msra.mxu0 %v1481
        %1855 = vmatprep.mubr.bf16.mxu0 %v674
        %1856 = vmatmul.mubr.bf16.gmra.mrb[0].mxu0 %v673
        %v1857 = vpop.f32.mrb[0].mxu0
        %v1858 = vadd.f32 %v1785, %v1857
        %v1859 = vpop.f32.mrb[0].mxu0
        %v1860 = vadd.f32 %v1787, %v1859
        %v1861 = vpop.f32.mrb[0].mxu0
        %v1862 = vadd.f32 %v1789, %v1861
        %v1863 = vpop.f32.mrb[0].mxu0
        %v1864 = vadd.f32 %v1791, %v1863
        %1865 = vmatprep.mubr.bf16.mxu0 %v680
        %1866 = vmatmul.mubr.bf16.gmra.mrb[0].mxu0 %v679
        %v1867 = vpop.f32.mrb[0].mxu0
        %v1868 = vadd.f32 %v1795, %v1867
        %v1869 = vpop.f32.mrb[0].mxu0
        %v1870 = vadd.f32 %v1797, %v1869
        %v1871 = vpop.f32.mrb[0].mxu0
        %v1872 = vadd.f32 %v1799, %v1871
        %v1873 = vpop.f32.mrb[0].mxu0
        %v1874 = vadd.f32 %v1801, %v1873
        %1875 = vmatprep.mubr.bf16.mxu0 %v686
        %1876 = vmatmul.mubr.bf16.gmra.mrb[0].mxu0 %v685
        %v1877 = vpop.f32.mrb[0].mxu0
        %v1878 = vadd.f32 %v1805, %v1877
        %v1879 = vpop.f32.mrb[0].mxu0
        %v1880 = vadd.f32 %v1807, %v1879
        %v1881 = vpop.f32.mrb[0].mxu0
        %v1882 = vadd.f32 %v1809, %v1881
        %v1883 = vpop.f32.mrb[0].mxu0
        %v1884 = vadd.f32 %v1811, %v1883
        %1885 = vmatprep.mubr.bf16.mxu0 %v692
        %1886 = vmatmul.mubr.bf16.gmra.mrb[0].mxu0 %v691
        %v1887 = vpop.f32.mrb[0].mxu0
        %v1888 = vadd.f32 %v1815, %v1887
        %v1889 = vpop.f32.mrb[0].mxu0
        %v1890 = vadd.f32 %v1817, %v1889
        %v1891 = vpop.f32.mrb[0].mxu0
        %v1892 = vadd.f32 %v1819, %v1891
        %v1893 = vpop.f32.mrb[0].mxu0
        %v1894 = vadd.f32 %v1821, %v1893
        %1895 = vdwg.mxu0
        %1896 = vmatprep.subr.bf16.mxu0 %v1296
        %1897 = vmatpush1.bf16.msra.mxu0 %v1295
        %1898 = vmatprep.subr.bf16.mxu0 %v1300
        %1899 = vmatpush1.bf16.msra.mxu0 %v1299
        %1900 = vmatprep.subr.bf16.mxu0 %v1304
        %1901 = vmatpush1.bf16.msra.mxu0 %v1303
        %1902 = vmatprep.subr.bf16.mxu0 %v1308
        %1903 = vmatpush1.bf16.msra.mxu0 %v1307
        %1904 = vmatprep.subr.bf16.mxu0 %v1312
        %1905 = vmatpush1.bf16.msra.mxu0 %v1311
        %1906 = vmatprep.subr.bf16.mxu0 %v1316
        %1907 = vmatpush1.bf16.msra.mxu0 %v1315
        %1908 = vmatprep.subr.bf16.mxu0 %v1320
        %1909 = vmatpush1.bf16.msra.mxu0 %v1319
        %1910 = vmatprep.subr.bf16.mxu0 %v1324
        %1911 = vmatpush1.bf16.msra.mxu0 %v1323
        %1912 = vmatprep.subr.bf16.mxu0 %v1328
        %1913 = vmatpush1.bf16.msra.mxu0 %v1327
        %1914 = vmatprep.subr.bf16.mxu0 %v1332
        %1915 = vmatpush1.bf16.msra.mxu0 %v1331
        %1916 = vmatprep.subr.bf16.mxu0 %v1336
        %1917 = vmatpush1.bf16.msra.mxu0 %v1335
        %1918 = vmatprep.subr.bf16.mxu0 %v1340
        %1919 = vmatpush1.bf16.msra.mxu0 %v1339
        %1920 = vmatprep.subr.bf16.mxu0 %v1344
        %1921 = vmatpush1.bf16.msra.mxu0 %v1343
        %1922 = vmatprep.subr.bf16.mxu0 %v1348
        %1923 = vmatpush1.bf16.msra.mxu0 %v1347
        %1924 = vmatprep.subr.bf16.mxu0 %v1352
        %1925 = vmatpush1.bf16.msra.mxu0 %v1351
        %1926 = vmatprep.subr.bf16.mxu0 %v1356
        %1927 = vmatpush1.bf16.msra.mxu0 %v1355
        %1928 = vmatprep.mubr.bf16.mxu0 %v670
        %1929 = vmatmul.mubr.bf16.gmra.mrb[0].mxu0 %v669
        %v1930 = vpop.f32.mrb[0].mxu0
        %v1931 = vadd.f32 %v588, %v1930
        %v1932 = vpop.f32.mrb[0].mxu0
        %v1933 = vadd.f32 %v592, %v1932
        %v1934 = vpop.f32.mrb[0].mxu0
        %v1935 = vadd.f32 %v588, %v1934
        %v1936 = vpop.f32.mrb[0].mxu0
        %v1937 = vadd.f32 %v592, %v1936
        %1938 = vmatprep.mubr.bf16.mxu0 %v676
        %1939 = vmatmul.mubr.bf16.gmra.mrb[0].mxu0 %v675
        %v1940 = vpop.f32.mrb[0].mxu0
        %v1941 = vadd.f32 %v588, %v1940
        %v1942 = vpop.f32.mrb[0].mxu0
        %v1943 = vadd.f32 %v592, %v1942
        %v1944 = vpop.f32.mrb[0].mxu0
        %v1945 = vadd.f32 %v588, %v1944
        %v1946 = vpop.f32.mrb[0].mxu0
        %v1947 = vadd.f32 %v592, %v1946
        %1948 = vmatprep.mubr.bf16.mxu0 %v682
        %1949 = vmatmul.mubr.bf16.gmra.mrb[0].mxu0 %v681
        %v1950 = vpop.f32.mrb[0].mxu0
        %v1951 = vadd.f32 %v588, %v1950
        %v1952 = vpop.f32.mrb[0].mxu0
        %v1953 = vadd.f32 %v592, %v1952
        %v1954 = vpop.f32.mrb[0].mxu0
        %v1955 = vadd.f32 %v588, %v1954
        %v1956 = vpop.f32.mrb[0].mxu0
        %v1957 = vadd.f32 %v592, %v1956
        %1958 = vmatprep.mubr.bf16.mxu0 %v688
        %1959 = vmatmul.mubr.bf16.gmra.mrb[0].mxu0 %v687
        %v1960 = vpop.f32.mrb[0].mxu0
        %v1961 = vadd.f32 %v588, %v1960
        %v1962 = vpop.f32.mrb[0].mxu0
        %v1963 = vadd.f32 %v592, %v1962
        %v1964 = vpop.f32.mrb[0].mxu0
        %v1965 = vadd.f32 %v588, %v1964
        %v1966 = vpop.f32.mrb[0].mxu0
        %v1967 = vadd.f32 %v592, %v1966
        %1968 = vdwg.mxu0
        %1969 = vmatprep.subr.bf16.mxu0 %v1360
        %1970 = vmatpush1.bf16.msra.mxu0 %v1359
        %1971 = vmatprep.subr.bf16.mxu0 %v1364
        %1972 = vmatpush1.bf16.msra.mxu0 %v1363
        %1973 = vmatprep.subr.bf16.mxu0 %v1368
        %1974 = vmatpush1.bf16.msra.mxu0 %v1367
        %1975 = vmatprep.subr.bf16.mxu0 %v1372
        %1976 = vmatpush1.bf16.msra.mxu0 %v1371
        %1977 = vmatprep.subr.bf16.mxu0 %v1376
        %1978 = vmatpush1.bf16.msra.mxu0 %v1375
        %1979 = vmatprep.subr.bf16.mxu0 %v1380
        %1980 = vmatpush1.bf16.msra.mxu0 %v1379
        %1981 = vmatprep.subr.bf16.mxu0 %v1384
        %1982 = vmatpush1.bf16.msra.mxu0 %v1383
        %1983 = vmatprep.subr.bf16.mxu0 %v1388
        %1984 = vmatpush1.bf16.msra.mxu0 %v1387
        %1985 = vmatprep.subr.bf16.mxu0 %v1392
        %1986 = vmatpush1.bf16.msra.mxu0 %v1391
        %1987 = vmatprep.subr.bf16.mxu0 %v1396
        %1988 = vmatpush1.bf16.msra.mxu0 %v1395
        %1989 = vmatprep.subr.bf16.mxu0 %v1400
        %1990 = vmatpush1.bf16.msra.mxu0 %v1399
        %1991 = vmatprep.subr.bf16.mxu0 %v1404
        %1992 = vmatpush1.bf16.msra.mxu0 %v1403
        %1993 = vmatprep.subr.bf16.mxu0 %v1408
        %1994 = vmatpush1.bf16.msra.mxu0 %v1407
        %1995 = vmatprep.subr.bf16.mxu0 %v1412
        %1996 = vmatpush1.bf16.msra.mxu0 %v1411
        %1997 = vmatprep.subr.bf16.mxu0 %v1416
        %1998 = vmatpush1.bf16.msra.mxu0 %v1415
        %1999 = vmatprep.subr.bf16.mxu0 %v1420
        %2000 = vmatpush1.bf16.msra.mxu0 %v1419
        %2001 = vmatprep.mubr.bf16.mxu0 %v672
        %2002 = vmatmul.mubr.bf16.gmra.mrb[0].mxu0 %v671
        %v2003 = vpop.f32.mrb[0].mxu0
        %v2004 = vadd.f32 %v1931, %v2003
        %v2005 = vpop.f32.mrb[0].mxu0
        %v2006 = vadd.f32 %v1933, %v2005
        %v2007 = vpop.f32.mrb[0].mxu0
        %v2008 = vadd.f32 %v1935, %v2007
        %v2009 = vpop.f32.mrb[0].mxu0
        %v2010 = vadd.f32 %v1937, %v2009
        %2011 = vmatprep.mubr.bf16.mxu0 %v678
        %2012 = vmatmul.mubr.bf16.gmra.mrb[0].mxu0 %v677
        %v2013 = vpop.f32.mrb[0].mxu0
        %v2014 = vadd.f32 %v1941, %v2013
        %v2015 = vpop.f32.mrb[0].mxu0
        %v2016 = vadd.f32 %v1943, %v2015
        %v2017 = vpop.f32.mrb[0].mxu0
        %v2018 = vadd.f32 %v1945, %v2017
        %v2019 = vpop.f32.mrb[0].mxu0
        %v2020 = vadd.f32 %v1947, %v2019
        %2021 = vmatprep.mubr.bf16.mxu0 %v684
        %2022 = vmatmul.mubr.bf16.gmra.mrb[0].mxu0 %v683
        %v2023 = vpop.f32.mrb[0].mxu0
        %v2024 = vadd.f32 %v1951, %v2023
        %v2025 = vpop.f32.mrb[0].mxu0
        %v2026 = vadd.f32 %v1953, %v2025
        %v2027 = vpop.f32.mrb[0].mxu0
        %v2028 = vadd.f32 %v1955, %v2027
        %v2029 = vpop.f32.mrb[0].mxu0
        %v2030 = vadd.f32 %v1957, %v2029
        %2031 = vmatprep.mubr.bf16.mxu0 %v690
        %2032 = vmatmul.mubr.bf16.gmra.mrb[0].mxu0 %v689
        %v2033 = vpop.f32.mrb[0].mxu0
        %v2034 = vadd.f32 %v1961, %v2033
        %v2035 = vpop.f32.mrb[0].mxu0
        %v2036 = vadd.f32 %v1963, %v2035
        %v2037 = vpop.f32.mrb[0].mxu0
        %v2038 = vadd.f32 %v1965, %v2037
        %v2039 = vpop.f32.mrb[0].mxu0
        %v2040 = vadd.f32 %v1967, %v2039
        %2041 = vdwg.mxu0
        %2042 = vmatprep.subr.bf16.mxu0 %v1424
        %2043 = vmatpush1.bf16.msra.mxu0 %v1423
        %2044 = vmatprep.subr.bf16.mxu0 %v1428
        %2045 = vmatpush1.bf16.msra.mxu0 %v1427
        %2046 = vmatprep.subr.bf16.mxu0 %v1432
        %2047 = vmatpush1.bf16.msra.mxu0 %v1431
        %2048 = vmatprep.subr.bf16.mxu0 %v1436
        %2049 = vmatpush1.bf16.msra.mxu0 %v1435
        %2050 = vmatprep.subr.bf16.mxu0 %v1440
        %2051 = vmatpush1.bf16.msra.mxu0 %v1439
        %2052 = vmatprep.subr.bf16.mxu0 %v1444
        %2053 = vmatpush1.bf16.msra.mxu0 %v1443
        %2054 = vmatprep.subr.bf16.mxu0 %v1448
        %2055 = vmatpush1.bf16.msra.mxu0 %v1447
        %2056 = vmatprep.subr.bf16.mxu0 %v1452
        %2057 = vmatpush1.bf16.msra.mxu0 %v1451
        %2058 = vmatprep.subr.bf16.mxu0 %v1456
        %2059 = vmatpush1.bf16.msra.mxu0 %v1455
        %2060 = vmatprep.subr.bf16.mxu0 %v1460
        %2061 = vmatpush1.bf16.msra.mxu0 %v1459
        %2062 = vmatprep.subr.bf16.mxu0 %v1464
        %2063 = vmatpush1.bf16.msra.mxu0 %v1463
        %2064 = vmatprep.subr.bf16.mxu0 %v1468
        %2065 = vmatpush1.bf16.msra.mxu0 %v1467
        %2066 = vmatprep.subr.bf16.mxu0 %v1472
        %2067 = vmatpush1.bf16.msra.mxu0 %v1471
        %2068 = vmatprep.subr.bf16.mxu0 %v1476
        %2069 = vmatpush1.bf16.msra.mxu0 %v1475
        %2070 = vmatprep.subr.bf16.mxu0 %v1480
        %2071 = vmatpush1.bf16.msra.mxu0 %v1479
        %2072 = vmatprep.subr.bf16.mxu0 %v1484
        %2073 = vmatpush1.bf16.msra.mxu0 %v1483
        %2074 = vmatprep.mubr.bf16.mxu0 %v674
        %2075 = vmatmul.mubr.bf16.gmra.mrb[0].mxu0 %v673
        %v2076 = vpop.f32.mrb[0].mxu0
        %v2077 = vadd.f32 %v2004, %v2076
        %v2078 = vpop.f32.mrb[0].mxu0
        %v2079 = vadd.f32 %v2006, %v2078
        %v2080 = vpop.f32.mrb[0].mxu0
        %v2081 = vadd.f32 %v2008, %v2080
        %v2082 = vpop.f32.mrb[0].mxu0
        %v2083 = vadd.f32 %v2010, %v2082
        %2084 = vmatprep.mubr.bf16.mxu0 %v680
        %2085 = vmatmul.mubr.bf16.gmra.mrb[0].mxu0 %v679
        %v2086 = vpop.f32.mrb[0].mxu0
        %v2087 = vadd.f32 %v2014, %v2086
        %v2088 = vpop.f32.mrb[0].mxu0
        %v2089 = vadd.f32 %v2016, %v2088
        %v2090 = vpop.f32.mrb[0].mxu0
        %v2091 = vadd.f32 %v2018, %v2090
        %v2092 = vpop.f32.mrb[0].mxu0
        %v2093 = vadd.f32 %v2020, %v2092
        %2094 = vmatprep.mubr.bf16.mxu0 %v686
        %2095 = vmatmul.mubr.bf16.gmra.mrb[0].mxu0 %v685
        %v2096 = vpop.f32.mrb[0].mxu0
        %v2097 = vadd.f32 %v2024, %v2096
        %v2098 = vpop.f32.mrb[0].mxu0
        %v2099 = vadd.f32 %v2026, %v2098
        %v2100 = vpop.f32.mrb[0].mxu0
        %v2101 = vadd.f32 %v2028, %v2100
        %v2102 = vpop.f32.mrb[0].mxu0
        %v2103 = vadd.f32 %v2030, %v2102
        %2104 = vmatprep.mubr.bf16.mxu0 %v692
        %2105 = vmatmul.mubr.bf16.gmra.mrb[0].mxu0 %v691
        %v2106 = vpop.f32.mrb[0].mxu0
        %v2107 = vadd.f32 %v2034, %v2106
        %v2108 = vpop.f32.mrb[0].mxu0
        %v2109 = vadd.f32 %v2036, %v2108
        %v2110 = vpop.f32.mrb[0].mxu0
        %v2111 = vadd.f32 %v2038, %v2110
        %v2112 = vpop.f32.mrb[0].mxu0
        %v2113 = vadd.f32 %v2040, %v2112
        %2114 = vdwg.mxu0
        %v2115 = vtanh.pop %v1858
        %v2116 = vtanh.pop %v1860
        %v2117 = vtanh.pop %v2077
        %v2118 = vtanh.pop %v2079
        %v2119 = vtanh.pop %v1862
        %v2120 = vtanh.pop %v1864
        %v2121 = vtanh.pop %v2081
        %v2122 = vtanh.pop %v2083
        %v2123 = vtanh.pop %v1868
        %v2124 = vtanh.pop %v1870
        %v2125 = vtanh.pop %v2087
        %v2126 = vtanh.pop %v2089
        %v2127 = vtanh.pop %v1872
        %v2128 = vtanh.pop %v1874
        %v2129 = vtanh.pop %v2091
        %v2130 = vtanh.pop %v2093
        %v2131 = vtanh.pop %v1878
        %v2132 = vtanh.pop %v1880
        %v2133 = vtanh.pop %v2097
        %v2134 = vtanh.pop %v2099
        %v2135 = vtanh.pop %v1882
        %v2136 = vtanh.pop %v1884
        %v2137 = vtanh.pop %v2101
        %v2138 = vtanh.pop %v2103
        %v2139 = vtanh.pop %v1888
        %v2140 = vtanh.pop %v1890
        %v2141 = vtanh.pop %v2107
        %v2142 = vtanh.pop %v2109
        %v2143 = vtanh.pop %v1892
        %v2144 = vtanh.pop %v1894
        %v2145 = vtanh.pop %v2111
        %v2146 = vtanh.pop %v2113
        %v2147 = vld [vmem:[%s3] sm:$0xf]
        %v2149 = vlaneseq
        %v2150 = vshrl.u32 %v2149, 7
        %v2151 = vsub.s32 0, %v2150
        %v2152 = vrot.slane %v2147, %v2151
        %v2153 = vlaneseq
        %v2154 = vshrl.u32 %v2153, 7
        %v2155 = vsub.s32 1, %v2154
        %v2156 = vrot.slane %v2147, %v2155
        %v2157 = vlaneseq
        %v2158 = vshrl.u32 %v2157, 7
        %v2159 = vsub.s32 2, %v2158
        %v2160 = vrot.slane %v2147, %v2159
        %v2161 = vlaneseq
        %v2162 = vshrl.u32 %v2161, 7
        %v2163 = vsub.s32 3, %v2162
        %v2164 = vrot.slane %v2147, %v2163
        %v2169 = vmul.f32 %v2115, %v2152
        %v2170 = vmul.f32 %v2116, %v2156
        %v2171 = vmul.f32 %v2117, %v2160
        %v2172 = vmul.f32 %v2118, %v2164
        %v2173 = vmul.f32 %v2119, %v2152
        %v2174 = vmul.f32 %v2120, %v2156
        %v2175 = vmul.f32 %v2121, %v2160
        %v2176 = vmul.f32 %v2122, %v2164
        %v2177 = vmul.f32 %v2123, %v2152
        %v2178 = vmul.f32 %v2124, %v2156
        %v2179 = vmul.f32 %v2125, %v2160
        %v2180 = vmul.f32 %v2126, %v2164
        %v2181 = vmul.f32 %v2127, %v2152
        %v2182 = vmul.f32 %v2128, %v2156
        %v2183 = vmul.f32 %v2129, %v2160
        %v2184 = vmul.f32 %v2130, %v2164
        %v2185 = vmul.f32 %v2131, %v2152
        %v2186 = vmul.f32 %v2132, %v2156
        %v2187 = vmul.f32 %v2133, %v2160
        %v2188 = vmul.f32 %v2134, %v2164
        %v2189 = vmul.f32 %v2135, %v2152
        %v2190 = vmul.f32 %v2136, %v2156
        %v2191 = vmul.f32 %v2137, %v2160
        %v2192 = vmul.f32 %v2138, %v2164
        %v2193 = vmul.f32 %v2139, %v2152
        %v2194 = vmul.f32 %v2140, %v2156
        %v2195 = vmul.f32 %v2141, %v2160
        %v2196 = vmul.f32 %v2142, %v2164
        %v2197 = vmul.f32 %v2143, %v2152
        %v2198 = vmul.f32 %v2144, %v2156
        %v2199 = vmul.f32 %v2145, %v2160
        %v2200 = vmul.f32 %v2146, %v2164
        %v2201 = vadd.f32 %v2169, %v2170
        %v2202 = vadd.f32 %v2201, %v2171
        %v2203 = vadd.f32 %v2202, %v2172
        %2204 = vadd.xlane.f32.xlu0 %v2203
        %v2205 = vpop.xlane.xlu0 %2204
        %v2206 = vadd.f32 %v2173, %v2174
        %v2207 = vadd.f32 %v2206, %v2175
        %v2208 = vadd.f32 %v2207, %v2176
        %2209 = vadd.xlane.f32.xlu0 %v2208
        %v2210 = vpop.xlane.xlu0 %2209
        %v2211 = vadd.f32 %v2177, %v2178
        %v2212 = vadd.f32 %v2211, %v2179
        %v2213 = vadd.f32 %v2212, %v2180
        %2214 = vadd.xlane.f32.xlu0 %v2213
        %v2215 = vpop.xlane.xlu0 %2214
        %v2216 = vadd.f32 %v2181, %v2182
        %v2217 = vadd.f32 %v2216, %v2183
        %v2218 = vadd.f32 %v2217, %v2184
        %2219 = vadd.xlane.f32.xlu0 %v2218
        %v2220 = vpop.xlane.xlu0 %2219
        %v2221 = vadd.f32 %v2185, %v2186
        %v2222 = vadd.f32 %v2221, %v2187
        %v2223 = vadd.f32 %v2222, %v2188
        %2224 = vadd.xlane.f32.xlu0 %v2223
        %v2225 = vpop.xlane.xlu0 %2224
        %v2226 = vadd.f32 %v2189, %v2190
        %v2227 = vadd.f32 %v2226, %v2191
        %v2228 = vadd.f32 %v2227, %v2192
        %2229 = vadd.xlane.f32.xlu0 %v2228
        %v2230 = vpop.xlane.xlu0 %2229
        %v2231 = vadd.f32 %v2193, %v2194
        %v2232 = vadd.f32 %v2231, %v2195
        %v2233 = vadd.f32 %v2232, %v2196
        %2234 = vadd.xlane.f32.xlu0 %v2233
        %v2235 = vpop.xlane.xlu0 %2234
        %v2236 = vadd.f32 %v2197, %v2198
        %v2237 = vadd.f32 %v2236, %v2199
        %v2238 = vadd.f32 %v2237, %v2200
        %2239 = vadd.xlane.f32.xlu0 %v2238
        %v2240 = vpop.xlane.xlu0 %2239
        %s2241 = sld [smem:[#allocation5]]
        %v2242 = vstv %s2241
        %v2243 = vadd.f32 %v2205, %v2242
        %v2244 = vadd.f32 %v2210, %v2242
        %v2245 = vadd.f32 %v2215, %v2242
        %v2246 = vadd.f32 %v2220, %v2242
        %v2247 = vadd.f32 %v2225, %v2242
        %v2248 = vadd.f32 %v2230, %v2242
        %v2249 = vadd.f32 %v2235, %v2242
        %v2250 = vadd.f32 %v2240, %v2242
        %v2251 = vld [vmem:[#allocation2] sm:$0xff]
        %v2253 = vcombine.high %v2251, %v2251
        %v2255 = vunpack.c.l.s4 1966171168
        %v2256 = vunpack.c.0.s8 %v2255
        %v2257 = vlaneseq
        %v2258 = vshrl.u32 %v2257, 7
        %v2259 = vsub.s32 %v2256, %v2258
        %v2260 = vrot.slane %v2251, %v2259
        %v2262 = vunpack.c.l.s4 1966171168
        %v2263 = vunpack.c.0.s8 %v2262
        %v2264 = vlaneseq
        %v2265 = vshrl.u32 %v2264, 7
        %v2266 = vsub.s32 %v2263, %v2265
        %v2267 = vrot.slane %v2253, %v2266
        %v2268 = vcombine.high %v2260, %v2260
        %v2269 = vcombine.high %v2267, %v2267
        %v2271 = vunpack.c.l.s4 1966171168
        %v2272 = vunpack.c.0.s8 %v2271
        %v2273 = vlaneseq
        %v2274 = vshrl.u32 %v2273, 7
        %v2275 = vsub.s32 %v2272, %v2274
        %v2276 = vrot.slane %v2260, %v2275
        %v2278 = vunpack.c.l.s4 1966171168
        %v2279 = vunpack.c.0.s8 %v2278
        %v2280 = vlaneseq
        %v2281 = vshrl.u32 %v2280, 7
        %v2282 = vsub.s32 %v2279, %v2281
        %v2283 = vrot.slane %v2267, %v2282
        %v2285 = vunpack.c.l.s4 1966171168
        %v2286 = vunpack.c.0.s8 %v2285
        %v2287 = vlaneseq
        %v2288 = vshrl.u32 %v2287, 7
        %v2289 = vsub.s32 %v2286, %v2288
        %v2290 = vrot.slane %v2268, %v2289
        %v2292 = vunpack.c.l.s4 1966171168
        %v2293 = vunpack.c.0.s8 %v2292
        %v2294 = vlaneseq
        %v2295 = vshrl.u32 %v2294, 7
        %v2296 = vsub.s32 %v2293, %v2295
        %v2297 = vrot.slane %v2269, %v2296
        %v2298 = vcombine.high %v2276, %v2276
        %v2299 = vcombine.high %v2283, %v2283
        %v2300 = vcombine.high %v2290, %v2290
        %v2301 = vcombine.high %v2297, %v2297
        %v2310 = vld [vmem:[#allocation3] sm:$0xff]
        %v2312 = vcombine.high %v2310, %v2310
        %v2314 = vunpack.c.l.s4 1966171168
        %v2315 = vunpack.c.0.s8 %v2314
        %v2316 = vlaneseq
        %v2317 = vshrl.u32 %v2316, 7
        %v2318 = vsub.s32 %v2315, %v2317
        %v2319 = vrot.slane %v2310, %v2318
        %v2321 = vunpack.c.l.s4 1966171168
        %v2322 = vunpack.c.0.s8 %v2321
        %v2323 = vlaneseq
        %v2324 = vshrl.u32 %v2323, 7
        %v2325 = vsub.s32 %v2322, %v2324
        %v2326 = vrot.slane %v2312, %v2325
        %v2327 = vcombine.high %v2319, %v2319
        %v2328 = vcombine.high %v2326, %v2326
        %v2330 = vunpack.c.l.s4 1966171168
        %v2331 = vunpack.c.0.s8 %v2330
        %v2332 = vlaneseq
        %v2333 = vshrl.u32 %v2332, 7
        %v2334 = vsub.s32 %v2331, %v2333
        %v2335 = vrot.slane %v2319, %v2334
        %v2337 = vunpack.c.l.s4 1966171168
        %v2338 = vunpack.c.0.s8 %v2337
        %v2339 = vlaneseq
        %v2340 = vshrl.u32 %v2339, 7
        %v2341 = vsub.s32 %v2338, %v2340
        %v2342 = vrot.slane %v2326, %v2341
        %v2344 = vunpack.c.l.s4 1966171168
        %v2345 = vunpack.c.0.s8 %v2344
        %v2346 = vlaneseq
        %v2347 = vshrl.u32 %v2346, 7
        %v2348 = vsub.s32 %v2345, %v2347
        %v2349 = vrot.slane %v2327, %v2348
        %v2351 = vunpack.c.l.s4 1966171168
        %v2352 = vunpack.c.0.s8 %v2351
        %v2353 = vlaneseq
        %v2354 = vshrl.u32 %v2353, 7
        %v2355 = vsub.s32 %v2352, %v2354
        %v2356 = vrot.slane %v2328, %v2355
        %v2357 = vcombine.high %v2335, %v2335
        %v2358 = vcombine.high %v2342, %v2342
        %v2359 = vcombine.high %v2349, %v2349
        %v2360 = vcombine.high %v2356, %v2356
        %v2369 = vrot.slane %v2243, 4
        %v2370 = vmax.f32 %v2243, %v2369
        %v2371 = vrot.slane %v2370, 2
        %v2372 = vmax.f32 %v2370, %v2371
        %v2373 = vrot.slane %v2372, 1
        %v2374 = vmax.f32 %v2372, %v2373
        %v2375 = vrot.slane %v2244, 4
        %v2376 = vmax.f32 %v2244, %v2375
        %v2377 = vrot.slane %v2376, 2
        %v2378 = vmax.f32 %v2376, %v2377
        %v2379 = vrot.slane %v2378, 1
        %v2380 = vmax.f32 %v2378, %v2379
        %v2381 = vrot.slane %v2245, 4
        %v2382 = vmax.f32 %v2245, %v2381
        %v2383 = vrot.slane %v2382, 2
        %v2384 = vmax.f32 %v2382, %v2383
        %v2385 = vrot.slane %v2384, 1
        %v2386 = vmax.f32 %v2384, %v2385
        %v2387 = vrot.slane %v2246, 4
        %v2388 = vmax.f32 %v2246, %v2387
        %v2389 = vrot.slane %v2388, 2
        %v2390 = vmax.f32 %v2388, %v2389
        %v2391 = vrot.slane %v2390, 1
        %v2392 = vmax.f32 %v2390, %v2391
        %v2393 = vrot.slane %v2247, 4
        %v2394 = vmax.f32 %v2247, %v2393
        %v2395 = vrot.slane %v2394, 2
        %v2396 = vmax.f32 %v2394, %v2395
        %v2397 = vrot.slane %v2396, 1
        %v2398 = vmax.f32 %v2396, %v2397
        %v2399 = vrot.slane %v2248, 4
        %v2400 = vmax.f32 %v2248, %v2399
        %v2401 = vrot.slane %v2400, 2
        %v2402 = vmax.f32 %v2400, %v2401
        %v2403 = vrot.slane %v2402, 1
        %v2404 = vmax.f32 %v2402, %v2403
        %v2405 = vrot.slane %v2249, 4
        %v2406 = vmax.f32 %v2249, %v2405
        %v2407 = vrot.slane %v2406, 2
        %v2408 = vmax.f32 %v2406, %v2407
        %v2409 = vrot.slane %v2408, 1
        %v2410 = vmax.f32 %v2408, %v2409
        %v2411 = vrot.slane %v2250, 4
        %v2412 = vmax.f32 %v2250, %v2411
        %v2413 = vrot.slane %v2412, 2
        %v2414 = vmax.f32 %v2412, %v2413
        %v2415 = vrot.slane %v2414, 1
        %v2416 = vmax.f32 %v2414, %v2415
        %v2417 = vmax.f32 %v2276, %v2374
        %v2418 = vmax.f32 %v2290, %v2380
        %v2419 = vmax.f32 %v2298, %v2386
        %v2420 = vmax.f32 %v2300, %v2392
        %v2421 = vmax.f32 %v2283, %v2398
        %v2422 = vmax.f32 %v2297, %v2404
        %v2423 = vmax.f32 %v2299, %v2410
        %v2424 = vmax.f32 %v2301, %v2416
        %v2425 = vsub.f32 %v2276, %v2417
        %v2426 = vsub.f32 %v2290, %v2418
        %v2427 = vsub.f32 %v2298, %v2419
        %v2428 = vsub.f32 %v2300, %v2420
        %v2429 = vsub.f32 %v2283, %v2421
        %v2430 = vsub.f32 %v2297, %v2422
        %v2431 = vsub.f32 %v2299, %v2423
        %v2432 = vsub.f32 %v2301, %v2424
        %v2433 = vmul.f32 %v2425, 1.442695
        %v2434 = vpow.pop %v2433
        %v2435 = vmul.f32 %v2426, 1.442695
        %v2436 = vpow.pop %v2435
        %v2437 = vmul.f32 %v2427, 1.442695
        %v2438 = vpow.pop %v2437
        %v2439 = vmul.f32 %v2428, 1.442695
        %v2440 = vpow.pop %v2439
        %v2441 = vmul.f32 %v2429, 1.442695
        %v2442 = vpow.pop %v2441
        %v2443 = vmul.f32 %v2430, 1.442695
        %v2444 = vpow.pop %v2443
        %v2445 = vmul.f32 %v2431, 1.442695
        %v2446 = vpow.pop %v2445
        %v2447 = vmul.f32 %v2432, 1.442695
        %v2448 = vpow.pop %v2447
        %v2457 = vlaneseq
        %v2458 = vshrl.u32 %v2457, 7
        %v2459 = vsub.s32 0, %v2458
        %v2460 = vrot.slane %v2417, %v2459
        %v2461 = vlaneseq
        %v2462 = vshrl.u32 %v2461, 7
        %v2463 = vsub.s32 0, %v2462
        %v2464 = vrot.slane %v2418, %v2463
        %v2465 = vlaneseq
        %v2466 = vshrl.u32 %v2465, 7
        %v2467 = vsub.s32 0, %v2466
        %v2468 = vrot.slane %v2419, %v2467
        %v2469 = vlaneseq
        %v2470 = vshrl.u32 %v2469, 7
        %v2471 = vsub.s32 0, %v2470
        %v2472 = vrot.slane %v2420, %v2471
        %v2473 = vlaneseq
        %v2474 = vshrl.u32 %v2473, 7
        %v2475 = vsub.s32 0, %v2474
        %v2476 = vrot.slane %v2421, %v2475
        %v2477 = vlaneseq
        %v2478 = vshrl.u32 %v2477, 7
        %v2479 = vsub.s32 0, %v2478
        %v2480 = vrot.slane %v2422, %v2479
        %v2481 = vlaneseq
        %v2482 = vshrl.u32 %v2481, 7
        %v2483 = vsub.s32 0, %v2482
        %v2484 = vrot.slane %v2423, %v2483
        %v2485 = vlaneseq
        %v2486 = vshrl.u32 %v2485, 7
        %v2487 = vsub.s32 0, %v2486
        %v2488 = vrot.slane %v2424, %v2487
        %v2497 = vsub.f32 %v2243, %v2460
        %v2498 = vsub.f32 %v2244, %v2464
        %v2499 = vsub.f32 %v2245, %v2468
        %v2500 = vsub.f32 %v2246, %v2472
        %v2501 = vsub.f32 %v2247, %v2476
        %v2502 = vsub.f32 %v2248, %v2480
        %v2503 = vsub.f32 %v2249, %v2484
        %v2504 = vsub.f32 %v2250, %v2488
        %v2505 = vmul.f32 %v2497, 1.442695
        %v2506 = vpow.pop %v2505
        %v2507 = vmul.f32 %v2498, 1.442695
        %v2508 = vpow.pop %v2507
        %v2509 = vmul.f32 %v2499, 1.442695
        %v2510 = vpow.pop %v2509
        %v2511 = vmul.f32 %v2500, 1.442695
        %v2512 = vpow.pop %v2511
        %v2513 = vmul.f32 %v2501, 1.442695
        %v2514 = vpow.pop %v2513
        %v2515 = vmul.f32 %v2502, 1.442695
        %v2516 = vpow.pop %v2515
        %v2517 = vmul.f32 %v2503, 1.442695
        %v2518 = vpow.pop %v2517
        %v2519 = vmul.f32 %v2504, 1.442695
        %v2520 = vpow.pop %v2519
        %v2521 = vmul.f32 %v2434, %v2335
        %v2522 = vmul.f32 %v2436, %v2349
        %v2523 = vmul.f32 %v2438, %v2357
        %v2524 = vmul.f32 %v2440, %v2359
        %v2525 = vmul.f32 %v2442, %v2342
        %v2526 = vmul.f32 %v2444, %v2356
        %v2527 = vmul.f32 %v2446, %v2358
        %v2528 = vmul.f32 %v2448, %v2360
        %vm2529 = vcmask 7168
        %v2530 = vsel %vm2529, %v2506, 0.0
        %v2531 = vrot.slane %v2530, 4
        %v2532 = vadd.f32 %v2530, %v2531
        %v2533 = vrot.slane %v2532, 2
        %v2534 = vadd.f32 %v2532, %v2533
        %v2535 = vrot.slane %v2534, 1
        %v2536 = vadd.f32 %v2534, %v2535
        %v2537 = vsel %vm2529, %v2508, 0.0
        %v2538 = vrot.slane %v2537, 4
        %v2539 = vadd.f32 %v2537, %v2538
        %v2540 = vrot.slane %v2539, 2
        %v2541 = vadd.f32 %v2539, %v2540
        %v2542 = vrot.slane %v2541, 1
        %v2543 = vadd.f32 %v2541, %v2542
        %v2544 = vsel %vm2529, %v2510, 0.0
        %v2545 = vrot.slane %v2544, 4
        %v2546 = vadd.f32 %v2544, %v2545
        %v2547 = vrot.slane %v2546, 2
        %v2548 = vadd.f32 %v2546, %v2547
        %v2549 = vrot.slane %v2548, 1
        %v2550 = vadd.f32 %v2548, %v2549
        %v2551 = vsel %vm2529, %v2512, 0.0
        %v2552 = vrot.slane %v2551, 4
        %v2553 = vadd.f32 %v2551, %v2552
        %v2554 = vrot.slane %v2553, 2
        %v2555 = vadd.f32 %v2553, %v2554
        %v2556 = vrot.slane %v2555, 1
        %v2557 = vadd.f32 %v2555, %v2556
        %v2558 = vsel %vm2529, %v2514, 0.0
        %v2559 = vrot.slane %v2558, 4
        %v2560 = vadd.f32 %v2558, %v2559
        %v2561 = vrot.slane %v2560, 2
        %v2562 = vadd.f32 %v2560, %v2561
        %v2563 = vrot.slane %v2562, 1
        %v2564 = vadd.f32 %v2562, %v2563
        %v2565 = vsel %vm2529, %v2516, 0.0
        %v2566 = vrot.slane %v2565, 4
        %v2567 = vadd.f32 %v2565, %v2566
        %v2568 = vrot.slane %v2567, 2
        %v2569 = vadd.f32 %v2567, %v2568
        %v2570 = vrot.slane %v2569, 1
        %v2571 = vadd.f32 %v2569, %v2570
        %v2572 = vsel %vm2529, %v2518, 0.0
        %v2573 = vrot.slane %v2572, 4
        %v2574 = vadd.f32 %v2572, %v2573
        %v2575 = vrot.slane %v2574, 2
        %v2576 = vadd.f32 %v2574, %v2575
        %v2577 = vrot.slane %v2576, 1
        %v2578 = vadd.f32 %v2576, %v2577
        %v2579 = vsel %vm2529, %v2520, 0.0
        %v2580 = vrot.slane %v2579, 4
        %v2581 = vadd.f32 %v2579, %v2580
        %v2582 = vrot.slane %v2581, 2
        %v2583 = vadd.f32 %v2581, %v2582
        %v2584 = vrot.slane %v2583, 1
        %v2585 = vadd.f32 %v2583, %v2584
        %v2586 = vadd.f32 %v2521, %v2536
        %v2587 = vadd.f32 %v2522, %v2543
        %v2588 = vadd.f32 %v2523, %v2550
        %v2589 = vadd.f32 %v2524, %v2557
        %v2590 = vadd.f32 %v2525, %v2564
        %v2591 = vadd.f32 %v2526, %v2571
        %v2592 = vadd.f32 %v2527, %v2578
        %v2593 = vadd.f32 %v2528, %v2585
        %v2594 = vunpack.c.l.bf16 %v359
        %v2595 = vunpack.c.h.bf16 %v359
        %v2596 = vunpack.c.l.bf16 %v360
        %v2597 = vunpack.c.h.bf16 %v360
        %v2598 = vunpack.c.l.bf16 %v361
        %v2599 = vunpack.c.h.bf16 %v361
        %v2600 = vunpack.c.l.bf16 %v362
        %v2601 = vunpack.c.h.bf16 %v362
        %v2602 = vunpack.c.l.bf16 %v363
        %v2603 = vunpack.c.h.bf16 %v363
        %v2604 = vunpack.c.l.bf16 %v364
        %v2605 = vunpack.c.h.bf16 %v364
        %v2606 = vunpack.c.l.bf16 %v365
        %v2607 = vunpack.c.h.bf16 %v365
        %v2608 = vunpack.c.l.bf16 %v366
        %v2609 = vunpack.c.h.bf16 %v366
        %v2610 = vunpack.c.l.bf16 %v367
        %v2611 = vunpack.c.h.bf16 %v367
        %v2612 = vunpack.c.l.bf16 %v368
        %v2613 = vunpack.c.h.bf16 %v368
        %v2614 = vunpack.c.l.bf16 %v369
        %v2615 = vunpack.c.h.bf16 %v369
        %v2616 = vunpack.c.l.bf16 %v370
        %v2617 = vunpack.c.h.bf16 %v370
        %v2618 = vunpack.c.l.bf16 %v371
        %v2619 = vunpack.c.h.bf16 %v371
        %v2620 = vunpack.c.l.bf16 %v372
        %v2621 = vunpack.c.h.bf16 %v372
        %v2622 = vunpack.c.l.bf16 %v373
        %v2623 = vunpack.c.h.bf16 %v373
        %v2624 = vunpack.c.l.bf16 %v374
        %v2625 = vunpack.c.h.bf16 %v374
        %v2626 = vunpack.c.l.bf16 %v375
        %v2627 = vunpack.c.h.bf16 %v375
        %v2628 = vunpack.c.l.bf16 %v376
        %v2629 = vunpack.c.h.bf16 %v376
        %v2630 = vunpack.c.l.bf16 %v377
        %v2631 = vunpack.c.h.bf16 %v377
        %v2632 = vunpack.c.l.bf16 %v378
        %v2633 = vunpack.c.h.bf16 %v378
        %v2634 = vunpack.c.l.bf16 %v379
        %v2635 = vunpack.c.h.bf16 %v379
        %v2636 = vunpack.c.l.bf16 %v380
        %v2637 = vunpack.c.h.bf16 %v380
        %v2638 = vunpack.c.l.bf16 %v381
        %v2639 = vunpack.c.h.bf16 %v381
        %v2640 = vunpack.c.l.bf16 %v382
        %v2641 = vunpack.c.h.bf16 %v382
        %2643 = vset.pattern.permute.xlu0 0
        %2644 = vperm.xlu0 %2643, %v2506
        %v2645 = vpop.permute.xlu0 %2644
        %2648 = vset.pattern.permute.xlu0 0
        %2649 = vperm.xlu0 %2648, %v2508
        %v2650 = vpop.permute.xlu0 %2649
        %2653 = vset.pattern.permute.xlu0 0
        %2654 = vperm.xlu0 %2653, %v2510
        %v2655 = vpop.permute.xlu0 %2654
        %2658 = vset.pattern.permute.xlu0 0
        %2659 = vperm.xlu0 %2658, %v2512
        %v2660 = vpop.permute.xlu0 %2659
        %2663 = vset.pattern.permute.xlu0 0
        %2664 = vperm.xlu0 %2663, %v2514
        %v2665 = vpop.permute.xlu0 %2664
        %2668 = vset.pattern.permute.xlu0 0
        %2669 = vperm.xlu0 %2668, %v2516
        %v2670 = vpop.permute.xlu0 %2669
        %2673 = vset.pattern.permute.xlu0 0
        %2674 = vperm.xlu0 %2673, %v2518
        %v2675 = vpop.permute.xlu0 %2674
        %2678 = vset.pattern.permute.xlu0 0
        %2679 = vperm.xlu0 %2678, %v2520
        %v2680 = vpop.permute.xlu0 %2679
        %v2682 = vmul.f32 %v2645, %v2594
        %v2683 = vmul.f32 %v2645, %v2595
        %v2684 = vmul.f32 %v2645, %v2596
        %v2685 = vmul.f32 %v2645, %v2597
        %v2686 = vmul.f32 %v2645, %v2598
        %v2687 = vmul.f32 %v2645, %v2599
        %v2688 = vmul.f32 %v2650, %v2600
        %v2689 = vmul.f32 %v2650, %v2601
        %v2690 = vmul.f32 %v2650, %v2602
        %v2691 = vmul.f32 %v2650, %v2603
        %v2692 = vmul.f32 %v2650, %v2604
        %v2693 = vmul.f32 %v2650, %v2605
        %v2694 = vmul.f32 %v2655, %v2606
        %v2695 = vmul.f32 %v2655, %v2607
        %v2696 = vmul.f32 %v2655, %v2608
        %v2697 = vmul.f32 %v2655, %v2609
        %v2698 = vmul.f32 %v2655, %v2610
        %v2699 = vmul.f32 %v2655, %v2611
        %v2700 = vmul.f32 %v2660, %v2612
        %v2701 = vmul.f32 %v2660, %v2613
        %v2702 = vmul.f32 %v2660, %v2614
        %v2703 = vmul.f32 %v2660, %v2615
        %v2704 = vmul.f32 %v2660, %v2616
        %v2705 = vmul.f32 %v2660, %v2617
        %v2706 = vmul.f32 %v2665, %v2618
        %v2707 = vmul.f32 %v2665, %v2619
        %v2708 = vmul.f32 %v2665, %v2620
        %v2709 = vmul.f32 %v2665, %v2621
        %v2710 = vmul.f32 %v2665, %v2622
        %v2711 = vmul.f32 %v2665, %v2623
        %v2712 = vmul.f32 %v2670, %v2624
        %v2713 = vmul.f32 %v2670, %v2625
        %v2714 = vmul.f32 %v2670, %v2626
        %v2715 = vmul.f32 %v2670, %v2627
        %v2716 = vmul.f32 %v2670, %v2628
        %v2717 = vmul.f32 %v2670, %v2629
        %v2718 = vmul.f32 %v2675, %v2630
        %v2719 = vmul.f32 %v2675, %v2631
        %v2720 = vmul.f32 %v2675, %v2632
        %v2721 = vmul.f32 %v2675, %v2633
        %v2722 = vmul.f32 %v2675, %v2634
        %v2723 = vmul.f32 %v2675, %v2635
        %v2724 = vmul.f32 %v2680, %v2636
        %v2725 = vmul.f32 %v2680, %v2637
        %v2726 = vmul.f32 %v2680, %v2638
        %v2727 = vmul.f32 %v2680, %v2639
        %v2728 = vmul.f32 %v2680, %v2640
        %v2729 = vmul.f32 %v2680, %v2641
        %v2730 = vrot.slane %v2682, 4
        %v2731 = vadd.f32 %v2682, %v2730
        %v2732 = vrot.slane %v2731, 2
        %v2733 = vadd.f32 %v2731, %v2732
        %v2734 = vrot.slane %v2733, 1
        %v2735 = vadd.f32 %v2733, %v2734
        %v2736 = vrot.slane %v2683, 4
        %v2737 = vadd.f32 %v2683, %v2736
        %v2738 = vrot.slane %v2737, 2
        %v2739 = vadd.f32 %v2737, %v2738
        %v2740 = vrot.slane %v2739, 1
        %v2741 = vadd.f32 %v2739, %v2740
        %v2742 = vrot.slane %v2684, 4
        %v2743 = vadd.f32 %v2684, %v2742
        %v2744 = vrot.slane %v2743, 2
        %v2745 = vadd.f32 %v2743, %v2744
        %v2746 = vrot.slane %v2745, 1
        %v2747 = vadd.f32 %v2745, %v2746
        %v2748 = vrot.slane %v2685, 4
        %v2749 = vadd.f32 %v2685, %v2748
        %v2750 = vrot.slane %v2749, 2
        %v2751 = vadd.f32 %v2749, %v2750
        %v2752 = vrot.slane %v2751, 1
        %v2753 = vadd.f32 %v2751, %v2752
        %v2754 = vrot.slane %v2686, 4
        %v2755 = vadd.f32 %v2686, %v2754
        %v2756 = vrot.slane %v2755, 2
        %v2757 = vadd.f32 %v2755, %v2756
        %v2758 = vrot.slane %v2757, 1
        %v2759 = vadd.f32 %v2757, %v2758
        %v2760 = vrot.slane %v2687, 4
        %v2761 = vadd.f32 %v2687, %v2760
        %v2762 = vrot.slane %v2761, 2
        %v2763 = vadd.f32 %v2761, %v2762
        %v2764 = vrot.slane %v2763, 1
        %v2765 = vadd.f32 %v2763, %v2764
        %v2766 = vrot.slane %v2688, 4
        %v2767 = vadd.f32 %v2688, %v2766
        %v2768 = vrot.slane %v2767, 2
        %v2769 = vadd.f32 %v2767, %v2768
        %v2770 = vrot.slane %v2769, 1
        %v2771 = vadd.f32 %v2769, %v2770
        %v2772 = vrot.slane %v2689, 4
        %v2773 = vadd.f32 %v2689, %v2772
        %v2774 = vrot.slane %v2773, 2
        %v2775 = vadd.f32 %v2773, %v2774
        %v2776 = vrot.slane %v2775, 1
        %v2777 = vadd.f32 %v2775, %v2776
        %v2778 = vrot.slane %v2690, 4
        %v2779 = vadd.f32 %v2690, %v2778
        %v2780 = vrot.slane %v2779, 2
        %v2781 = vadd.f32 %v2779, %v2780
        %v2782 = vrot.slane %v2781, 1
        %v2783 = vadd.f32 %v2781, %v2782
        %v2784 = vrot.slane %v2691, 4
        %v2785 = vadd.f32 %v2691, %v2784
        %v2786 = vrot.slane %v2785, 2
        %v2787 = vadd.f32 %v2785, %v2786
        %v2788 = vrot.slane %v2787, 1
        %v2789 = vadd.f32 %v2787, %v2788
        %v2790 = vrot.slane %v2692, 4
        %v2791 = vadd.f32 %v2692, %v2790
        %v2792 = vrot.slane %v2791, 2
        %v2793 = vadd.f32 %v2791, %v2792
        %v2794 = vrot.slane %v2793, 1
        %v2795 = vadd.f32 %v2793, %v2794
        %v2796 = vrot.slane %v2693, 4
        %v2797 = vadd.f32 %v2693, %v2796
        %v2798 = vrot.slane %v2797, 2
        %v2799 = vadd.f32 %v2797, %v2798
        %v2800 = vrot.slane %v2799, 1
        %v2801 = vadd.f32 %v2799, %v2800
        %v2802 = vrot.slane %v2694, 4
        %v2803 = vadd.f32 %v2694, %v2802
        %v2804 = vrot.slane %v2803, 2
        %v2805 = vadd.f32 %v2803, %v2804
        %v2806 = vrot.slane %v2805, 1
        %v2807 = vadd.f32 %v2805, %v2806
        %v2808 = vrot.slane %v2695, 4
        %v2809 = vadd.f32 %v2695, %v2808
        %v2810 = vrot.slane %v2809, 2
        %v2811 = vadd.f32 %v2809, %v2810
        %v2812 = vrot.slane %v2811, 1
        %v2813 = vadd.f32 %v2811, %v2812
        %v2814 = vrot.slane %v2696, 4
        %v2815 = vadd.f32 %v2696, %v2814
        %v2816 = vrot.slane %v2815, 2
        %v2817 = vadd.f32 %v2815, %v2816
        %v2818 = vrot.slane %v2817, 1
        %v2819 = vadd.f32 %v2817, %v2818
        %v2820 = vrot.slane %v2697, 4
        %v2821 = vadd.f32 %v2697, %v2820
        %v2822 = vrot.slane %v2821, 2
        %v2823 = vadd.f32 %v2821, %v2822
        %v2824 = vrot.slane %v2823, 1
        %v2825 = vadd.f32 %v2823, %v2824
        %v2826 = vrot.slane %v2698, 4
        %v2827 = vadd.f32 %v2698, %v2826
        %v2828 = vrot.slane %v2827, 2
        %v2829 = vadd.f32 %v2827, %v2828
        %v2830 = vrot.slane %v2829, 1
        %v2831 = vadd.f32 %v2829, %v2830
        %v2832 = vrot.slane %v2699, 4
        %v2833 = vadd.f32 %v2699, %v2832
        %v2834 = vrot.slane %v2833, 2
        %v2835 = vadd.f32 %v2833, %v2834
        %v2836 = vrot.slane %v2835, 1
        %v2837 = vadd.f32 %v2835, %v2836
        %v2838 = vrot.slane %v2700, 4
        %v2839 = vadd.f32 %v2700, %v2838
        %v2840 = vrot.slane %v2839, 2
        %v2841 = vadd.f32 %v2839, %v2840
        %v2842 = vrot.slane %v2841, 1
        %v2843 = vadd.f32 %v2841, %v2842
        %v2844 = vrot.slane %v2701, 4
        %v2845 = vadd.f32 %v2701, %v2844
        %v2846 = vrot.slane %v2845, 2
        %v2847 = vadd.f32 %v2845, %v2846
        %v2848 = vrot.slane %v2847, 1
        %v2849 = vadd.f32 %v2847, %v2848
        %v2850 = vrot.slane %v2702, 4
        %v2851 = vadd.f32 %v2702, %v2850
        %v2852 = vrot.slane %v2851, 2
        %v2853 = vadd.f32 %v2851, %v2852
        %v2854 = vrot.slane %v2853, 1
        %v2855 = vadd.f32 %v2853, %v2854
        %v2856 = vrot.slane %v2703, 4
        %v2857 = vadd.f32 %v2703, %v2856
        %v2858 = vrot.slane %v2857, 2
        %v2859 = vadd.f32 %v2857, %v2858
        %v2860 = vrot.slane %v2859, 1
        %v2861 = vadd.f32 %v2859, %v2860
        %v2862 = vrot.slane %v2704, 4
        %v2863 = vadd.f32 %v2704, %v2862
        %v2864 = vrot.slane %v2863, 2
        %v2865 = vadd.f32 %v2863, %v2864
        %v2866 = vrot.slane %v2865, 1
        %v2867 = vadd.f32 %v2865, %v2866
        %v2868 = vrot.slane %v2705, 4
        %v2869 = vadd.f32 %v2705, %v2868
        %v2870 = vrot.slane %v2869, 2
        %v2871 = vadd.f32 %v2869, %v2870
        %v2872 = vrot.slane %v2871, 1
        %v2873 = vadd.f32 %v2871, %v2872
        %v2874 = vrot.slane %v2706, 4
        %v2875 = vadd.f32 %v2706, %v2874
        %v2876 = vrot.slane %v2875, 2
        %v2877 = vadd.f32 %v2875, %v2876
        %v2878 = vrot.slane %v2877, 1
        %v2879 = vadd.f32 %v2877, %v2878
        %v2880 = vrot.slane %v2707, 4
        %v2881 = vadd.f32 %v2707, %v2880
        %v2882 = vrot.slane %v2881, 2
        %v2883 = vadd.f32 %v2881, %v2882
        %v2884 = vrot.slane %v2883, 1
        %v2885 = vadd.f32 %v2883, %v2884
        %v2886 = vrot.slane %v2708, 4
        %v2887 = vadd.f32 %v2708, %v2886
        %v2888 = vrot.slane %v2887, 2
        %v2889 = vadd.f32 %v2887, %v2888
        %v2890 = vrot.slane %v2889, 1
        %v2891 = vadd.f32 %v2889, %v2890
        %v2892 = vrot.slane %v2709, 4
        %v2893 = vadd.f32 %v2709, %v2892
        %v2894 = vrot.slane %v2893, 2
        %v2895 = vadd.f32 %v2893, %v2894
        %v2896 = vrot.slane %v2895, 1
        %v2897 = vadd.f32 %v2895, %v2896
        %v2898 = vrot.slane %v2710, 4
        %v2899 = vadd.f32 %v2710, %v2898
        %v2900 = vrot.slane %v2899, 2
        %v2901 = vadd.f32 %v2899, %v2900
        %v2902 = vrot.slane %v2901, 1
        %v2903 = vadd.f32 %v2901, %v2902
        %v2904 = vrot.slane %v2711, 4
        %v2905 = vadd.f32 %v2711, %v2904
        %v2906 = vrot.slane %v2905, 2
        %v2907 = vadd.f32 %v2905, %v2906
        %v2908 = vrot.slane %v2907, 1
        %v2909 = vadd.f32 %v2907, %v2908
        %v2910 = vrot.slane %v2712, 4
        %v2911 = vadd.f32 %v2712, %v2910
        %v2912 = vrot.slane %v2911, 2
        %v2913 = vadd.f32 %v2911, %v2912
        %v2914 = vrot.slane %v2913, 1
        %v2915 = vadd.f32 %v2913, %v2914
        %v2916 = vrot.slane %v2713, 4
        %v2917 = vadd.f32 %v2713, %v2916
        %v2918 = vrot.slane %v2917, 2
        %v2919 = vadd.f32 %v2917, %v2918
        %v2920 = vrot.slane %v2919, 1
        %v2921 = vadd.f32 %v2919, %v2920
        %v2922 = vrot.slane %v2714, 4
        %v2923 = vadd.f32 %v2714, %v2922
        %v2924 = vrot.slane %v2923, 2
        %v2925 = vadd.f32 %v2923, %v2924
        %v2926 = vrot.slane %v2925, 1
        %v2927 = vadd.f32 %v2925, %v2926
        %v2928 = vrot.slane %v2715, 4
        %v2929 = vadd.f32 %v2715, %v2928
        %v2930 = vrot.slane %v2929, 2
        %v2931 = vadd.f32 %v2929, %v2930
        %v2932 = vrot.slane %v2931, 1
        %v2933 = vadd.f32 %v2931, %v2932
        %v2934 = vrot.slane %v2716, 4
        %v2935 = vadd.f32 %v2716, %v2934
        %v2936 = vrot.slane %v2935, 2
        %v2937 = vadd.f32 %v2935, %v2936
        %v2938 = vrot.slane %v2937, 1
        %v2939 = vadd.f32 %v2937, %v2938
        %v2940 = vrot.slane %v2717, 4
        %v2941 = vadd.f32 %v2717, %v2940
        %v2942 = vrot.slane %v2941, 2
        %v2943 = vadd.f32 %v2941, %v2942
        %v2944 = vrot.slane %v2943, 1
        %v2945 = vadd.f32 %v2943, %v2944
        %v2946 = vrot.slane %v2718, 4
        %v2947 = vadd.f32 %v2718, %v2946
        %v2948 = vrot.slane %v2947, 2
        %v2949 = vadd.f32 %v2947, %v2948
        %v2950 = vrot.slane %v2949, 1
        %v2951 = vadd.f32 %v2949, %v2950
        %v2952 = vrot.slane %v2719, 4
        %v2953 = vadd.f32 %v2719, %v2952
        %v2954 = vrot.slane %v2953, 2
        %v2955 = vadd.f32 %v2953, %v2954
        %v2956 = vrot.slane %v2955, 1
        %v2957 = vadd.f32 %v2955, %v2956
        %v2958 = vrot.slane %v2720, 4
        %v2959 = vadd.f32 %v2720, %v2958
        %v2960 = vrot.slane %v2959, 2
        %v2961 = vadd.f32 %v2959, %v2960
        %v2962 = vrot.slane %v2961, 1
        %v2963 = vadd.f32 %v2961, %v2962
        %v2964 = vrot.slane %v2721, 4
        %v2965 = vadd.f32 %v2721, %v2964
        %v2966 = vrot.slane %v2965, 2
        %v2967 = vadd.f32 %v2965, %v2966
        %v2968 = vrot.slane %v2967, 1
        %v2969 = vadd.f32 %v2967, %v2968
        %v2970 = vrot.slane %v2722, 4
        %v2971 = vadd.f32 %v2722, %v2970
        %v2972 = vrot.slane %v2971, 2
        %v2973 = vadd.f32 %v2971, %v2972
        %v2974 = vrot.slane %v2973, 1
        %v2975 = vadd.f32 %v2973, %v2974
        %v2976 = vrot.slane %v2723, 4
        %v2977 = vadd.f32 %v2723, %v2976
        %v2978 = vrot.slane %v2977, 2
        %v2979 = vadd.f32 %v2977, %v2978
        %v2980 = vrot.slane %v2979, 1
        %v2981 = vadd.f32 %v2979, %v2980
        %v2982 = vrot.slane %v2724, 4
        %v2983 = vadd.f32 %v2724, %v2982
        %v2984 = vrot.slane %v2983, 2
        %v2985 = vadd.f32 %v2983, %v2984
        %v2986 = vrot.slane %v2985, 1
        %v2987 = vadd.f32 %v2985, %v2986
        %v2988 = vrot.slane %v2725, 4
        %v2989 = vadd.f32 %v2725, %v2988
        %v2990 = vrot.slane %v2989, 2
        %v2991 = vadd.f32 %v2989, %v2990
        %v2992 = vrot.slane %v2991, 1
        %v2993 = vadd.f32 %v2991, %v2992
        %v2994 = vrot.slane %v2726, 4
        %v2995 = vadd.f32 %v2726, %v2994
        %v2996 = vrot.slane %v2995, 2
        %v2997 = vadd.f32 %v2995, %v2996
        %v2998 = vrot.slane %v2997, 1
        %v2999 = vadd.f32 %v2997, %v2998
        %v3000 = vrot.slane %v2727, 4
        %v3001 = vadd.f32 %v2727, %v3000
        %v3002 = vrot.slane %v3001, 2
        %v3003 = vadd.f32 %v3001, %v3002
        %v3004 = vrot.slane %v3003, 1
        %v3005 = vadd.f32 %v3003, %v3004
        %v3006 = vrot.slane %v2728, 4
        %v3007 = vadd.f32 %v2728, %v3006
        %v3008 = vrot.slane %v3007, 2
        %v3009 = vadd.f32 %v3007, %v3008
        %v3010 = vrot.slane %v3009, 1
        %v3011 = vadd.f32 %v3009, %v3010
        %v3012 = vrot.slane %v2729, 4
        %v3013 = vadd.f32 %v2729, %v3012
        %v3014 = vrot.slane %v3013, 2
        %v3015 = vadd.f32 %v3013, %v3014
        %v3016 = vrot.slane %v3015, 1
        %v3017 = vadd.f32 %v3015, %v3016
        %v3018 = vld [vmem:[#allocation4] sm:$0xff]
        %v3019 = vld [vmem:[#allocation4 + $0x8] sm:$0xff]
        %v3020 = vld [vmem:[#allocation4 + $0x10] sm:$0xff]
        %v3021 = vld [vmem:[#allocation4 + $0x18] sm:$0xff]
        %v3022 = vld [vmem:[#allocation4 + $0x20] sm:$0xff]
        %v3023 = vld [vmem:[#allocation4 + $0x28] sm:$0xff]
        %3025 = vset.pattern.permute.xlu0 0
        %3026 = vperm.xlu0 %3025, %v2434
        %v3027 = vpop.permute.xlu0 %3026
        %v3029 = vlaneseq
        %v3030 = vshrl.u32 %v3029, 7
        %v3031 = vsub.s32 0, %v3030
        %v3032 = vrot.slane %v3027, %v3031
        %3034 = vset.pattern.permute.xlu0 0
        %3035 = vperm.xlu0 %3034, %v2436
        %v3036 = vpop.permute.xlu0 %3035
        %v3038 = vlaneseq
        %v3039 = vshrl.u32 %v3038, 7
        %v3040 = vsub.s32 0, %v3039
        %v3041 = vrot.slane %v3036, %v3040
        %3043 = vset.pattern.permute.xlu0 0
        %3044 = vperm.xlu0 %3043, %v2438
        %v3045 = vpop.permute.xlu0 %3044
        %v3047 = vlaneseq
        %v3048 = vshrl.u32 %v3047, 7
        %v3049 = vsub.s32 0, %v3048
        %v3050 = vrot.slane %v3045, %v3049
        %3052 = vset.pattern.permute.xlu0 0
        %3053 = vperm.xlu0 %3052, %v2440
        %v3054 = vpop.permute.xlu0 %3053
        %v3056 = vlaneseq
        %v3057 = vshrl.u32 %v3056, 7
        %v3058 = vsub.s32 0, %v3057
        %v3059 = vrot.slane %v3054, %v3058
        %3061 = vset.pattern.permute.xlu0 0
        %3062 = vperm.xlu0 %3061, %v2442
        %v3063 = vpop.permute.xlu0 %3062
        %v3065 = vlaneseq
        %v3066 = vshrl.u32 %v3065, 7
        %v3067 = vsub.s32 0, %v3066
        %v3068 = vrot.slane %v3063, %v3067
        %3070 = vset.pattern.permute.xlu0 0
        %3071 = vperm.xlu0 %3070, %v2444
        %v3072 = vpop.permute.xlu0 %3071
        %v3074 = vlaneseq
        %v3075 = vshrl.u32 %v3074, 7
        %v3076 = vsub.s32 0, %v3075
        %v3077 = vrot.slane %v3072, %v3076
        %3079 = vset.pattern.permute.xlu0 0
        %3080 = vperm.xlu0 %3079, %v2446
        %v3081 = vpop.permute.xlu0 %3080
        %v3083 = vlaneseq
        %v3084 = vshrl.u32 %v3083, 7
        %v3085 = vsub.s32 0, %v3084
        %v3086 = vrot.slane %v3081, %v3085
        %3088 = vset.pattern.permute.xlu0 0
        %3089 = vperm.xlu0 %3088, %v2448
        %v3090 = vpop.permute.xlu0 %3089
        %v3092 = vlaneseq
        %v3093 = vshrl.u32 %v3092, 7
        %v3094 = vsub.s32 0, %v3093
        %v3095 = vrot.slane %v3090, %v3094
        %v3102 = vcombine.low %v3018, %v3019
        %v3103 = vcombine.high %v3018, %v3019
        %v3104 = vcombine.low %v3020, %v3021
        %v3105 = vcombine.high %v3020, %v3021
        %v3106 = vcombine.low %v3022, %v3023
        %v3107 = vcombine.high %v3022, %v3023
        %v3109 = vunpack.c.l.s4 1966171168
        %v3110 = vunpack.c.0.s8 %v3109
        %v3111 = vlaneseq
        %v3112 = vshrl.u32 %v3111, 7
        %v3113 = vsub.s32 %v3110, %v3112
        %v3114 = vrot.slane %v3102, %v3113
        %v3116 = vunpack.c.l.s4 1966171168
        %v3117 = vunpack.c.0.s8 %v3116
        %v3118 = vlaneseq
        %v3119 = vshrl.u32 %v3118, 7
        %v3120 = vsub.s32 %v3117, %v3119
        %v3121 = vrot.slane %v3103, %v3120
        %v3123 = vunpack.c.l.s4 1966171168
        %v3124 = vunpack.c.0.s8 %v3123
        %v3125 = vlaneseq
        %v3126 = vshrl.u32 %v3125, 7
        %v3127 = vsub.s32 %v3124, %v3126
        %v3128 = vrot.slane %v3104, %v3127
        %v3130 = vunpack.c.l.s4 1966171168
        %v3131 = vunpack.c.0.s8 %v3130
        %v3132 = vlaneseq
        %v3133 = vshrl.u32 %v3132, 7
        %v3134 = vsub.s32 %v3131, %v3133
        %v3135 = vrot.slane %v3105, %v3134
        %v3137 = vunpack.c.l.s4 1966171168
        %v3138 = vunpack.c.0.s8 %v3137
        %v3139 = vlaneseq
        %v3140 = vshrl.u32 %v3139, 7
        %v3141 = vsub.s32 %v3138, %v3140
        %v3142 = vrot.slane %v3106, %v3141
        %v3144 = vunpack.c.l.s4 1966171168
        %v3145 = vunpack.c.0.s8 %v3144
        %v3146 = vlaneseq
        %v3147 = vshrl.u32 %v3146, 7
        %v3148 = vsub.s32 %v3145, %v3147
        %v3149 = vrot.slane %v3107, %v3148
        %v3150 = vcombine.low %v3114, %v3128
        %v3151 = vcombine.high %v3114, %v3128
        %v3152 = vcombine.low %v3121, %v3135
        %v3153 = vcombine.high %v3121, %v3135
        %v3154 = vcombine.high %v3142, %v3142
        %v3155 = vcombine.high %v3149, %v3149
        %v3157 = vunpack.c.l.s4 1966171168
        %v3158 = vunpack.c.0.s8 %v3157
        %v3159 = vlaneseq
        %v3160 = vshrl.u32 %v3159, 7
        %v3161 = vsub.s32 %v3158, %v3160
        %v3162 = vrot.slane %v3150, %v3161
        %v3164 = vunpack.c.l.s4 1966171168
        %v3165 = vunpack.c.0.s8 %v3164
        %v3166 = vlaneseq
        %v3167 = vshrl.u32 %v3166, 7
        %v3168 = vsub.s32 %v3165, %v3167
        %v3169 = vrot.slane %v3152, %v3168
        %v3171 = vunpack.c.l.s4 1966171168
        %v3172 = vunpack.c.0.s8 %v3171
        %v3173 = vlaneseq
        %v3174 = vshrl.u32 %v3173, 7
        %v3175 = vsub.s32 %v3172, %v3174
        %v3176 = vrot.slane %v3151, %v3175
        %v3178 = vunpack.c.l.s4 1966171168
        %v3179 = vunpack.c.0.s8 %v3178
        %v3180 = vlaneseq
        %v3181 = vshrl.u32 %v3180, 7
        %v3182 = vsub.s32 %v3179, %v3181
        %v3183 = vrot.slane %v3153, %v3182
        %v3185 = vunpack.c.l.s4 1966171168
        %v3186 = vunpack.c.0.s8 %v3185
        %v3187 = vlaneseq
        %v3188 = vshrl.u32 %v3187, 7
        %v3189 = vsub.s32 %v3186, %v3188
        %v3190 = vrot.slane %v3142, %v3189
        %v3192 = vunpack.c.l.s4 1966171168
        %v3193 = vunpack.c.0.s8 %v3192
        %v3194 = vlaneseq
        %v3195 = vshrl.u32 %v3194, 7
        %v3196 = vsub.s32 %v3193, %v3195
        %v3197 = vrot.slane %v3149, %v3196
        %v3199 = vunpack.c.l.s4 1966171168
        %v3200 = vunpack.c.0.s8 %v3199
        %v3201 = vlaneseq
        %v3202 = vshrl.u32 %v3201, 7
        %v3203 = vsub.s32 %v3200, %v3202
        %v3204 = vrot.slane %v3154, %v3203
        %v3206 = vunpack.c.l.s4 1966171168
        %v3207 = vunpack.c.0.s8 %v3206
        %v3208 = vlaneseq
        %v3209 = vshrl.u32 %v3208, 7
        %v3210 = vsub.s32 %v3207, %v3209
        %v3211 = vrot.slane %v3155, %v3210
        %v3212 = vcombine.low %v3162, %v3190
        %v3213 = vcombine.high %v3162, %v3190
        %v3214 = vcombine.low %v3169, %v3197
        %v3215 = vcombine.high %v3169, %v3197
        %v3216 = vcombine.low %v3176, %v3204
        %v3217 = vcombine.high %v3176, %v3204
        %v3218 = vcombine.low %v3183, %v3211
        %v3219 = vcombine.high %v3183, %v3211
        %v3228 = vmul.f32 %v3032, %v3212
        %v3229 = vmul.f32 %v3041, %v3216
        %v3230 = vmul.f32 %v3050, %v3213
        %v3231 = vmul.f32 %v3059, %v3217
        %v3232 = vmul.f32 %v3068, %v3214
        %v3233 = vmul.f32 %v3077, %v3218
        %v3234 = vmul.f32 %v3086, %v3215
        %v3235 = vmul.f32 %v3095, %v3219
        %v3284 = vcombine.low %v2735, %v2741
        %v3285 = vcombine.low %v2747, %v2753
        %v3286 = vcombine.low %v2759, %v2765
        %v3288 = vunpack.c.l.s4 1966171168
        %v3289 = vunpack.c.0.s8 %v3288
        %v3290 = vlaneseq
        %v3291 = vshrl.u32 %v3290, 7
        %v3292 = vsub.s32 %v3289, %v3291
        %v3293 = vrot.slane %v3284, %v3292
        %v3295 = vunpack.c.l.s4 1966171168
        %v3296 = vunpack.c.0.s8 %v3295
        %v3297 = vlaneseq
        %v3298 = vshrl.u32 %v3297, 7
        %v3299 = vsub.s32 %v3296, %v3298
        %v3300 = vrot.slane %v3285, %v3299
        %v3302 = vunpack.c.l.s4 1966171168
        %v3303 = vunpack.c.0.s8 %v3302
        %v3304 = vlaneseq
        %v3305 = vshrl.u32 %v3304, 7
        %v3306 = vsub.s32 %v3303, %v3305
        %v3307 = vrot.slane %v3286, %v3306
        %v3308 = vcombine.low %v3293, %v3300
        %v3310 = vunpack.c.l.s4 1966171168
        %v3311 = vunpack.c.0.s8 %v3310
        %v3312 = vlaneseq
        %v3313 = vshrl.u32 %v3312, 7
        %v3314 = vsub.s32 %v3311, %v3313
        %v3315 = vrot.slane %v3308, %v3314
        %v3317 = vunpack.c.l.s4 1966171168
        %v3318 = vunpack.c.0.s8 %v3317
        %v3319 = vlaneseq
        %v3320 = vshrl.u32 %v3319, 7
        %v3321 = vsub.s32 %v3318, %v3320
        %v3322 = vrot.slane %v3307, %v3321
        %v3323 = vcombine.low %v3315, %v3322
        %v3324 = vcombine.low %v2771, %v2777
        %v3325 = vcombine.low %v2783, %v2789
        %v3326 = vcombine.low %v2795, %v2801
        %v3328 = vunpack.c.l.s4 1966171168
        %v3329 = vunpack.c.0.s8 %v3328
        %v3330 = vlaneseq
        %v3331 = vshrl.u32 %v3330, 7
        %v3332 = vsub.s32 %v3329, %v3331
        %v3333 = vrot.slane %v3324, %v3332
        %v3335 = vunpack.c.l.s4 1966171168
        %v3336 = vunpack.c.0.s8 %v3335
        %v3337 = vlaneseq
        %v3338 = vshrl.u32 %v3337, 7
        %v3339 = vsub.s32 %v3336, %v3338
        %v3340 = vrot.slane %v3325, %v3339
        %v3342 = vunpack.c.l.s4 1966171168
        %v3343 = vunpack.c.0.s8 %v3342
        %v3344 = vlaneseq
        %v3345 = vshrl.u32 %v3344, 7
        %v3346 = vsub.s32 %v3343, %v3345
        %v3347 = vrot.slane %v3326, %v3346
        %v3348 = vcombine.low %v3333, %v3340
        %v3350 = vunpack.c.l.s4 1966171168
        %v3351 = vunpack.c.0.s8 %v3350
        %v3352 = vlaneseq
        %v3353 = vshrl.u32 %v3352, 7
        %v3354 = vsub.s32 %v3351, %v3353
        %v3355 = vrot.slane %v3348, %v3354
        %v3357 = vunpack.c.l.s4 1966171168
        %v3358 = vunpack.c.0.s8 %v3357
        %v3359 = vlaneseq
        %v3360 = vshrl.u32 %v3359, 7
        %v3361 = vsub.s32 %v3358, %v3360
        %v3362 = vrot.slane %v3347, %v3361
        %v3363 = vcombine.low %v3355, %v3362
        %v3364 = vcombine.low %v2807, %v2813
        %v3365 = vcombine.low %v2819, %v2825
        %v3366 = vcombine.low %v2831, %v2837
        %v3368 = vunpack.c.l.s4 1966171168
        %v3369 = vunpack.c.0.s8 %v3368
        %v3370 = vlaneseq
        %v3371 = vshrl.u32 %v3370, 7
        %v3372 = vsub.s32 %v3369, %v3371
        %v3373 = vrot.slane %v3364, %v3372
        %v3375 = vunpack.c.l.s4 1966171168
        %v3376 = vunpack.c.0.s8 %v3375
        %v3377 = vlaneseq
        %v3378 = vshrl.u32 %v3377, 7
        %v3379 = vsub.s32 %v3376, %v3378
        %v3380 = vrot.slane %v3365, %v3379
        %v3382 = vunpack.c.l.s4 1966171168
        %v3383 = vunpack.c.0.s8 %v3382
        %v3384 = vlaneseq
        %v3385 = vshrl.u32 %v3384, 7
        %v3386 = vsub.s32 %v3383, %v3385
        %v3387 = vrot.slane %v3366, %v3386
        %v3388 = vcombine.low %v3373, %v3380
        %v3390 = vunpack.c.l.s4 1966171168
        %v3391 = vunpack.c.0.s8 %v3390
        %v3392 = vlaneseq
        %v3393 = vshrl.u32 %v3392, 7
        %v3394 = vsub.s32 %v3391, %v3393
        %v3395 = vrot.slane %v3388, %v3394
        %v3397 = vunpack.c.l.s4 1966171168
        %v3398 = vunpack.c.0.s8 %v3397
        %v3399 = vlaneseq
        %v3400 = vshrl.u32 %v3399, 7
        %v3401 = vsub.s32 %v3398, %v3400
        %v3402 = vrot.slane %v3387, %v3401
        %v3403 = vcombine.low %v3395, %v3402
        %v3404 = vcombine.low %v2843, %v2849
        %v3405 = vcombine.low %v2855, %v2861
        %v3406 = vcombine.low %v2867, %v2873
        %v3408 = vunpack.c.l.s4 1966171168
        %v3409 = vunpack.c.0.s8 %v3408
        %v3410 = vlaneseq
        %v3411 = vshrl.u32 %v3410, 7
        %v3412 = vsub.s32 %v3409, %v3411
        %v3413 = vrot.slane %v3404, %v3412
        %v3415 = vunpack.c.l.s4 1966171168
        %v3416 = vunpack.c.0.s8 %v3415
        %v3417 = vlaneseq
        %v3418 = vshrl.u32 %v3417, 7
        %v3419 = vsub.s32 %v3416, %v3418
        %v3420 = vrot.slane %v3405, %v3419
        %v3422 = vunpack.c.l.s4 1966171168
        %v3423 = vunpack.c.0.s8 %v3422
        %v3424 = vlaneseq
        %v3425 = vshrl.u32 %v3424, 7
        %v3426 = vsub.s32 %v3423, %v3425
        %v3427 = vrot.slane %v3406, %v3426
        %v3428 = vcombine.low %v3413, %v3420
        %v3430 = vunpack.c.l.s4 1966171168
        %v3431 = vunpack.c.0.s8 %v3430
        %v3432 = vlaneseq
        %v3433 = vshrl.u32 %v3432, 7
        %v3434 = vsub.s32 %v3431, %v3433
        %v3435 = vrot.slane %v3428, %v3434
        %v3437 = vunpack.c.l.s4 1966171168
        %v3438 = vunpack.c.0.s8 %v3437
        %v3439 = vlaneseq
        %v3440 = vshrl.u32 %v3439, 7
        %v3441 = vsub.s32 %v3438, %v3440
        %v3442 = vrot.slane %v3427, %v3441
        %v3443 = vcombine.low %v3435, %v3442
        %v3444 = vcombine.low %v2879, %v2885
        %v3445 = vcombine.low %v2891, %v2897
        %v3446 = vcombine.low %v2903, %v2909
        %v3448 = vunpack.c.l.s4 1966171168
        %v3449 = vunpack.c.0.s8 %v3448
        %v3450 = vlaneseq
        %v3451 = vshrl.u32 %v3450, 7
        %v3452 = vsub.s32 %v3449, %v3451
        %v3453 = vrot.slane %v3444, %v3452
        %v3455 = vunpack.c.l.s4 1966171168
        %v3456 = vunpack.c.0.s8 %v3455
        %v3457 = vlaneseq
        %v3458 = vshrl.u32 %v3457, 7
        %v3459 = vsub.s32 %v3456, %v3458
        %v3460 = vrot.slane %v3445, %v3459
        %v3462 = vunpack.c.l.s4 1966171168
        %v3463 = vunpack.c.0.s8 %v3462
        %v3464 = vlaneseq
        %v3465 = vshrl.u32 %v3464, 7
        %v3466 = vsub.s32 %v3463, %v3465
        %v3467 = vrot.slane %v3446, %v3466
        %v3468 = vcombine.low %v3453, %v3460
        %v3470 = vunpack.c.l.s4 1966171168
        %v3471 = vunpack.c.0.s8 %v3470
        %v3472 = vlaneseq
        %v3473 = vshrl.u32 %v3472, 7
        %v3474 = vsub.s32 %v3471, %v3473
        %v3475 = vrot.slane %v3468, %v3474
        %v3477 = vunpack.c.l.s4 1966171168
        %v3478 = vunpack.c.0.s8 %v3477
        %v3479 = vlaneseq
        %v3480 = vshrl.u32 %v3479, 7
        %v3481 = vsub.s32 %v3478, %v3480
        %v3482 = vrot.slane %v3467, %v3481
        %v3483 = vcombine.low %v3475, %v3482
        %v3484 = vcombine.low %v2915, %v2921
        %v3485 = vcombine.low %v2927, %v2933
        %v3486 = vcombine.low %v2939, %v2945
        %v3488 = vunpack.c.l.s4 1966171168
        %v3489 = vunpack.c.0.s8 %v3488
        %v3490 = vlaneseq
        %v3491 = vshrl.u32 %v3490, 7
        %v3492 = vsub.s32 %v3489, %v3491
        %v3493 = vrot.slane %v3484, %v3492
        %v3495 = vunpack.c.l.s4 1966171168
        %v3496 = vunpack.c.0.s8 %v3495
        %v3497 = vlaneseq
        %v3498 = vshrl.u32 %v3497, 7
        %v3499 = vsub.s32 %v3496, %v3498
        %v3500 = vrot.slane %v3485, %v3499
        %v3502 = vunpack.c.l.s4 1966171168
        %v3503 = vunpack.c.0.s8 %v3502
        %v3504 = vlaneseq
        %v3505 = vshrl.u32 %v3504, 7
        %v3506 = vsub.s32 %v3503, %v3505
        %v3507 = vrot.slane %v3486, %v3506
        %v3508 = vcombine.low %v3493, %v3500
        %v3510 = vunpack.c.l.s4 1966171168
        %v3511 = vunpack.c.0.s8 %v3510
        %v3512 = vlaneseq
        %v3513 = vshrl.u32 %v3512, 7
        %v3514 = vsub.s32 %v3511, %v3513
        %v3515 = vrot.slane %v3508, %v3514
        %v3517 = vunpack.c.l.s4 1966171168
        %v3518 = vunpack.c.0.s8 %v3517
        %v3519 = vlaneseq
        %v3520 = vshrl.u32 %v3519, 7
        %v3521 = vsub.s32 %v3518, %v3520
        %v3522 = vrot.slane %v3507, %v3521
        %v3523 = vcombine.low %v3515, %v3522
        %v3524 = vcombine.low %v2951, %v2957
        %v3525 = vcombine.low %v2963, %v2969
        %v3526 = vcombine.low %v2975, %v2981
        %v3528 = vunpack.c.l.s4 1966171168
        %v3529 = vunpack.c.0.s8 %v3528
        %v3530 = vlaneseq
        %v3531 = vshrl.u32 %v3530, 7
        %v3532 = vsub.s32 %v3529, %v3531
        %v3533 = vrot.slane %v3524, %v3532
        %v3535 = vunpack.c.l.s4 1966171168
        %v3536 = vunpack.c.0.s8 %v3535
        %v3537 = vlaneseq
        %v3538 = vshrl.u32 %v3537, 7
        %v3539 = vsub.s32 %v3536, %v3538
        %v3540 = vrot.slane %v3525, %v3539
        %v3542 = vunpack.c.l.s4 1966171168
        %v3543 = vunpack.c.0.s8 %v3542
        %v3544 = vlaneseq
        %v3545 = vshrl.u32 %v3544, 7
        %v3546 = vsub.s32 %v3543, %v3545
        %v3547 = vrot.slane %v3526, %v3546
        %v3548 = vcombine.low %v3533, %v3540
        %v3550 = vunpack.c.l.s4 1966171168
        %v3551 = vunpack.c.0.s8 %v3550
        %v3552 = vlaneseq
        %v3553 = vshrl.u32 %v3552, 7
        %v3554 = vsub.s32 %v3551, %v3553
        %v3555 = vrot.slane %v3548, %v3554
        %v3557 = vunpack.c.l.s4 1966171168
        %v3558 = vunpack.c.0.s8 %v3557
        %v3559 = vlaneseq
        %v3560 = vshrl.u32 %v3559, 7
        %v3561 = vsub.s32 %v3558, %v3560
        %v3562 = vrot.slane %v3547, %v3561
        %v3563 = vcombine.low %v3555, %v3562
        %v3564 = vcombine.low %v2987, %v2993
        %v3565 = vcombine.low %v2999, %v3005
        %v3566 = vcombine.low %v3011, %v3017
        %v3568 = vunpack.c.l.s4 1966171168
        %v3569 = vunpack.c.0.s8 %v3568
        %v3570 = vlaneseq
        %v3571 = vshrl.u32 %v3570, 7
        %v3572 = vsub.s32 %v3569, %v3571
        %v3573 = vrot.slane %v3564, %v3572
        %v3575 = vunpack.c.l.s4 1966171168
        %v3576 = vunpack.c.0.s8 %v3575
        %v3577 = vlaneseq
        %v3578 = vshrl.u32 %v3577, 7
        %v3579 = vsub.s32 %v3576, %v3578
        %v3580 = vrot.slane %v3565, %v3579
        %v3582 = vunpack.c.l.s4 1966171168
        %v3583 = vunpack.c.0.s8 %v3582
        %v3584 = vlaneseq
        %v3585 = vshrl.u32 %v3584, 7
        %v3586 = vsub.s32 %v3583, %v3585
        %v3587 = vrot.slane %v3566, %v3586
        %v3588 = vcombine.low %v3573, %v3580
        %v3590 = vunpack.c.l.s4 1966171168
        %v3591 = vunpack.c.0.s8 %v3590
        %v3592 = vlaneseq
        %v3593 = vshrl.u32 %v3592, 7
        %v3594 = vsub.s32 %v3591, %v3593
        %v3595 = vrot.slane %v3588, %v3594
        %v3597 = vunpack.c.l.s4 1966171168
        %v3598 = vunpack.c.0.s8 %v3597
        %v3599 = vlaneseq
        %v3600 = vshrl.u32 %v3599, 7
        %v3601 = vsub.s32 %v3598, %v3600
        %v3602 = vrot.slane %v3587, %v3601
        %v3603 = vcombine.low %v3595, %v3602
        %v3612 = vadd.f32 %v3228, %v3323
        %v3613 = vadd.f32 %v3229, %v3363
        %v3614 = vadd.f32 %v3230, %v3403
        %v3615 = vadd.f32 %v3231, %v3443
        %v3616 = vadd.f32 %v3232, %v3483
        %v3617 = vadd.f32 %v3233, %v3523
        %v3618 = vadd.f32 %v3234, %v3563
        %v3619 = vadd.f32 %v3235, %v3603
        %v3628 = vcombine.low %v3612, %v3613
        %v3629 = vcombine.high %v3612, %v3613
        %v3630 = vcombine.low %v3614, %v3615
        %v3631 = vcombine.high %v3614, %v3615
        %v3632 = vcombine.low %v3616, %v3617
        %v3633 = vcombine.high %v3616, %v3617
        %v3634 = vcombine.low %v3618, %v3619
        %v3635 = vcombine.high %v3618, %v3619
        %v3637 = vunpack.c.l.s4 1966171168
        %v3638 = vunpack.c.0.s8 %v3637
        %v3639 = vlaneseq
        %v3640 = vshrl.u32 %v3639, 7
        %v3641 = vsub.s32 %v3638, %v3640
        %v3642 = vrot.slane %v3628, %v3641
        %v3644 = vunpack.c.l.s4 1966171168
        %v3645 = vunpack.c.0.s8 %v3644
        %v3646 = vlaneseq
        %v3647 = vshrl.u32 %v3646, 7
        %v3648 = vsub.s32 %v3645, %v3647
        %v3649 = vrot.slane %v3629, %v3648
        %v3651 = vunpack.c.l.s4 1966171168
        %v3652 = vunpack.c.0.s8 %v3651
        %v3653 = vlaneseq
        %v3654 = vshrl.u32 %v3653, 7
        %v3655 = vsub.s32 %v3652, %v3654
        %v3656 = vrot.slane %v3630, %v3655
        %v3658 = vunpack.c.l.s4 1966171168
        %v3659 = vunpack.c.0.s8 %v3658
        %v3660 = vlaneseq
        %v3661 = vshrl.u32 %v3660, 7
        %v3662 = vsub.s32 %v3659, %v3661
        %v3663 = vrot.slane %v3631, %v3662
        %v3665 = vunpack.c.l.s4 1966171168
        %v3666 = vunpack.c.0.s8 %v3665
        %v3667 = vlaneseq
        %v3668 = vshrl.u32 %v3667, 7
        %v3669 = vsub.s32 %v3666, %v3668
        %v3670 = vrot.slane %v3632, %v3669
        %v3672 = vunpack.c.l.s4 1966171168
        %v3673 = vunpack.c.0.s8 %v3672
        %v3674 = vlaneseq
        %v3675 = vshrl.u32 %v3674, 7
        %v3676 = vsub.s32 %v3673, %v3675
        %v3677 = vrot.slane %v3633, %v3676
        %v3679 = vunpack.c.l.s4 1966171168
        %v3680 = vunpack.c.0.s8 %v3679
        %v3681 = vlaneseq
        %v3682 = vshrl.u32 %v3681, 7
        %v3683 = vsub.s32 %v3680, %v3682
        %v3684 = vrot.slane %v3634, %v3683
        %v3686 = vunpack.c.l.s4 1966171168
        %v3687 = vunpack.c.0.s8 %v3686
        %v3688 = vlaneseq
        %v3689 = vshrl.u32 %v3688, 7
        %v3690 = vsub.s32 %v3687, %v3689
        %v3691 = vrot.slane %v3635, %v3690
        %v3692 = vcombine.low %v3642, %v3656
        %v3693 = vcombine.high %v3642, %v3656
        %v3694 = vcombine.low %v3649, %v3663
        %v3695 = vcombine.high %v3649, %v3663
        %v3696 = vcombine.low %v3670, %v3684
        %v3697 = vcombine.high %v3670, %v3684
        %v3698 = vcombine.low %v3677, %v3691
        %v3699 = vcombine.high %v3677, %v3691
        %v3701 = vunpack.c.l.s4 1966171168
        %v3702 = vunpack.c.0.s8 %v3701
        %v3703 = vlaneseq
        %v3704 = vshrl.u32 %v3703, 7
        %v3705 = vsub.s32 %v3702, %v3704
        %v3706 = vrot.slane %v3692, %v3705
        %v3708 = vunpack.c.l.s4 1966171168
        %v3709 = vunpack.c.0.s8 %v3708
        %v3710 = vlaneseq
        %v3711 = vshrl.u32 %v3710, 7
        %v3712 = vsub.s32 %v3709, %v3711
        %v3713 = vrot.slane %v3694, %v3712
        %v3715 = vunpack.c.l.s4 1966171168
        %v3716 = vunpack.c.0.s8 %v3715
        %v3717 = vlaneseq
        %v3718 = vshrl.u32 %v3717, 7
        %v3719 = vsub.s32 %v3716, %v3718
        %v3720 = vrot.slane %v3693, %v3719
        %v3722 = vunpack.c.l.s4 1966171168
        %v3723 = vunpack.c.0.s8 %v3722
        %v3724 = vlaneseq
        %v3725 = vshrl.u32 %v3724, 7
        %v3726 = vsub.s32 %v3723, %v3725
        %v3727 = vrot.slane %v3695, %v3726
        %v3729 = vunpack.c.l.s4 1966171168
        %v3730 = vunpack.c.0.s8 %v3729
        %v3731 = vlaneseq
        %v3732 = vshrl.u32 %v3731, 7
        %v3733 = vsub.s32 %v3730, %v3732
        %v3734 = vrot.slane %v3696, %v3733
        %v3736 = vunpack.c.l.s4 1966171168
        %v3737 = vunpack.c.0.s8 %v3736
        %v3738 = vlaneseq
        %v3739 = vshrl.u32 %v3738, 7
        %v3740 = vsub.s32 %v3737, %v3739
        %v3741 = vrot.slane %v3698, %v3740
        %v3743 = vunpack.c.l.s4 1966171168
        %v3744 = vunpack.c.0.s8 %v3743
        %v3745 = vlaneseq
        %v3746 = vshrl.u32 %v3745, 7
        %v3747 = vsub.s32 %v3744, %v3746
        %v3748 = vrot.slane %v3697, %v3747
        %v3750 = vunpack.c.l.s4 1966171168
        %v3751 = vunpack.c.0.s8 %v3750
        %v3752 = vlaneseq
        %v3753 = vshrl.u32 %v3752, 7
        %v3754 = vsub.s32 %v3751, %v3753
        %v3755 = vrot.slane %v3699, %v3754
        %v3756 = vcombine.low %v3706, %v3734
        %v3757 = vcombine.high %v3706, %v3734
        %v3758 = vcombine.low %v3713, %v3741
        %v3759 = vcombine.low %v3720, %v3748
        %v3760 = vcombine.high %v3720, %v3748
        %v3761 = vcombine.low %v3727, %v3755
        %3768 = vst [vmem:[#allocation4] sm:$0xff] %v3756
        %3769 = vst [vmem:[#allocation4 + $0x8] sm:$0xff] %v3759
        %3770 = vst [vmem:[#allocation4 + $0x10] sm:$0xff] %v3757
        %3771 = vst [vmem:[#allocation4 + $0x18] sm:$0xff] %v3760
        %3772 = vst [vmem:[#allocation4 + $0x20] sm:$0xff] %v3758
        %3773 = vst [vmem:[#allocation4 + $0x28] sm:$0xff] %v3761
        %v3774 = vcombine.low %v2417, %v2418
        %v3775 = vcombine.low %v2419, %v2420
        %v3776 = vcombine.low %v2421, %v2422
        %v3777 = vcombine.low %v2423, %v2424
        %v3779 = vunpack.c.l.s4 1966171168
        %v3780 = vunpack.c.0.s8 %v3779
        %v3781 = vlaneseq
        %v3782 = vshrl.u32 %v3781, 7
        %v3783 = vsub.s32 %v3780, %v3782
        %v3784 = vrot.slane %v3774, %v3783
        %v3786 = vunpack.c.l.s4 1966171168
        %v3787 = vunpack.c.0.s8 %v3786
        %v3788 = vlaneseq
        %v3789 = vshrl.u32 %v3788, 7
        %v3790 = vsub.s32 %v3787, %v3789
        %v3791 = vrot.slane %v3775, %v3790
        %v3793 = vunpack.c.l.s4 1966171168
        %v3794 = vunpack.c.0.s8 %v3793
        %v3795 = vlaneseq
        %v3796 = vshrl.u32 %v3795, 7
        %v3797 = vsub.s32 %v3794, %v3796
        %v3798 = vrot.slane %v3776, %v3797
        %v3800 = vunpack.c.l.s4 1966171168
        %v3801 = vunpack.c.0.s8 %v3800
        %v3802 = vlaneseq
        %v3803 = vshrl.u32 %v3802, 7
        %v3804 = vsub.s32 %v3801, %v3803
        %v3805 = vrot.slane %v3777, %v3804
        %v3806 = vcombine.low %v3784, %v3791
        %v3807 = vcombine.low %v3798, %v3805
        %v3809 = vunpack.c.l.s4 1966171168
        %v3810 = vunpack.c.0.s8 %v3809
        %v3811 = vlaneseq
        %v3812 = vshrl.u32 %v3811, 7
        %v3813 = vsub.s32 %v3810, %v3812
        %v3814 = vrot.slane %v3806, %v3813
        %v3816 = vunpack.c.l.s4 1966171168
        %v3817 = vunpack.c.0.s8 %v3816
        %v3818 = vlaneseq
        %v3819 = vshrl.u32 %v3818, 7
        %v3820 = vsub.s32 %v3817, %v3819
        %v3821 = vrot.slane %v3807, %v3820
        %v3822 = vcombine.low %v3814, %v3821
        %3824 = vst.msk [vmem:[#allocation2] sm:$0xff] %vm2529, %v3822
        %v3833 = vcombine.low %v2586, %v2587
        %v3834 = vcombine.low %v2588, %v2589
        %v3835 = vcombine.low %v2590, %v2591
        %v3836 = vcombine.low %v2592, %v2593
        %v3838 = vunpack.c.l.s4 1966171168
        %v3839 = vunpack.c.0.s8 %v3838
        %v3840 = vlaneseq
        %v3841 = vshrl.u32 %v3840, 7
        %v3842 = vsub.s32 %v3839, %v3841
        %v3843 = vrot.slane %v3833, %v3842
        %v3845 = vunpack.c.l.s4 1966171168
        %v3846 = vunpack.c.0.s8 %v3845
        %v3847 = vlaneseq
        %v3848 = vshrl.u32 %v3847, 7
        %v3849 = vsub.s32 %v3846, %v3848
        %v3850 = vrot.slane %v3834, %v3849
        %v3852 = vunpack.c.l.s4 1966171168
        %v3853 = vunpack.c.0.s8 %v3852
        %v3854 = vlaneseq
        %v3855 = vshrl.u32 %v3854, 7
        %v3856 = vsub.s32 %v3853, %v3855
        %v3857 = vrot.slane %v3835, %v3856
        %v3859 = vunpack.c.l.s4 1966171168
        %v3860 = vunpack.c.0.s8 %v3859
        %v3861 = vlaneseq
        %v3862 = vshrl.u32 %v3861, 7
        %v3863 = vsub.s32 %v3860, %v3862
        %v3864 = vrot.slane %v3836, %v3863
        %v3865 = vcombine.low %v3843, %v3850
        %v3866 = vcombine.low %v3857, %v3864
        %v3868 = vunpack.c.l.s4 1966171168
        %v3869 = vunpack.c.0.s8 %v3868
        %v3870 = vlaneseq
        %v3871 = vshrl.u32 %v3870, 7
        %v3872 = vsub.s32 %v3869, %v3871
        %v3873 = vrot.slane %v3865, %v3872
        %v3875 = vunpack.c.l.s4 1966171168
        %v3876 = vunpack.c.0.s8 %v3875
        %v3877 = vlaneseq
        %v3878 = vshrl.u32 %v3877, 7
        %v3879 = vsub.s32 %v3876, %v3878
        %v3880 = vrot.slane %v3866, %v3879
        %v3881 = vcombine.low %v3873, %v3880
        %3883 = vst.msk [vmem:[#allocation3] sm:$0xff] %vm2529, %v3881
        // Predicated region
        $region65: #{tpu_custom_call.1} parent=47 // pred_check
          %p3884 = pneg %p346
        $region66: #{tpu_custom_call.1} parent=47 // pred_check_branch
          %3886 = sbr.rel (%p3884) target = $region68
        $region67: #{tpu_custom_call.1} parent=47 // pred_region
          %v3887 = vld [vmem:[#allocation4] sm:$0xff]
          %v3888 = vld [vmem:[#allocation4 + $0x8] sm:$0xff]
          %v3889 = vld [vmem:[#allocation4 + $0x10] sm:$0xff]
          %v3890 = vld [vmem:[#allocation4 + $0x18] sm:$0xff]
          %v3891 = vld [vmem:[#allocation4 + $0x20] sm:$0xff]
          %v3892 = vld [vmem:[#allocation4 + $0x28] sm:$0xff]
          %v3893 = vld [vmem:[#allocation3] sm:$0xff]
          %3895 = vset.pattern.permute.xlu0 0
          %3896 = vperm.xlu0 %3895, %v3893
          %v3897 = vpop.permute.xlu0 %3896
          %v3899 = vrcp.pop %v3897
          %v3900 = vmul.f32 %v3887, %v3899
          %v3901 = vmul.f32 %v3888, %v3899
          %v3902 = vmul.f32 %v3889, %v3899
          %v3903 = vmul.f32 %v3890, %v3899
          %v3904 = vmul.f32 %v3891, %v3899
          %v3905 = vmul.f32 %v3892, %v3899
          %v3906 = vpack.c.bf16 %v3900, %v3900
          %v3907 = vpack.c.bf16 %v3901, %v3901
          %v3908 = vpack.c.bf16 %v3902, %v3902
          %v3909 = vpack.c.bf16 %v3903, %v3903
          %v3910 = vpack.c.bf16 %v3904, %v3904
          %v3911 = vpack.c.bf16 %v3905, %v3905
          %v3912 = vld [vmem:[#allocation11] sm:$0xf]
          %v3913 = vld [vmem:[#allocation11 + $0x4] sm:$0xf]
          %v3914 = vld [vmem:[#allocation11 + $0x8] sm:$0xf]
          %v3915 = vld [vmem:[#allocation11 + $0xc] sm:$0xf]
          %v3916 = vld [vmem:[#allocation11 + $0x10] sm:$0xf]
          %v3917 = vld [vmem:[#allocation11 + $0x14] sm:$0xf]
          %v3918 = vld [vmem:[#allocation11 + $0x18] sm:$0xf]
          %v3919 = vld [vmem:[#allocation11 + $0x1c] sm:$0xf]
          %v3920 = vld [vmem:[#allocation11 + $0x20] sm:$0xf]
          %v3921 = vld [vmem:[#allocation11 + $0x24] sm:$0xf]
          %v3922 = vld [vmem:[#allocation11 + $0x28] sm:$0xf]
          %v3923 = vld [vmem:[#allocation11 + $0x2c] sm:$0xf]
          %v3924 = vld [vmem:[#allocation11 + $0x30] sm:$0xf]
          %v3925 = vld [vmem:[#allocation11 + $0x34] sm:$0xf]
          %v3926 = vld [vmem:[#allocation11 + $0x38] sm:$0xf]
          %v3927 = vld [vmem:[#allocation11 + $0x3c] sm:$0xf]
          %v3928 = vld [vmem:[#allocation11 + $0x40] sm:$0xf]
          %v3929 = vld [vmem:[#allocation11 + $0x44] sm:$0xf]
          %v3930 = vld [vmem:[#allocation11 + $0x48] sm:$0xf]
          %v3931 = vld [vmem:[#allocation11 + $0x4c] sm:$0xf]
          %v3932 = vld [vmem:[#allocation11 + $0x50] sm:$0xf]
          %v3933 = vld [vmem:[#allocation11 + $0x54] sm:$0xf]
          %v3934 = vld [vmem:[#allocation11 + $0x58] sm:$0xf]
          %v3935 = vld [vmem:[#allocation11 + $0x5c] sm:$0xf]
          %v3936 = vld [vmem:[#allocation11 + $0x60] sm:$0xf]
          %v3937 = vld [vmem:[#allocation11 + $0x64] sm:$0xf]
          %v3938 = vld [vmem:[#allocation11 + $0x68] sm:$0xf]
          %v3939 = vld [vmem:[#allocation11 + $0x6c] sm:$0xf]
          %v3940 = vld [vmem:[#allocation11 + $0x70] sm:$0xf]
          %v3941 = vld [vmem:[#allocation11 + $0x74] sm:$0xf]
          %v3942 = vld [vmem:[#allocation11 + $0x78] sm:$0xf]
          %v3943 = vld [vmem:[#allocation11 + $0x7c] sm:$0xf]
          %v3944 = vld [vmem:[#allocation11 + $0x80] sm:$0xf]
          %v3945 = vld [vmem:[#allocation11 + $0x84] sm:$0xf]
          %v3946 = vld [vmem:[#allocation11 + $0x88] sm:$0xf]
          %v3947 = vld [vmem:[#allocation11 + $0x8c] sm:$0xf]
          %v3948 = vld [vmem:[#allocation11 + $0x90] sm:$0xf]
          %v3949 = vld [vmem:[#allocation11 + $0x94] sm:$0xf]
          %v3950 = vld [vmem:[#allocation11 + $0x98] sm:$0xf]
          %v3951 = vld [vmem:[#allocation11 + $0x9c] sm:$0xf]
          %v3952 = vld [vmem:[#allocation11 + $0xa0] sm:$0xf]
          %v3953 = vld [vmem:[#allocation11 + $0xa4] sm:$0xf]
          %v3954 = vld [vmem:[#allocation11 + $0xa8] sm:$0xf]
          %v3955 = vld [vmem:[#allocation11 + $0xac] sm:$0xf]
          %v3956 = vld [vmem:[#allocation11 + $0xb0] sm:$0xf]
          %v3957 = vld [vmem:[#allocation11 + $0xb4] sm:$0xf]
          %v3958 = vld [vmem:[#allocation11 + $0xb8] sm:$0xf]
          %v3959 = vld [vmem:[#allocation11 + $0xbc] sm:$0xf]
          %v3960 = vld [vmem:[#allocation11 + $0xc0] sm:$0xf]
          %v3961 = vld [vmem:[#allocation11 + $0xc4] sm:$0xf]
          %v3962 = vld [vmem:[#allocation11 + $0xc8] sm:$0xf]
          %v3963 = vld [vmem:[#allocation11 + $0xcc] sm:$0xf]
          %v3964 = vld [vmem:[#allocation11 + $0xd0] sm:$0xf]
          %v3965 = vld [vmem:[#allocation11 + $0xd4] sm:$0xf]
          %v3966 = vld [vmem:[#allocation11 + $0xd8] sm:$0xf]
          %v3967 = vld [vmem:[#allocation11 + $0xdc] sm:$0xf]
          %v3968 = vld [vmem:[#allocation11 + $0xe0] sm:$0xf]
          %v3969 = vld [vmem:[#allocation11 + $0xe4] sm:$0xf]
          %v3970 = vld [vmem:[#allocation11 + $0xe8] sm:$0xf]
          %v3971 = vld [vmem:[#allocation11 + $0xec] sm:$0xf]
          %v3972 = vld [vmem:[#allocation11 + $0xf0] sm:$0xf]
          %v3973 = vld [vmem:[#allocation11 + $0xf4] sm:$0xf]
          %v3974 = vld [vmem:[#allocation11 + $0xf8] sm:$0xf]
          %v3975 = vld [vmem:[#allocation11 + $0xfc] sm:$0xf]
          %v3976 = vld [vmem:[#allocation11 + $0x100] sm:$0xf]
          %v3977 = vld [vmem:[#allocation11 + $0x104] sm:$0xf]
          %v3978 = vld [vmem:[#allocation11 + $0x108] sm:$0xf]
          %v3979 = vld [vmem:[#allocation11 + $0x10c] sm:$0xf]
          %v3980 = vld [vmem:[#allocation11 + $0x110] sm:$0xf]
          %v3981 = vld [vmem:[#allocation11 + $0x114] sm:$0xf]
          %v3982 = vld [vmem:[#allocation11 + $0x118] sm:$0xf]
          %v3983 = vld [vmem:[#allocation11 + $0x11c] sm:$0xf]
          %v3984 = vld [vmem:[#allocation11 + $0x120] sm:$0xf]
          %v3985 = vld [vmem:[#allocation11 + $0x124] sm:$0xf]
          %v3986 = vld [vmem:[#allocation11 + $0x128] sm:$0xf]
          %v3987 = vld [vmem:[#allocation11 + $0x12c] sm:$0xf]
          %v3988 = vld [vmem:[#allocation11 + $0x130] sm:$0xf]
          %v3989 = vld [vmem:[#allocation11 + $0x134] sm:$0xf]
          %v3990 = vld [vmem:[#allocation11 + $0x138] sm:$0xf]
          %v3991 = vld [vmem:[#allocation11 + $0x13c] sm:$0xf]
          %v3992 = vld [vmem:[#allocation11 + $0x140] sm:$0xf]
          %v3993 = vld [vmem:[#allocation11 + $0x144] sm:$0xf]
          %v3994 = vld [vmem:[#allocation11 + $0x148] sm:$0xf]
          %v3995 = vld [vmem:[#allocation11 + $0x14c] sm:$0xf]
          %v3996 = vld [vmem:[#allocation11 + $0x150] sm:$0xf]
          %v3997 = vld [vmem:[#allocation11 + $0x154] sm:$0xf]
          %v3998 = vld [vmem:[#allocation11 + $0x158] sm:$0xf]
          %v3999 = vld [vmem:[#allocation11 + $0x15c] sm:$0xf]
          %v4000 = vld [vmem:[#allocation11 + $0x160] sm:$0xf]
          %v4001 = vld [vmem:[#allocation11 + $0x164] sm:$0xf]
          %v4002 = vld [vmem:[#allocation11 + $0x168] sm:$0xf]
          %v4003 = vld [vmem:[#allocation11 + $0x16c] sm:$0xf]
          %v4004 = vld [vmem:[#allocation11 + $0x170] sm:$0xf]
          %v4005 = vld [vmem:[#allocation11 + $0x174] sm:$0xf]
          %v4006 = vld [vmem:[#allocation11 + $0x178] sm:$0xf]
          %v4007 = vld [vmem:[#allocation11 + $0x17c] sm:$0xf]
          %v4008 = vld [vmem:[%s6] sm:$0x1]
          %v4010 = vlaneseq
          %v4011 = vshrl.u32 %v4010, 7
          %v4012 = vsub.s32 0, %v4011
          %v4013 = vrot.slane %v4008, %v4012
          %v4111 = vunpack.c.l.b16 %v3912
          %v4112 = vunpack.c.l.b16 %v3913
          %v4113 = vunpack.c.l.b16 %v3914
          %v4114 = vunpack.c.l.b16 %v3915
          %v4115 = vunpack.c.l.b16 %v3916
          %v4116 = vunpack.c.l.b16 %v3917
          %v4117 = vunpack.c.l.b16 %v3918
          %v4118 = vunpack.c.l.b16 %v3919
          %v4119 = vunpack.c.l.b16 %v3920
          %v4120 = vunpack.c.l.b16 %v3921
          %v4121 = vunpack.c.l.b16 %v3922
          %v4122 = vunpack.c.l.b16 %v3923
          %v4123 = vunpack.c.l.b16 %v3924
          %v4124 = vunpack.c.l.b16 %v3925
          %v4125 = vunpack.c.l.b16 %v3926
          %v4126 = vunpack.c.l.b16 %v3927
          %v4127 = vunpack.c.l.b16 %v3928
          %v4128 = vunpack.c.l.b16 %v3929
          %v4129 = vunpack.c.l.b16 %v3930
          %v4130 = vunpack.c.l.b16 %v3931
          %v4131 = vunpack.c.l.b16 %v3932
          %v4132 = vunpack.c.l.b16 %v3933
          %v4133 = vunpack.c.l.b16 %v3934
          %v4134 = vunpack.c.l.b16 %v3935
          %v4135 = vunpack.c.l.b16 %v3936
          %v4136 = vunpack.c.l.b16 %v3937
          %v4137 = vunpack.c.l.b16 %v3938
          %v4138 = vunpack.c.l.b16 %v3939
          %v4139 = vunpack.c.l.b16 %v3940
          %v4140 = vunpack.c.l.b16 %v3941
          %v4141 = vunpack.c.l.b16 %v3942
          %v4142 = vunpack.c.l.b16 %v3943
          %v4143 = vunpack.c.l.b16 %v3944
          %v4144 = vunpack.c.l.b16 %v3945
          %v4145 = vunpack.c.l.b16 %v3946
          %v4146 = vunpack.c.l.b16 %v3947
          %v4147 = vunpack.c.l.b16 %v3948
          %v4148 = vunpack.c.l.b16 %v3949
          %v4149 = vunpack.c.l.b16 %v3950
          %v4150 = vunpack.c.l.b16 %v3951
          %v4151 = vunpack.c.l.b16 %v3952
          %v4152 = vunpack.c.l.b16 %v3953
          %v4153 = vunpack.c.l.b16 %v3954
          %v4154 = vunpack.c.l.b16 %v3955
          %v4155 = vunpack.c.l.b16 %v3956
          %v4156 = vunpack.c.l.b16 %v3957
          %v4157 = vunpack.c.l.b16 %v3958
          %v4158 = vunpack.c.l.b16 %v3959
          %v4159 = vunpack.c.l.b16 %v3960
          %v4160 = vunpack.c.l.b16 %v3961
          %v4161 = vunpack.c.l.b16 %v3962
          %v4162 = vunpack.c.l.b16 %v3963
          %v4163 = vunpack.c.l.b16 %v3964
          %v4164 = vunpack.c.l.b16 %v3965
          %v4165 = vunpack.c.l.b16 %v3966
          %v4166 = vunpack.c.l.b16 %v3967
          %v4167 = vunpack.c.l.b16 %v3968
          %v4168 = vunpack.c.l.b16 %v3969
          %v4169 = vunpack.c.l.b16 %v3970
          %v4170 = vunpack.c.l.b16 %v3971
          %v4171 = vunpack.c.l.b16 %v3972
          %v4172 = vunpack.c.l.b16 %v3973
          %v4173 = vunpack.c.l.b16 %v3974
          %v4174 = vunpack.c.l.b16 %v3975
          %v4175 = vunpack.c.l.b16 %v3976
          %v4176 = vunpack.c.l.b16 %v3977
          %v4177 = vunpack.c.l.b16 %v3978
          %v4178 = vunpack.c.l.b16 %v3979
          %v4179 = vunpack.c.l.b16 %v3980
          %v4180 = vunpack.c.l.b16 %v3981
          %v4181 = vunpack.c.l.b16 %v3982
          %v4182 = vunpack.c.l.b16 %v3983
          %v4183 = vunpack.c.l.b16 %v3984
          %v4184 = vunpack.c.l.b16 %v3985
          %v4185 = vunpack.c.l.b16 %v3986
          %v4186 = vunpack.c.l.b16 %v3987
          %v4187 = vunpack.c.l.b16 %v3988
          %v4188 = vunpack.c.l.b16 %v3989
          %v4189 = vunpack.c.l.b16 %v3990
          %v4190 = vunpack.c.l.b16 %v3991
          %v4191 = vunpack.c.l.b16 %v3992
          %v4192 = vunpack.c.l.b16 %v3993
          %v4193 = vunpack.c.l.b16 %v3994
          %v4194 = vunpack.c.l.b16 %v3995
          %v4195 = vunpack.c.l.b16 %v3996
          %v4196 = vunpack.c.l.b16 %v3997
          %v4197 = vunpack.c.l.b16 %v3998
          %v4198 = vunpack.c.l.b16 %v3999
          %v4199 = vunpack.c.l.b16 %v4000
          %v4200 = vunpack.c.l.b16 %v4001
          %v4201 = vunpack.c.l.b16 %v4002
          %v4202 = vunpack.c.l.b16 %v4003
          %v4203 = vunpack.c.l.b16 %v4004
          %v4204 = vunpack.c.l.b16 %v4005
          %v4205 = vunpack.c.l.b16 %v4006
          %v4206 = vunpack.c.l.b16 %v4007
          %v4207 = vpack.c.b16 %v4112, %v4111
          %v4208 = vpack.c.b16 %v4114, %v4113
          %v4209 = vpack.c.b16 %v4116, %v4115
          %v4210 = vpack.c.b16 %v4118, %v4117
          %v4211 = vpack.c.b16 %v4120, %v4119
          %v4212 = vpack.c.b16 %v4122, %v4121
          %v4213 = vpack.c.b16 %v4124, %v4123
          %v4214 = vpack.c.b16 %v4126, %v4125
          %v4215 = vpack.c.b16 %v4128, %v4127
          %v4216 = vpack.c.b16 %v4130, %v4129
          %v4217 = vpack.c.b16 %v4132, %v4131
          %v4218 = vpack.c.b16 %v4134, %v4133
          %v4219 = vpack.c.b16 %v4136, %v4135
          %v4220 = vpack.c.b16 %v4138, %v4137
          %v4221 = vpack.c.b16 %v4140, %v4139
          %v4222 = vpack.c.b16 %v4142, %v4141
          %v4223 = vpack.c.b16 %v4144, %v4143
          %v4224 = vpack.c.b16 %v4146, %v4145
          %v4225 = vpack.c.b16 %v4148, %v4147
          %v4226 = vpack.c.b16 %v4150, %v4149
          %v4227 = vpack.c.b16 %v4152, %v4151
          %v4228 = vpack.c.b16 %v4154, %v4153
          %v4229 = vpack.c.b16 %v4156, %v4155
          %v4230 = vpack.c.b16 %v4158, %v4157
          %v4231 = vpack.c.b16 %v4160, %v4159
          %v4232 = vpack.c.b16 %v4162, %v4161
          %v4233 = vpack.c.b16 %v4164, %v4163
          %v4234 = vpack.c.b16 %v4166, %v4165
          %v4235 = vpack.c.b16 %v4168, %v4167
          %v4236 = vpack.c.b16 %v4170, %v4169
          %v4237 = vpack.c.b16 %v4172, %v4171
          %v4238 = vpack.c.b16 %v4174, %v4173
          %v4239 = vpack.c.b16 %v4176, %v4175
          %v4240 = vpack.c.b16 %v4178, %v4177
          %v4241 = vpack.c.b16 %v4180, %v4179
          %v4242 = vpack.c.b16 %v4182, %v4181
          %v4243 = vpack.c.b16 %v4184, %v4183
          %v4244 = vpack.c.b16 %v4186, %v4185
          %v4245 = vpack.c.b16 %v4188, %v4187
          %v4246 = vpack.c.b16 %v4190, %v4189
          %v4247 = vpack.c.b16 %v4192, %v4191
          %v4248 = vpack.c.b16 %v4194, %v4193
          %v4249 = vpack.c.b16 %v4196, %v4195
          %v4250 = vpack.c.b16 %v4198, %v4197
          %v4251 = vpack.c.b16 %v4200, %v4199
          %v4252 = vpack.c.b16 %v4202, %v4201
          %v4253 = vpack.c.b16 %v4204, %v4203
          %v4254 = vpack.c.b16 %v4206, %v4205
          %4303 = vmatprep.subr.bf16.mxu0 0
          %4304 = vmatpush1.bf16.msra.mxu0 %v4207
          %4305 = vmatprep.subr.bf16.mxu0 0
          %4306 = vmatpush1.bf16.msra.mxu0 %v4208
          %4307 = vmatprep.subr.bf16.mxu0 0
          %4308 = vmatpush1.bf16.msra.mxu0 %v4209
          %4309 = vmatprep.subr.bf16.mxu0 0
          %4310 = vmatpush1.bf16.msra.mxu0 %v4210
          %4311 = vmatprep.subr.bf16.mxu0 0
          %4312 = vmatpush1.bf16.msra.mxu0 %v4211
          %4313 = vmatprep.subr.bf16.mxu0 0
          %4314 = vmatpush1.bf16.msra.mxu0 %v4212
          %4315 = vmatprep.subr.bf16.mxu0 0
          %4316 = vmatpush1.bf16.msra.mxu0 %v4213
          %4317 = vmatprep.subr.bf16.mxu0 0
          %4318 = vmatpush1.bf16.msra.mxu0 %v4214
          %4319 = vmatprep.subr.bf16.mxu0 0
          %4320 = vmatpush1.bf16.msra.mxu0 %v4215
          %4321 = vmatprep.subr.bf16.mxu0 0
          %4322 = vmatpush1.bf16.msra.mxu0 %v4216
          %4323 = vmatprep.subr.bf16.mxu0 0
          %4324 = vmatpush1.bf16.msra.mxu0 %v4217
          %4325 = vmatprep.subr.bf16.mxu0 0
          %4326 = vmatpush1.bf16.msra.mxu0 %v4218
          %4327 = vmatprep.subr.bf16.mxu0 0
          %4328 = vmatpush1.bf16.msra.mxu0 %v4219
          %4329 = vmatprep.subr.bf16.mxu0 0
          %4330 = vmatpush1.bf16.msra.mxu0 %v4220
          %4331 = vmatprep.subr.bf16.mxu0 0
          %4332 = vmatpush1.bf16.msra.mxu0 %v4221
          %4333 = vmatprep.subr.bf16.mxu0 0
          %4334 = vmatpush1.bf16.msra.mxu0 %v4222
          %4335 = vmatprep.mubr.bf16.mxu0 %v3907
          %4336 = vmatmul.mubr.bf16.gmra.mrb[0].mxu0 %v3906
          %v4337 = vpop.f32.mrb[0].mxu0
          %v4338 = vadd.f32 %v4013, %v4337
          %v4339 = vpop.f32.mrb[0].mxu0
          %v4340 = vpop.f32.mrb[0].mxu0
          %v4341 = vpop.f32.mrb[0].mxu0
          %4342 = vdwg.mxu0
          %4343 = vmatprep.subr.bf16.mxu0 0
          %4344 = vmatpush1.bf16.msra.mxu0 %v4223
          %4345 = vmatprep.subr.bf16.mxu0 0
          %4346 = vmatpush1.bf16.msra.mxu0 %v4224
          %4347 = vmatprep.subr.bf16.mxu0 0
          %4348 = vmatpush1.bf16.msra.mxu0 %v4225
          %4349 = vmatprep.subr.bf16.mxu0 0
          %4350 = vmatpush1.bf16.msra.mxu0 %v4226
          %4351 = vmatprep.subr.bf16.mxu0 0
          %4352 = vmatpush1.bf16.msra.mxu0 %v4227
          %4353 = vmatprep.subr.bf16.mxu0 0
          %4354 = vmatpush1.bf16.msra.mxu0 %v4228
          %4355 = vmatprep.subr.bf16.mxu0 0
          %4356 = vmatpush1.bf16.msra.mxu0 %v4229
          %4357 = vmatprep.subr.bf16.mxu0 0
          %4358 = vmatpush1.bf16.msra.mxu0 %v4230
          %4359 = vmatprep.subr.bf16.mxu0 0
          %4360 = vmatpush1.bf16.msra.mxu0 %v4231
          %4361 = vmatprep.subr.bf16.mxu0 0
          %4362 = vmatpush1.bf16.msra.mxu0 %v4232
          %4363 = vmatprep.subr.bf16.mxu0 0
          %4364 = vmatpush1.bf16.msra.mxu0 %v4233
          %4365 = vmatprep.subr.bf16.mxu0 0
          %4366 = vmatpush1.bf16.msra.mxu0 %v4234
          %4367 = vmatprep.subr.bf16.mxu0 0
          %4368 = vmatpush1.bf16.msra.mxu0 %v4235
          %4369 = vmatprep.subr.bf16.mxu0 0
          %4370 = vmatpush1.bf16.msra.mxu0 %v4236
          %4371 = vmatprep.subr.bf16.mxu0 0
          %4372 = vmatpush1.bf16.msra.mxu0 %v4237
          %4373 = vmatprep.subr.bf16.mxu0 0
          %4374 = vmatpush1.bf16.msra.mxu0 %v4238
          %4375 = vmatprep.mubr.bf16.mxu0 %v3909
          %4376 = vmatmul.mubr.bf16.gmra.mrb[0].mxu0 %v3908
          %v4377 = vpop.f32.mrb[0].mxu0
          %v4378 = vadd.f32 %v4338, %v4377
          %v4379 = vpop.f32.mrb[0].mxu0
          %v4380 = vpop.f32.mrb[0].mxu0
          %v4381 = vpop.f32.mrb[0].mxu0
          %4382 = vdwg.mxu0
          %4383 = vmatprep.subr.bf16.mxu0 0
          %4384 = vmatpush1.bf16.msra.mxu0 %v4239
          %4385 = vmatprep.subr.bf16.mxu0 0
          %4386 = vmatpush1.bf16.msra.mxu0 %v4240
          %4387 = vmatprep.subr.bf16.mxu0 0
          %4388 = vmatpush1.bf16.msra.mxu0 %v4241
          %4389 = vmatprep.subr.bf16.mxu0 0
          %4390 = vmatpush1.bf16.msra.mxu0 %v4242
          %4391 = vmatprep.subr.bf16.mxu0 0
          %4392 = vmatpush1.bf16.msra.mxu0 %v4243
          %4393 = vmatprep.subr.bf16.mxu0 0
          %4394 = vmatpush1.bf16.msra.mxu0 %v4244
          %4395 = vmatprep.subr.bf16.mxu0 0
          %4396 = vmatpush1.bf16.msra.mxu0 %v4245
          %4397 = vmatprep.subr.bf16.mxu0 0
          %4398 = vmatpush1.bf16.msra.mxu0 %v4246
          %4399 = vmatprep.subr.bf16.mxu0 0
          %4400 = vmatpush1.bf16.msra.mxu0 %v4247
          %4401 = vmatprep.subr.bf16.mxu0 0
          %4402 = vmatpush1.bf16.msra.mxu0 %v4248
          %4403 = vmatprep.subr.bf16.mxu0 0
          %4404 = vmatpush1.bf16.msra.mxu0 %v4249
          %4405 = vmatprep.subr.bf16.mxu0 0
          %4406 = vmatpush1.bf16.msra.mxu0 %v4250
          %4407 = vmatprep.subr.bf16.mxu0 0
          %4408 = vmatpush1.bf16.msra.mxu0 %v4251
          %4409 = vmatprep.subr.bf16.mxu0 0
          %4410 = vmatpush1.bf16.msra.mxu0 %v4252
          %4411 = vmatprep.subr.bf16.mxu0 0
          %4412 = vmatpush1.bf16.msra.mxu0 %v4253
          %4413 = vmatprep.subr.bf16.mxu0 0
          %4414 = vmatpush1.bf16.msra.mxu0 %v4254
          %4415 = vmatprep.mubr.bf16.mxu0 %v3911
          %4416 = vmatmul.mubr.bf16.gmra.mrb[0].mxu0 %v3910
          %v4417 = vpop.f32.mrb[0].mxu0
          %v4418 = vadd.f32 %v4378, %v4417
          %v4419 = vpop.f32.mrb[0].mxu0
          %v4420 = vpop.f32.mrb[0].mxu0
          %v4421 = vpop.f32.mrb[0].mxu0
          %4422 = vdwg.mxu0
          %4423 = vst [vmem:[%s343] sm:$0xff] %v4418
        $region68: #{tpu_custom_call.1} parent=47 // pred_fallthru
          _
        %s4424 = sand.u32 %s200, 1
        %s4425 = scalar_lea.sflag [#allocation8], %s4424
        %s4426 = sand.u32 %s200, 1
        %s4427 = smul.addr %s4426, 8
        %s4428 = scalar_lea.vmem [#allocation12], %s4427
        // Predicated region
        $region69: #{tpu_custom_call.1} parent=47 // pred_check
          %p4429 = pneg %p210
        $region70: #{tpu_custom_call.1} parent=47 // pred_check_branch
          %4431 = sbr.rel (%p4429) target = $region72
        $region71: #{tpu_custom_call.1} parent=47 // pred_region
          %s4433 = ssub.s32 128, 128
          %4434 = vsyncadd %s4425, %s4433
          %s4435 = smul.addr %s30, 128
          %s4436 = scalar_lea.hbm %s7, %s4435
          %s4438 = sshll.u32 %s4428, 4
          %s4439 = int_to_ptr.vmem [resolvable:$true] %s4438
          %4441 = dma.vmem_to_hbm [thread:$0]  %s4439, 128, %s4436, %s4425
        $region72: #{tpu_custom_call.1} parent=47 // pred_fallthru
          _
      $region48: #{tpu_custom_call.1} parent=5 // pred_fallthru
        _
      %p4442 = scmp.le.s32.totalorder 2, %s21
      // Predicated region
      $region73: #{tpu_custom_call.1} parent=5 // pred_check
        %p4443 = pneg %p4442
      $region74: #{tpu_custom_call.1} parent=5 // pred_check_branch
        %4445 = sbr.rel (%p4443) target = $region76
      $region75: #{tpu_custom_call.1} parent=5 // pred_region
        %s4446 = ssub.s32 %s21, 2
        // Predicated region
        $region77: #{tpu_custom_call.1} parent=75 // pred_check
          %p4447 = pneg %p216
        $region78: #{tpu_custom_call.1} parent=75 // pred_check_branch
          %4449 = sbr.rel (%p4447) target = $region80
        $region79: #{tpu_custom_call.1} parent=75 // pred_region
          %s4450 = sand.u32 %s201, 1
          %s4451 = scalar_lea.sflag [#allocation8], %s4450
          %s4452 = sand.u32 %s201, 1
          %s4453 = smul.addr %s4452, 8
          %s4454 = scalar_lea.vmem [#allocation12], %s4453
          %4455 = dma.done %s4451, 128
        $region80: #{tpu_custom_call.1} parent=75 // pred_fallthru
          _
      $region76: #{tpu_custom_call.1} parent=5 // pred_fallthru
        _
    $region6: #{tpu_custom_call.1} parent=1 // loop_footer
      %s25 = sadd.s32 1, %s21
    $region7: #{tpu_custom_call.1} parent=1 // loop_footer_branch
      %20 = sbr.rel target = $region3
    $region8: #{tpu_custom_call.1} parent=1 // loop_exit
      _
    %4456 = vsyncpa [#allocation7], 1
    %s4457 = scalar_lea.sflag [#allocation7], 1
    %4458 = vsyncpa %s4457, 1
    %4459 = vsyncpa [#allocation10], 1
    %4460 = vsyncpa [#allocation8], 1
    %s4461 = scalar_lea.sflag [#allocation8], 1
    %4462 = vsyncpa %s4461, 1

</llo_original>
